<compile_context>
chip_gen: v5e
topology: v5e:2x2
jax: 0.10.0
libtpu: 0.0.40
codegen_flags: <defaults>
</compile_context>

<pallas_src>
import functools

import jax
import jax.numpy as jnp
from jax.experimental import pallas as pl
from jax.experimental.pallas import tpu as pltpu

NEG_SLOPE = 0.2      # LeakyReLU(0.2)
BN_EPS = 1e-5        # nn.BatchNorm2d default eps
KSIZE = 4
PAD = 1
LANE = 128
VMEM_LIMIT_BYTES = 32 * 1024 * 1024   # explicit, conservative budget (safe on v5e/v6e/v7x)


def _round_up(x, m):
    return (x + m - 1) // m * m


# ------------------------------ Pallas kernels ------------------------------

def _conv_body(x_ref, w_ref, b_ref, o_ref, sum_ref, ssq_ref, *, taps, act_fn):
    """One batch element of a k=4 conv, decomposed into per-tap matmuls.

    x_ref : (Hs, Ws, K)     bf16  rearranged (padded / space-to-depth) input
    w_ref : (T,  K,  Cpad)  bf16  per-tap weight matrices
    b_ref : (1,  Cpad)      f32   bias (zero in padded channels)
    o_ref : (Ho, Wo, Cpad)  f32   conv output (activation fused when act_fn set)
    sum_ref / ssq_ref : (1, Cpad) f32  optional per-channel sum / sum-of-squares
    """
    ho_n, wo, cpad = o_ref.shape
    bias = b_ref[...]                                   # (1, Cpad) f32
    row_offsets = tuple(sorted({oh for oh, _ in taps}))
    with_stats = sum_ref is not None

    def row_body(ho, carry):
        s_acc, ss_acc = carry
        acc = jnp.zeros((wo, cpad), jnp.float32)
        for oh in row_offsets:
            row = x_ref[ho + oh]                        # (Ws, K) bf16, dynamic row load
            for t, (toh, tow) in enumerate(taps):       # static unrolled tap loop
                if toh != oh:
                    continue
                tap = row[tow:tow + wo, :]              # (Wo, K) static shifted slice
                acc = acc + jnp.dot(tap, w_ref[t],
                                    preferred_element_type=jnp.float32)
        y = acc + bias
        if act_fn == "leaky":
            out = jnp.where(y >= 0, y, NEG_SLOPE * y)
        elif act_fn == "sigmoid":
            out = 1.0 / (1.0 + jnp.exp(-y))
        else:
            out = y
        o_ref[ho] = out.astype(o_ref.dtype)             # lane-dense (Cpad=128k) store
        if with_stats:
            s_acc = s_acc + jnp.sum(y, axis=0, keepdims=True)
            ss_acc = ss_acc + jnp.sum(y * y, axis=0, keepdims=True)
        return s_acc, ss_acc

    zeros = jnp.zeros((1, cpad), jnp.float32)
    s_tot, ss_tot = jax.lax.fori_loop(0, ho_n, row_body, (zeros, zeros))
    if with_stats:
        sum_ref[...] = s_tot
        ssq_ref[...] = ss_tot


def _conv_kernel_plain(x_ref, w_ref, b_ref, o_ref, *, taps, act_fn):
    _conv_body(x_ref, w_ref, b_ref, o_ref, None, None, taps=taps, act_fn=act_fn)


def _conv_kernel_stats(x_ref, w_ref, b_ref, o_ref, sum_ref, ssq_ref, *, taps, act_fn):
    _conv_body(x_ref, w_ref, b_ref, o_ref, sum_ref, ssq_ref, taps=taps, act_fn=act_fn)


def _conv_pallas(x_re, w_taps, b_pad, taps, ho, wo, act_fn, with_stats):
    n, hs, ws, k = x_re.shape
    t, k2, cpad = w_taps.shape
    assert k2 == k

    y_shape = jax.ShapeDtypeStruct((n, ho, wo, cpad), jnp.float32)
    y_spec = pl.BlockSpec((None, ho, wo, cpad), lambda i: (i, 0, 0, 0))
    in_specs = [
        pl.BlockSpec((None, hs, ws, k), lambda i: (i, 0, 0, 0)),   # full image / batch elem
        pl.BlockSpec((t, k, cpad), lambda i: (0, 0, 0)),           # full tap-weights
        pl.BlockSpec((1, cpad), lambda i: (0, 0)),                 # bias
    ]
    cparams = pltpu.CompilerParams(
        dimension_semantics=("parallel",),        # batch axis -> both TCs on v7x
        vmem_limit_bytes=VMEM_LIMIT_BYTES,
    )
    if with_stats:
        stat_shape = jax.ShapeDtypeStruct((n, 1, cpad), jnp.float32)
        stat_spec = pl.BlockSpec((None, 1, cpad), lambda i: (i, 0, 0))
        return pl.pallas_call(
            functools.partial(_conv_kernel_stats, taps=taps, act_fn=act_fn),
            grid=(n,),
            in_specs=in_specs,
            out_specs=(y_spec, stat_spec, stat_spec),
            out_shape=(y_shape, stat_shape, stat_shape),
            compiler_params=cparams,
        )(x_re, w_taps, b_pad)
    return pl.pallas_call(
        functools.partial(_conv_kernel_plain, taps=taps, act_fn=act_fn),
        grid=(n,),
        in_specs=in_specs,
        out_specs=y_spec,
        out_shape=y_shape,
        compiler_params=cparams,
    )(x_re, w_taps, b_pad)


# ----------------------- JAX glue (single fused pass) -----------------------

def _prep_input(x_nhwc, stride):
    """Zero-pad (p=1); for stride 2 also space-to-depth so each tap is a plain
    shifted slice (all fused by XLA into one copy of the activation, in bf16)."""
    n, h, w, c = x_nhwc.shape
    xp = jnp.pad(x_nhwc.astype(jnp.bfloat16), ((0, 0), (PAD, PAD), (PAD, PAD), (0, 0)))
    if stride == 2:
        assert h % 2 == 0 and w % 2 == 0
        hs, ws = (h + 2) // 2, (w + 2) // 2
        xr = xp.reshape(n, hs, 2, ws, 2, c)
        xr = xr.transpose(0, 1, 3, 2, 4, 5).reshape(n, hs, ws, 4 * c)
        ho, wo = h // 2, w // 2
        taps = tuple((a, b) for a in range(2) for b in range(2))
    else:
        xr = xp
        ho, wo = h + 2 - KSIZE + 1, w + 2 - KSIZE + 1
        taps = tuple((a, b) for a in range(KSIZE) for b in range(KSIZE))
    return xr, taps, ho, wo


def _weight_taps(w, stride, cpad):
    """Rearrange (4,4,Cin,Cout) weights into per-tap (K, Cpad) matrices matching
    the input rearrangement, pad Cout to a lane-dense width, cast to bf16."""
    kh, kw, cin, cout = w.shape
    if stride == 2:
        wr = w.reshape(2, 2, 2, 2, cin, cout)        # (a, p, b, q, cin, cout)
        wr = wr.transpose(0, 2, 1, 3, 4, 5)          # (a, b, p, q, cin, cout)
        wr = wr.reshape(4, 4 * cin, cout)            # tap = 2a+b ; row = (2p+q)*cin + c
    else:
        wr = w.reshape(kh * kw, cin, cout)           # tap = 4*di + dj
    if cpad > cout:
        wr = jnp.pad(wr, ((0, 0), (0, 0), (0, cpad - cout)))
    return wr.astype(jnp.bfloat16)


def _leaky(v):
    return jnp.where(v >= 0, v, NEG_SLOPE * v)


def _conv_layer(x_act, p, stride, act_fn, with_stats):
    x_re, taps, ho, wo = _prep_input(x_act, stride)
    return _conv_pallas(x_re, p["w_taps"], p["b_pad"], taps, ho, wo, act_fn, with_stats)


# ------------------------------ model wrapper ------------------------------

def _layer_specs(dim):
    # (cin, cout, has_bn, stride), mirroring PatchGAN.__init__
    return (
        (6, dim, False, 2),
        (dim, dim * 2, True, 2),
        (dim * 2, dim * 4, True, 2),
        (dim * 4, dim * 8, True, 1),
        (dim * 8, 1, False, 1),
    )


def init_params(key, dim):
    params = []
    for cin, cout, has_bn, stride in _layer_specs(dim):
        key, kw, kb = jax.random.split(key, 3)
        fan_in = cin * KSIZE * KSIZE
        w = jax.random.normal(kw, (KSIZE, KSIZE, cin, cout), jnp.float32) / jnp.sqrt(fan_in)
        b = 0.1 * jax.random.normal(kb, (cout,), jnp.float32)
        cpad = _round_up(max(cout, LANE), LANE)
        p = {
            "w": w,                                    # raw HWIO weights (for reference)
            "b": b,
            "w_taps": _weight_taps(w, stride, cpad),   # kernel form (bf16, lane-padded)
            "b_pad": jnp.pad(b, (0, cpad - cout)).reshape(1, cpad),
        }
        if has_bn:
            p["gamma"] = jnp.ones((cout,), jnp.float32)   # fresh nn.BatchNorm2d
            p["beta"] = jnp.zeros((cout,), jnp.float32)
        params.append(p)
    return params


def patchgan_forward(x_nchw, params):
    x = jnp.transpose(x_nchw, (0, 2, 3, 1)).astype(jnp.float32)   # NCHW -> NHWC
    strides = (2, 2, 2, 1, 1)

    # layer 1: Conv(6, dim, 4, s=2, p=1) + LeakyReLU(0.2)   (bias + act fused in kernel)
    p = params[0]
    cout = p["b"].shape[0]
    y = _conv_layer(x, p, strides[0], "leaky", False)
    act = y[..., :cout]

    # layers 2-4: Conv + BatchNorm (train-mode batch stats) + LeakyReLU(0.2)
    for li in (1, 2, 3):
        p = params[li]
        cout = p["b"].shape[0]
        y, s, ss = _conv_layer(act, p, strides[li], None, True)
        n, ho, wo, _ = y.shape
        cnt = n * ho * wo
        mean = jnp.sum(s, axis=(0, 1))[:cout] / cnt
        ex2 = jnp.sum(ss, axis=(0, 1))[:cout] / cnt
        var = ex2 - mean * mean                       # biased batch variance
        scale = p["gamma"] * jax.lax.rsqrt(var + BN_EPS)
        shift = p["beta"] - mean * scale
        # normalize + affine + LeakyReLU, folded by XLA into the next layer's
        # pad / space-to-depth read (no standalone elementwise pass).
        act = _leaky(y[..., :cout] * scale + shift)

    # layer 5: Conv(8*dim, 1, 4, s=1, p=1) + Sigmoid   (bias + act fused in kernel)
    p = params[4]
    y = _conv_layer(act, p, strides[4], "sigmoid", False)
    out = y[..., :1]
    return jnp.transpose(out, (0, 3, 1, 2))                       # NHWC -> NCHW


# ---------------------------- pure-JAX reference ----------------------------

def _ref_forward(x_nchw, params):
    def conv(x, w, b, stride):
        y = jax.lax.conv_general_dilated(
            x.astype(jnp.bfloat16), w.astype(jnp.bfloat16),
            (stride, stride), ((PAD, PAD), (PAD, PAD)),
            dimension_numbers=("NHWC", "HWIO", "NHWC"),
            preferred_element_type=jnp.float32)
        return y + b[None, None, None, :]

    strides = (2, 2, 2, 1, 1)
    x = jnp.transpose(x_nchw, (0, 2, 3, 1)).astype(jnp.float32)
    h = _leaky(conv(x, params[0]["w"], params[0]["b"], strides[0]))
    for li in (1, 2, 3):
        p = params[li]
        y = conv(h, p["w"], p["b"], strides[li])
        mean = jnp.mean(y, axis=(0, 1, 2))
        var = jnp.mean((y - mean) ** 2, axis=(0, 1, 2))
        yn = (y - mean) * jax.lax.rsqrt(var + BN_EPS) * p["gamma"] + p["beta"]
        h = _leaky(yn)
    y = conv(h, params[4]["w"], params[4]["b"], strides[4])
    return jnp.transpose(jax.nn.sigmoid(y), (0, 3, 1, 2))


if __name__ == "__main__":
    dim = 8                        # small dim for the synthetic test (module default is 64)
    key = jax.random.PRNGKey(0)
    kx, kp = jax.random.split(key)
    x = jax.random.normal(kx, (2, 6, 32, 32), jnp.float32)   # NCHW, 6-channel input
    params = init_params(kp, dim)

    out = jax.jit(patchgan_forward)(x, params)
    out = jax.block_until_ready(out)

    ref = _ref_forward(x, params)
    assert out.shape == ref.shape == (2, 1, 2, 2), (out.shape, ref.shape)
    max_err = float(jnp.max(jnp.abs(out - ref)))
    assert max_err < 5e-2, f"max abs err {max_err}"
    print("KERNEL_OK")
</pallas_src>

<mosaic_0001>
module attributes {stable_mosaic.version = 11 : i64} {
  func.func @_conv_kernel_plain(%arg0: i32, %arg1: memref<1x17x17x24xbf16, #tpu.memory_space<vmem>>, %arg2: memref<4x24x128xbf16, #tpu.memory_space<vmem>>, %arg3: memref<1x128xf32, #tpu.memory_space<vmem>>, %arg4: memref<1x16x16x128xf32, #tpu.memory_space<vmem>>) attributes {dimension_semantics = [#tpu.dimension_semantics<parallel>], iteration_bounds = array<i64: 2>, scalar_prefetch = 0 : i64, scratch_operands = 0 : i64, tpu.core_type = #tpu.core_type<tc>, window_params = [{transform_indices = @transform_0, window_bounds = array<i64: 1, 17, 17, 24>}, {pipeline_mode = #tpu.pipeline_mode<synchronous>, transform_indices = @transform_1, window_bounds = array<i64: 4, 24, 128>}, {pipeline_mode = #tpu.pipeline_mode<synchronous>, transform_indices = @transform_2, window_bounds = array<i64: 1, 128>}, {transform_indices = @transform_3, window_bounds = array<i64: 1, 16, 16, 128>}]} {
    %c0 = arith.constant 0 : index
    %c0_0 = arith.constant 0 : index
    %0 = vector.load %arg3[%c0, %c0_0] : memref<1x128xf32, #tpu.memory_space<vmem>>, vector<1x128xf32>
    %c0_i32 = arith.constant 0 : i32
    %c16_i32 = arith.constant 16 : i32
    %1 = arith.addi %c0_i32, %c16_i32 : i32
    %c1_i32 = arith.constant 1 : i32
    scf.for %arg5 = %c0_i32 to %1 step %c1_i32  : i32 {
      %cst = arith.constant 0.000000e+00 : f32
      %2 = vector.broadcast %cst : f32 to vector<16x128xf32>
      %c0_i32_2 = arith.constant 0 : i32
      %3 = arith.addi %arg5, %c0_i32_2 : i32
      %c0_3 = arith.constant 0 : index
      %4 = arith.index_cast %3 : i32 to index
      %c0_4 = arith.constant 0 : index
      %c0_5 = arith.constant 0 : index
      %5 = vector.load %arg1[%c0_3, %4, %c0_4, %c0_5] : memref<1x17x17x24xbf16, #tpu.memory_space<vmem>>, vector<1x1x17x24xbf16>
      %6 = vector.shape_cast %5 : vector<1x1x17x24xbf16> to vector<17x24xbf16>
      %7 = vector.extract_strided_slice %6 {offsets = [0, 0], sizes = [16, 24], strides = [1, 1]} : vector<17x24xbf16> to vector<16x24xbf16>
      %c0_6 = arith.constant 0 : index
      %c0_7 = arith.constant 0 : index
      %c0_8 = arith.constant 0 : index
      %8 = vector.load %arg2[%c0_6, %c0_7, %c0_8] : memref<4x24x128xbf16, #tpu.memory_space<vmem>>, vector<1x24x128xbf16>
      %9 = vector.shape_cast %8 : vector<1x24x128xbf16> to vector<24x128xbf16>
      %cst_9 = arith.constant dense<0.000000e+00> : vector<16x128xf32>
      %10 = tpu.matmul %7, %9, %cst_9 {dimension_numbers = #tpu.dot_dimension_numbers<[1], [0], [0], [1], [0, 0, 1, 1], [], []>} : vector<16x24xbf16>, vector<24x128xbf16>, vector<16x128xf32> -> vector<16x128xf32>
      %11 = arith.addf %2, %10 : vector<16x128xf32>
      %12 = vector.extract_strided_slice %6 {offsets = [1, 0], sizes = [16, 24], strides = [1, 1]} : vector<17x24xbf16> to vector<16x24xbf16>
      %c1 = arith.constant 1 : index
      %c0_10 = arith.constant 0 : index
      %c0_11 = arith.constant 0 : index
      %13 = vector.load %arg2[%c1, %c0_10, %c0_11] : memref<4x24x128xbf16, #tpu.memory_space<vmem>>, vector<1x24x128xbf16>
      %14 = vector.shape_cast %13 : vector<1x24x128xbf16> to vector<24x128xbf16>
      %cst_12 = arith.constant dense<0.000000e+00> : vector<16x128xf32>
      %15 = tpu.matmul %12, %14, %cst_12 {dimension_numbers = #tpu.dot_dimension_numbers<[1], [0], [0], [1], [0, 0, 1, 1], [], []>} : vector<16x24xbf16>, vector<24x128xbf16>, vector<16x128xf32> -> vector<16x128xf32>
      %16 = arith.addf %11, %15 : vector<16x128xf32>
      %c1_i32_13 = arith.constant 1 : i32
      %17 = arith.addi %arg5, %c1_i32_13 : i32
      %c0_14 = arith.constant 0 : index
      %18 = arith.index_cast %17 : i32 to index
      %c0_15 = arith.constant 0 : index
      %c0_16 = arith.constant 0 : index
      %19 = vector.load %arg1[%c0_14, %18, %c0_15, %c0_16] : memref<1x17x17x24xbf16, #tpu.memory_space<vmem>>, vector<1x1x17x24xbf16>
      %20 = vector.shape_cast %19 : vector<1x1x17x24xbf16> to vector<17x24xbf16>
      %21 = vector.extract_strided_slice %20 {offsets = [0, 0], sizes = [16, 24], strides = [1, 1]} : vector<17x24xbf16> to vector<16x24xbf16>
      %c2 = arith.constant 2 : index
      %c0_17 = arith.constant 0 : index
      %c0_18 = arith.constant 0 : index
      %22 = vector.load %arg2[%c2, %c0_17, %c0_18] : memref<4x24x128xbf16, #tpu.memory_space<vmem>>, vector<1x24x128xbf16>
      %23 = vector.shape_cast %22 : vector<1x24x128xbf16> to vector<24x128xbf16>
      %cst_19 = arith.constant dense<0.000000e+00> : vector<16x128xf32>
      %24 = tpu.matmul %21, %23, %cst_19 {dimension_numbers = #tpu.dot_dimension_numbers<[1], [0], [0], [1], [0, 0, 1, 1], [], []>} : vector<16x24xbf16>, vector<24x128xbf16>, vector<16x128xf32> -> vector<16x128xf32>
      %25 = arith.addf %16, %24 : vector<16x128xf32>
      %26 = vector.extract_strided_slice %20 {offsets = [1, 0], sizes = [16, 24], strides = [1, 1]} : vector<17x24xbf16> to vector<16x24xbf16>
      %c3 = arith.constant 3 : index
      %c0_20 = arith.constant 0 : index
      %c0_21 = arith.constant 0 : index
      %27 = vector.load %arg2[%c3, %c0_20, %c0_21] : memref<4x24x128xbf16, #tpu.memory_space<vmem>>, vector<1x24x128xbf16>
      %28 = vector.shape_cast %27 : vector<1x24x128xbf16> to vector<24x128xbf16>
      %cst_22 = arith.constant dense<0.000000e+00> : vector<16x128xf32>
      %29 = tpu.matmul %26, %28, %cst_22 {dimension_numbers = #tpu.dot_dimension_numbers<[1], [0], [0], [1], [0, 0, 1, 1], [], []>} : vector<16x24xbf16>, vector<24x128xbf16>, vector<16x128xf32> -> vector<16x128xf32>
      %30 = arith.addf %25, %29 : vector<16x128xf32>
      %31 = vector.broadcast %0 : vector<1x128xf32> to vector<16x128xf32>
      %32 = arith.addf %30, %31 : vector<16x128xf32>
      %cst_23 = arith.constant 0.000000e+00 : f32
      %33 = vector.broadcast %cst_23 : f32 to vector<16x128xf32>
      %34 = arith.cmpf oge, %32, %33 : vector<16x128xf32>
      %cst_24 = arith.constant 2.000000e-01 : f32
      %35 = vector.broadcast %cst_24 : f32 to vector<16x128xf32>
      %36 = arith.mulf %35, %32 : vector<16x128xf32>
      %37 = arith.select %34, %32, %36 : vector<16x128xi1>, vector<16x128xf32>
      %c0_25 = arith.constant 0 : index
      %38 = arith.index_cast %arg5 : i32 to index
      %c0_26 = arith.constant 0 : index
      %c0_27 = arith.constant 0 : index
      %39 = vector.load %arg4[%c0_25, %38, %c0_26, %c0_27] : memref<1x16x16x128xf32, #tpu.memory_space<vmem>>, vector<1x1x16x128xf32>
      %40 = vector.shape_cast %39 : vector<1x1x16x128xf32> to vector<16x128xf32>
      %41 = vector.shape_cast %37 : vector<16x128xf32> to vector<1x1x16x128xf32>
      tpu.vector_store %arg4[%c0_25, %38, %c0_26, %c0_27], %41 {strides = array<i32>} : memref<1x16x16x128xf32, #tpu.memory_space<vmem>>, vector<1x1x16x128xf32>,
    }
    %c16_i32_1 = arith.constant 16 : i32
    return
  }
  func.func @transform_0(%arg0: i32) -> (i32, i32, i32, i32) {
    %c0_i32 = arith.constant 0 : i32
    %c0_i32_0 = arith.constant 0 : i32
    %c0_i32_1 = arith.constant 0 : i32
    %c0_i32_2 = arith.constant 0 : i32
    return %arg0, %c0_i32, %c0_i32_0, %c0_i32_1 : i32, i32, i32, i32
  }
  func.func @transform_1(%arg0: i32) -> (i32, i32, i32) {
    %c0_i32 = arith.constant 0 : i32
    %c0_i32_0 = arith.constant 0 : i32
    %c0_i32_1 = arith.constant 0 : i32
    %c0_i32_2 = arith.constant 0 : i32
    return %c0_i32, %c0_i32_0, %c0_i32_1 : i32, i32, i32
  }
  func.func @transform_2(%arg0: i32) -> (i32, i32) {
    %c0_i32 = arith.constant 0 : i32
    %c0_i32_0 = arith.constant 0 : i32
    %c0_i32_1 = arith.constant 0 : i32
    return %c0_i32, %c0_i32_0 : i32, i32
  }
  func.func @transform_3(%arg0: i32) -> (i32, i32, i32, i32) {
    %c0_i32 = arith.constant 0 : i32
    %c0_i32_0 = arith.constant 0 : i32
    %c0_i32_1 = arith.constant 0 : i32
    %c0_i32_2 = arith.constant 0 : i32
    return %arg0, %c0_i32, %c0_i32_0, %c0_i32_1 : i32, i32, i32, i32
  }
}

module attributes {stable_mosaic.version = 11 : i64} {
  func.func @_conv_kernel_stats(%arg0: i32, %arg1: memref<1x9x9x32xbf16, #tpu.memory_space<vmem>>, %arg2: memref<4x32x128xbf16, #tpu.memory_space<vmem>>, %arg3: memref<1x128xf32, #tpu.memory_space<vmem>>, %arg4: memref<1x8x8x128xf32, #tpu.memory_space<vmem>>, %arg5: memref<1x1x128xf32, #tpu.memory_space<vmem>>, %arg6: memref<1x1x128xf32, #tpu.memory_space<vmem>>) attributes {dimension_semantics = [#tpu.dimension_semantics<parallel>], iteration_bounds = array<i64: 2>, scalar_prefetch = 0 : i64, scratch_operands = 0 : i64, tpu.core_type = #tpu.core_type<tc>, window_params = [{transform_indices = @transform_0, window_bounds = array<i64: 1, 9, 9, 32>}, {pipeline_mode = #tpu.pipeline_mode<synchronous>, transform_indices = @transform_1, window_bounds = array<i64: 4, 32, 128>}, {pipeline_mode = #tpu.pipeline_mode<synchronous>, transform_indices = @transform_2, window_bounds = array<i64: 1, 128>}, {transform_indices = @transform_3, window_bounds = array<i64: 1, 8, 8, 128>}, {transform_indices = @transform_4, window_bounds = array<i64: 1, 1, 128>}, {transform_indices = @transform_5, window_bounds = array<i64: 1, 1, 128>}]} {
    %c0 = arith.constant 0 : index
    %c0_0 = arith.constant 0 : index
    %0 = vector.load %arg3[%c0, %c0_0] : memref<1x128xf32, #tpu.memory_space<vmem>>, vector<1x128xf32>
    %cst = arith.constant 0.000000e+00 : f32
    %1 = vector.broadcast %cst : f32 to vector<1x128xf32>
    %c0_i32 = arith.constant 0 : i32
    %c8_i32 = arith.constant 8 : i32
    %2 = arith.addi %c0_i32, %c8_i32 : i32
    %c1_i32 = arith.constant 1 : i32
    %3:2 = scf.for %arg7 = %c0_i32 to %2 step %c1_i32 iter_args(%arg8 = %1, %arg9 = %1) -> (vector<1x128xf32>, vector<1x128xf32>)  : i32 {
      %cst_8 = arith.constant 0.000000e+00 : f32
      %10 = vector.broadcast %cst_8 : f32 to vector<8x128xf32>
      %c0_i32_9 = arith.constant 0 : i32
      %11 = arith.addi %arg7, %c0_i32_9 : i32
      %c0_10 = arith.constant 0 : index
      %12 = arith.index_cast %11 : i32 to index
      %c0_11 = arith.constant 0 : index
      %c0_12 = arith.constant 0 : index
      %13 = vector.load %arg1[%c0_10, %12, %c0_11, %c0_12] : memref<1x9x9x32xbf16, #tpu.memory_space<vmem>>, vector<1x1x9x32xbf16>
      %14 = vector.shape_cast %13 : vector<1x1x9x32xbf16> to vector<9x32xbf16>
      %15 = vector.extract_strided_slice %14 {offsets = [0, 0], sizes = [8, 32], strides = [1, 1]} : vector<9x32xbf16> to vector<8x32xbf16>
      %c0_13 = arith.constant 0 : index
      %c0_14 = arith.constant 0 : index
      %c0_15 = arith.constant 0 : index
      %16 = vector.load %arg2[%c0_13, %c0_14, %c0_15] : memref<4x32x128xbf16, #tpu.memory_space<vmem>>, vector<1x32x128xbf16>
      %17 = vector.shape_cast %16 : vector<1x32x128xbf16> to vector<32x128xbf16>
      %cst_16 = arith.constant dense<0.000000e+00> : vector<8x128xf32>
      %18 = tpu.matmul %15, %17, %cst_16 {dimension_numbers = #tpu.dot_dimension_numbers<[1], [0], [0], [1], [0, 0, 1, 1], [], []>} : vector<8x32xbf16>, vector<32x128xbf16>, vector<8x128xf32> -> vector<8x128xf32>
      %19 = arith.addf %10, %18 : vector<8x128xf32>
      %20 = vector.extract_strided_slice %14 {offsets = [1, 0], sizes = [8, 32], strides = [1, 1]} : vector<9x32xbf16> to vector<8x32xbf16>
      %c1 = arith.constant 1 : index
      %c0_17 = arith.constant 0 : index
      %c0_18 = arith.constant 0 : index
      %21 = vector.load %arg2[%c1, %c0_17, %c0_18] : memref<4x32x128xbf16, #tpu.memory_space<vmem>>, vector<1x32x128xbf16>
      %22 = vector.shape_cast %21 : vector<1x32x128xbf16> to vector<32x128xbf16>
      %cst_19 = arith.constant dense<0.000000e+00> : vector<8x128xf32>
      %23 = tpu.matmul %20, %22, %cst_19 {dimension_numbers = #tpu.dot_dimension_numbers<[1], [0], [0], [1], [0, 0, 1, 1], [], []>} : vector<8x32xbf16>, vector<32x128xbf16>, vector<8x128xf32> -> vector<8x128xf32>
      %24 = arith.addf %19, %23 : vector<8x128xf32>
      %c1_i32_20 = arith.constant 1 : i32
      %25 = arith.addi %arg7, %c1_i32_20 : i32
      %c0_21 = arith.constant 0 : index
      %26 = arith.index_cast %25 : i32 to index
      %c0_22 = arith.constant 0 : index
      %c0_23 = arith.constant 0 : index
      %27 = vector.load %arg1[%c0_21, %26, %c0_22, %c0_23] : memref<1x9x9x32xbf16, #tpu.memory_space<vmem>>, vector<1x1x9x32xbf16>
      %28 = vector.shape_cast %27 : vector<1x1x9x32xbf16> to vector<9x32xbf16>
      %29 = vector.extract_strided_slice %28 {offsets = [0, 0], sizes = [8, 32], strides = [1, 1]} : vector<9x32xbf16> to vector<8x32xbf16>
      %c2 = arith.constant 2 : index
      %c0_24 = arith.constant 0 : index
      %c0_25 = arith.constant 0 : index
      %30 = vector.load %arg2[%c2, %c0_24, %c0_25] : memref<4x32x128xbf16, #tpu.memory_space<vmem>>, vector<1x32x128xbf16>
      %31 = vector.shape_cast %30 : vector<1x32x128xbf16> to vector<32x128xbf16>
      %cst_26 = arith.constant dense<0.000000e+00> : vector<8x128xf32>
      %32 = tpu.matmul %29, %31, %cst_26 {dimension_numbers = #tpu.dot_dimension_numbers<[1], [0], [0], [1], [0, 0, 1, 1], [], []>} : vector<8x32xbf16>, vector<32x128xbf16>, vector<8x128xf32> -> vector<8x128xf32>
      %33 = arith.addf %24, %32 : vector<8x128xf32>
      %34 = vector.extract_strided_slice %28 {offsets = [1, 0], sizes = [8, 32], strides = [1, 1]} : vector<9x32xbf16> to vector<8x32xbf16>
      %c3 = arith.constant 3 : index
      %c0_27 = arith.constant 0 : index
      %c0_28 = arith.constant 0 : index
      %35 = vector.load %arg2[%c3, %c0_27, %c0_28] : memref<4x32x128xbf16, #tpu.memory_space<vmem>>, vector<1x32x128xbf16>
      %36 = vector.shape_cast %35 : vector<1x32x128xbf16> to vector<32x128xbf16>
      %cst_29 = arith.constant dense<0.000000e+00> : vector<8x128xf32>
      %37 = tpu.matmul %34, %36, %cst_29 {dimension_numbers = #tpu.dot_dimension_numbers<[1], [0], [0], [1], [0, 0, 1, 1], [], []>} : vector<8x32xbf16>, vector<32x128xbf16>, vector<8x128xf32> -> vector<8x128xf32>
      %38 = arith.addf %33, %37 : vector<8x128xf32>
      %39 = vector.broadcast %0 : vector<1x128xf32> to vector<8x128xf32>
      %40 = arith.addf %38, %39 : vector<8x128xf32>
      %c0_30 = arith.constant 0 : index
      %41 = arith.index_cast %arg7 : i32 to index
      %c0_31 = arith.constant 0 : index
      %c0_32 = arith.constant 0 : index
      %42 = vector.load %arg4[%c0_30, %41, %c0_31, %c0_32] : memref<1x8x8x128xf32, #tpu.memory_space<vmem>>, vector<1x1x8x128xf32>
      %43 = vector.shape_cast %42 : vector<1x1x8x128xf32> to vector<8x128xf32>
      %44 = vector.shape_cast %40 : vector<8x128xf32> to vector<1x1x8x128xf32>
      tpu.vector_store %arg4[%c0_30, %41, %c0_31, %c0_32], %44 {strides = array<i32>} : memref<1x8x8x128xf32, #tpu.memory_space<vmem>>, vector<1x1x8x128xf32>,
      %cst_33 = arith.constant dense<0.000000e+00> : vector<128xf32>
      %45 = vector.multi_reduction <add>, %40, %cst_33 [0] : vector<8x128xf32> to vector<128xf32>
      %46 = vector.shape_cast %45 : vector<128xf32> to vector<1x128xf32>
      %47 = arith.addf %arg8, %46 : vector<1x128xf32>
      %48 = arith.mulf %40, %40 : vector<8x128xf32>
      %cst_34 = arith.constant dense<0.000000e+00> : vector<128xf32>
      %49 = vector.multi_reduction <add>, %48, %cst_34 [0] : vector<8x128xf32> to vector<128xf32>
      %50 = vector.shape_cast %49 : vector<128xf32> to vector<1x128xf32>
      %51 = arith.addf %arg9, %50 : vector<1x128xf32>
      scf.yield %47, %51 : vector<1x128xf32>, vector<1x128xf32>
    }
    %c8_i32_1 = arith.constant 8 : i32
    %c0_2 = arith.constant 0 : index
    %c0_3 = arith.constant 0 : index
    %c0_4 = arith.constant 0 : index
    %4 = vector.load %arg5[%c0_2, %c0_3, %c0_4] : memref<1x1x128xf32, #tpu.memory_space<vmem>>, vector<1x1x128xf32>
    %5 = vector.shape_cast %4 : vector<1x1x128xf32> to vector<1x128xf32>
    %6 = vector.shape_cast %3#0 : vector<1x128xf32> to vector<1x1x128xf32>
    tpu.vector_store %arg5[%c0_2, %c0_3, %c0_4], %6 {strides = array<i32>} : memref<1x1x128xf32, #tpu.memory_space<vmem>>, vector<1x1x128xf32>,
    %c0_5 = arith.constant 0 : index
    %c0_6 = arith.constant 0 : index
    %c0_7 = arith.constant 0 : index
    %7 = vector.load %arg6[%c0_5, %c0_6, %c0_7] : memref<1x1x128xf32, #tpu.memory_space<vmem>>, vector<1x1x128xf32>
    %8 = vector.shape_cast %7 : vector<1x1x128xf32> to vector<1x128xf32>
    %9 = vector.shape_cast %3#1 : vector<1x128xf32> to vector<1x1x128xf32>
    tpu.vector_store %arg6[%c0_5, %c0_6, %c0_7], %9 {strides = array<i32>} : memref<1x1x128xf32, #tpu.memory_space<vmem>>, vector<1x1x128xf32>,
    return
  }
  func.func @transform_0(%arg0: i32) -> (i32, i32, i32, i32) {
    %c0_i32 = arith.constant 0 : i32
    %c0_i32_0 = arith.constant 0 : i32
    %c0_i32_1 = arith.constant 0 : i32
    %c0_i32_2 = arith.constant 0 : i32
    return %arg0, %c0_i32, %c0_i32_0, %c0_i32_1 : i32, i32, i32, i32
  }
  func.func @transform_1(%arg0: i32) -> (i32, i32, i32) {
    %c0_i32 = arith.constant 0 : i32
    %c0_i32_0 = arith.constant 0 : i32
    %c0_i32_1 = arith.constant 0 : i32
    %c0_i32_2 = arith.constant 0 : i32
    return %c0_i32, %c0_i32_0, %c0_i32_1 : i32, i32, i32
  }
  func.func @transform_2(%arg0: i32) -> (i32, i32) {
    %c0_i32 = arith.constant 0 : i32
    %c0_i32_0 = arith.constant 0 : i32
    %c0_i32_1 = arith.constant 0 : i32
    return %c0_i32, %c0_i32_0 : i32, i32
  }
  func.func @transform_3(%arg0: i32) -> (i32, i32, i32, i32) {
    %c0_i32 = arith.constant 0 : i32
    %c0_i32_0 = arith.constant 0 : i32
    %c0_i32_1 = arith.constant 0 : i32
    %c0_i32_2 = arith.constant 0 : i32
    return %arg0, %c0_i32, %c0_i32_0, %c0_i32_1 : i32, i32, i32, i32
  }
  func.func @transform_4(%arg0: i32) -> (i32, i32, i32) {
    %c0_i32 = arith.constant 0 : i32
    %c0_i32_0 = arith.constant 0 : i32
    %c0_i32_1 = arith.constant 0 : i32
    return %arg0, %c0_i32, %c0_i32_0 : i32, i32, i32
  }
  func.func @transform_5(%arg0: i32) -> (i32, i32, i32) {
    %c0_i32 = arith.constant 0 : i32
    %c0_i32_0 = arith.constant 0 : i32
    %c0_i32_1 = arith.constant 0 : i32
    return %arg0, %c0_i32, %c0_i32_0 : i32, i32, i32
  }
}

module attributes {stable_mosaic.version = 11 : i64} {
  func.func @_conv_kernel_stats(%arg0: i32, %arg1: memref<1x5x5x64xbf16, #tpu.memory_space<vmem>>, %arg2: memref<4x64x128xbf16, #tpu.memory_space<vmem>>, %arg3: memref<1x128xf32, #tpu.memory_space<vmem>>, %arg4: memref<1x4x4x128xf32, #tpu.memory_space<vmem>>, %arg5: memref<1x1x128xf32, #tpu.memory_space<vmem>>, %arg6: memref<1x1x128xf32, #tpu.memory_space<vmem>>) attributes {dimension_semantics = [#tpu.dimension_semantics<parallel>], iteration_bounds = array<i64: 2>, scalar_prefetch = 0 : i64, scratch_operands = 0 : i64, tpu.core_type = #tpu.core_type<tc>, window_params = [{transform_indices = @transform_0, window_bounds = array<i64: 1, 5, 5, 64>}, {pipeline_mode = #tpu.pipeline_mode<synchronous>, transform_indices = @transform_1, window_bounds = array<i64: 4, 64, 128>}, {pipeline_mode = #tpu.pipeline_mode<synchronous>, transform_indices = @transform_2, window_bounds = array<i64: 1, 128>}, {transform_indices = @transform_3, window_bounds = array<i64: 1, 4, 4, 128>}, {transform_indices = @transform_4, window_bounds = array<i64: 1, 1, 128>}, {transform_indices = @transform_5, window_bounds = array<i64: 1, 1, 128>}]} {
    %c0 = arith.constant 0 : index
    %c0_0 = arith.constant 0 : index
    %0 = vector.load %arg3[%c0, %c0_0] : memref<1x128xf32, #tpu.memory_space<vmem>>, vector<1x128xf32>
    %cst = arith.constant 0.000000e+00 : f32
    %1 = vector.broadcast %cst : f32 to vector<1x128xf32>
    %c0_i32 = arith.constant 0 : i32
    %c4_i32 = arith.constant 4 : i32
    %2 = arith.addi %c0_i32, %c4_i32 : i32
    %c1_i32 = arith.constant 1 : i32
    %3:2 = scf.for %arg7 = %c0_i32 to %2 step %c1_i32 iter_args(%arg8 = %1, %arg9 = %1) -> (vector<1x128xf32>, vector<1x128xf32>)  : i32 {
      %cst_8 = arith.constant 0.000000e+00 : f32
      %10 = vector.broadcast %cst_8 : f32 to vector<4x128xf32>
      %c0_i32_9 = arith.constant 0 : i32
      %11 = arith.addi %arg7, %c0_i32_9 : i32
      %c0_10 = arith.constant 0 : index
      %12 = arith.index_cast %11 : i32 to index
      %c0_11 = arith.constant 0 : index
      %c0_12 = arith.constant 0 : index
      %13 = vector.load %arg1[%c0_10, %12, %c0_11, %c0_12] : memref<1x5x5x64xbf16, #tpu.memory_space<vmem>>, vector<1x1x5x64xbf16>
      %14 = vector.shape_cast %13 : vector<1x1x5x64xbf16> to vector<5x64xbf16>
      %15 = vector.extract_strided_slice %14 {offsets = [0, 0], sizes = [4, 64], strides = [1, 1]} : vector<5x64xbf16> to vector<4x64xbf16>
      %c0_13 = arith.constant 0 : index
      %c0_14 = arith.constant 0 : index
      %c0_15 = arith.constant 0 : index
      %16 = vector.load %arg2[%c0_13, %c0_14, %c0_15] : memref<4x64x128xbf16, #tpu.memory_space<vmem>>, vector<1x64x128xbf16>
      %17 = vector.shape_cast %16 : vector<1x64x128xbf16> to vector<64x128xbf16>
      %cst_16 = arith.constant dense<0.000000e+00> : vector<4x128xf32>
      %18 = tpu.matmul %15, %17, %cst_16 {dimension_numbers = #tpu.dot_dimension_numbers<[1], [0], [0], [1], [0, 0, 1, 1], [], []>} : vector<4x64xbf16>, vector<64x128xbf16>, vector<4x128xf32> -> vector<4x128xf32>
      %19 = arith.addf %10, %18 : vector<4x128xf32>
      %20 = vector.extract_strided_slice %14 {offsets = [1, 0], sizes = [4, 64], strides = [1, 1]} : vector<5x64xbf16> to vector<4x64xbf16>
      %c1 = arith.constant 1 : index
      %c0_17 = arith.constant 0 : index
      %c0_18 = arith.constant 0 : index
      %21 = vector.load %arg2[%c1, %c0_17, %c0_18] : memref<4x64x128xbf16, #tpu.memory_space<vmem>>, vector<1x64x128xbf16>
      %22 = vector.shape_cast %21 : vector<1x64x128xbf16> to vector<64x128xbf16>
      %cst_19 = arith.constant dense<0.000000e+00> : vector<4x128xf32>
      %23 = tpu.matmul %20, %22, %cst_19 {dimension_numbers = #tpu.dot_dimension_numbers<[1], [0], [0], [1], [0, 0, 1, 1], [], []>} : vector<4x64xbf16>, vector<64x128xbf16>, vector<4x128xf32> -> vector<4x128xf32>
      %24 = arith.addf %19, %23 : vector<4x128xf32>
      %c1_i32_20 = arith.constant 1 : i32
      %25 = arith.addi %arg7, %c1_i32_20 : i32
      %c0_21 = arith.constant 0 : index
      %26 = arith.index_cast %25 : i32 to index
      %c0_22 = arith.constant 0 : index
      %c0_23 = arith.constant 0 : index
      %27 = vector.load %arg1[%c0_21, %26, %c0_22, %c0_23] : memref<1x5x5x64xbf16, #tpu.memory_space<vmem>>, vector<1x1x5x64xbf16>
      %28 = vector.shape_cast %27 : vector<1x1x5x64xbf16> to vector<5x64xbf16>
      %29 = vector.extract_strided_slice %28 {offsets = [0, 0], sizes = [4, 64], strides = [1, 1]} : vector<5x64xbf16> to vector<4x64xbf16>
      %c2 = arith.constant 2 : index
      %c0_24 = arith.constant 0 : index
      %c0_25 = arith.constant 0 : index
      %30 = vector.load %arg2[%c2, %c0_24, %c0_25] : memref<4x64x128xbf16, #tpu.memory_space<vmem>>, vector<1x64x128xbf16>
      %31 = vector.shape_cast %30 : vector<1x64x128xbf16> to vector<64x128xbf16>
      %cst_26 = arith.constant dense<0.000000e+00> : vector<4x128xf32>
      %32 = tpu.matmul %29, %31, %cst_26 {dimension_numbers = #tpu.dot_dimension_numbers<[1], [0], [0], [1], [0, 0, 1, 1], [], []>} : vector<4x64xbf16>, vector<64x128xbf16>, vector<4x128xf32> -> vector<4x128xf32>
      %33 = arith.addf %24, %32 : vector<4x128xf32>
      %34 = vector.extract_strided_slice %28 {offsets = [1, 0], sizes = [4, 64], strides = [1, 1]} : vector<5x64xbf16> to vector<4x64xbf16>
      %c3 = arith.constant 3 : index
      %c0_27 = arith.constant 0 : index
      %c0_28 = arith.constant 0 : index
      %35 = vector.load %arg2[%c3, %c0_27, %c0_28] : memref<4x64x128xbf16, #tpu.memory_space<vmem>>, vector<1x64x128xbf16>
      %36 = vector.shape_cast %35 : vector<1x64x128xbf16> to vector<64x128xbf16>
      %cst_29 = arith.constant dense<0.000000e+00> : vector<4x128xf32>
      %37 = tpu.matmul %34, %36, %cst_29 {dimension_numbers = #tpu.dot_dimension_numbers<[1], [0], [0], [1], [0, 0, 1, 1], [], []>} : vector<4x64xbf16>, vector<64x128xbf16>, vector<4x128xf32> -> vector<4x128xf32>
      %38 = arith.addf %33, %37 : vector<4x128xf32>
      %39 = vector.broadcast %0 : vector<1x128xf32> to vector<4x128xf32>
      %40 = arith.addf %38, %39 : vector<4x128xf32>
      %c0_30 = arith.constant 0 : index
      %41 = arith.index_cast %arg7 : i32 to index
      %c0_31 = arith.constant 0 : index
      %c0_32 = arith.constant 0 : index
      %42 = vector.load %arg4[%c0_30, %41, %c0_31, %c0_32] : memref<1x4x4x128xf32, #tpu.memory_space<vmem>>, vector<1x1x4x128xf32>
      %43 = vector.shape_cast %42 : vector<1x1x4x128xf32> to vector<4x128xf32>
      %44 = vector.shape_cast %40 : vector<4x128xf32> to vector<1x1x4x128xf32>
      tpu.vector_store %arg4[%c0_30, %41, %c0_31, %c0_32], %44 {strides = array<i32>} : memref<1x4x4x128xf32, #tpu.memory_space<vmem>>, vector<1x1x4x128xf32>,
      %cst_33 = arith.constant dense<0.000000e+00> : vector<128xf32>
      %45 = vector.multi_reduction <add>, %40, %cst_33 [0] : vector<4x128xf32> to vector<128xf32>
      %46 = vector.shape_cast %45 : vector<128xf32> to vector<1x128xf32>
      %47 = arith.addf %arg8, %46 : vector<1x128xf32>
      %48 = arith.mulf %40, %40 : vector<4x128xf32>
      %cst_34 = arith.constant dense<0.000000e+00> : vector<128xf32>
      %49 = vector.multi_reduction <add>, %48, %cst_34 [0] : vector<4x128xf32> to vector<128xf32>
      %50 = vector.shape_cast %49 : vector<128xf32> to vector<1x128xf32>
      %51 = arith.addf %arg9, %50 : vector<1x128xf32>
      scf.yield %47, %51 : vector<1x128xf32>, vector<1x128xf32>
    }
    %c4_i32_1 = arith.constant 4 : i32
    %c0_2 = arith.constant 0 : index
    %c0_3 = arith.constant 0 : index
    %c0_4 = arith.constant 0 : index
    %4 = vector.load %arg5[%c0_2, %c0_3, %c0_4] : memref<1x1x128xf32, #tpu.memory_space<vmem>>, vector<1x1x128xf32>
    %5 = vector.shape_cast %4 : vector<1x1x128xf32> to vector<1x128xf32>
    %6 = vector.shape_cast %3#0 : vector<1x128xf32> to vector<1x1x128xf32>
    tpu.vector_store %arg5[%c0_2, %c0_3, %c0_4], %6 {strides = array<i32>} : memref<1x1x128xf32, #tpu.memory_space<vmem>>, vector<1x1x128xf32>,
    %c0_5 = arith.constant 0 : index
    %c0_6 = arith.constant 0 : index
    %c0_7 = arith.constant 0 : index
    %7 = vector.load %arg6[%c0_5, %c0_6, %c0_7] : memref<1x1x128xf32, #tpu.memory_space<vmem>>, vector<1x1x128xf32>
    %8 = vector.shape_cast %7 : vector<1x1x128xf32> to vector<1x128xf32>
    %9 = vector.shape_cast %3#1 : vector<1x128xf32> to vector<1x1x128xf32>
    tpu.vector_store %arg6[%c0_5, %c0_6, %c0_7], %9 {strides = array<i32>} : memref<1x1x128xf32, #tpu.memory_space<vmem>>, vector<1x1x128xf32>,
    return
  }
  func.func @transform_0(%arg0: i32) -> (i32, i32, i32, i32) {
    %c0_i32 = arith.constant 0 : i32
    %c0_i32_0 = arith.constant 0 : i32
    %c0_i32_1 = arith.constant 0 : i32
    %c0_i32_2 = arith.constant 0 : i32
    return %arg0, %c0_i32, %c0_i32_0, %c0_i32_1 : i32, i32, i32, i32
  }
  func.func @transform_1(%arg0: i32) -> (i32, i32, i32) {
    %c0_i32 = arith.constant 0 : i32
    %c0_i32_0 = arith.constant 0 : i32
    %c0_i32_1 = arith.constant 0 : i32
    %c0_i32_2 = arith.constant 0 : i32
    return %c0_i32, %c0_i32_0, %c0_i32_1 : i32, i32, i32
  }
  func.func @transform_2(%arg0: i32) -> (i32, i32) {
    %c0_i32 = arith.constant 0 : i32
    %c0_i32_0 = arith.constant 0 : i32
    %c0_i32_1 = arith.constant 0 : i32
    return %c0_i32, %c0_i32_0 : i32, i32
  }
  func.func @transform_3(%arg0: i32) -> (i32, i32, i32, i32) {
    %c0_i32 = arith.constant 0 : i32
    %c0_i32_0 = arith.constant 0 : i32
    %c0_i32_1 = arith.constant 0 : i32
    %c0_i32_2 = arith.constant 0 : i32
    return %arg0, %c0_i32, %c0_i32_0, %c0_i32_1 : i32, i32, i32, i32
  }
  func.func @transform_4(%arg0: i32) -> (i32, i32, i32) {
    %c0_i32 = arith.constant 0 : i32
    %c0_i32_0 = arith.constant 0 : i32
    %c0_i32_1 = arith.constant 0 : i32
    return %arg0, %c0_i32, %c0_i32_0 : i32, i32, i32
  }
  func.func @transform_5(%arg0: i32) -> (i32, i32, i32) {
    %c0_i32 = arith.constant 0 : i32
    %c0_i32_0 = arith.constant 0 : i32
    %c0_i32_1 = arith.constant 0 : i32
    return %arg0, %c0_i32, %c0_i32_0 : i32, i32, i32
  }
}

module attributes {stable_mosaic.version = 11 : i64} {
  func.func @_conv_kernel_stats(%arg0: i32, %arg1: memref<1x6x6x32xbf16, #tpu.memory_space<vmem>>, %arg2: memref<16x32x128xbf16, #tpu.memory_space<vmem>>, %arg3: memref<1x128xf32, #tpu.memory_space<vmem>>, %arg4: memref<1x3x3x128xf32, #tpu.memory_space<vmem>>, %arg5: memref<1x1x128xf32, #tpu.memory_space<vmem>>, %arg6: memref<1x1x128xf32, #tpu.memory_space<vmem>>) attributes {dimension_semantics = [#tpu.dimension_semantics<parallel>], iteration_bounds = array<i64: 2>, scalar_prefetch = 0 : i64, scratch_operands = 0 : i64, tpu.core_type = #tpu.core_type<tc>, window_params = [{transform_indices = @transform_0, window_bounds = array<i64: 1, 6, 6, 32>}, {pipeline_mode = #tpu.pipeline_mode<synchronous>, transform_indices = @transform_1, window_bounds = array<i64: 16, 32, 128>}, {pipeline_mode = #tpu.pipeline_mode<synchronous>, transform_indices = @transform_2, window_bounds = array<i64: 1, 128>}, {transform_indices = @transform_3, window_bounds = array<i64: 1, 3, 3, 128>}, {transform_indices = @transform_4, window_bounds = array<i64: 1, 1, 128>}, {transform_indices = @transform_5, window_bounds = array<i64: 1, 1, 128>}]} {
    %c0 = arith.constant 0 : index
    %c0_0 = arith.constant 0 : index
    %0 = vector.load %arg3[%c0, %c0_0] : memref<1x128xf32, #tpu.memory_space<vmem>>, vector<1x128xf32>
    %cst = arith.constant 0.000000e+00 : f32
    %1 = vector.broadcast %cst : f32 to vector<1x128xf32>
    %c0_i32 = arith.constant 0 : i32
    %c3_i32 = arith.constant 3 : i32
    %2 = arith.addi %c0_i32, %c3_i32 : i32
    %c1_i32 = arith.constant 1 : i32
    %3:2 = scf.for %arg7 = %c0_i32 to %2 step %c1_i32 iter_args(%arg8 = %1, %arg9 = %1) -> (vector<1x128xf32>, vector<1x128xf32>)  : i32 {
      %cst_8 = arith.constant 0.000000e+00 : f32
      %10 = vector.broadcast %cst_8 : f32 to vector<3x128xf32>
      %c0_i32_9 = arith.constant 0 : i32
      %11 = arith.addi %arg7, %c0_i32_9 : i32
      %c0_10 = arith.constant 0 : index
      %12 = arith.index_cast %11 : i32 to index
      %c0_11 = arith.constant 0 : index
      %c0_12 = arith.constant 0 : index
      %13 = vector.load %arg1[%c0_10, %12, %c0_11, %c0_12] : memref<1x6x6x32xbf16, #tpu.memory_space<vmem>>, vector<1x1x6x32xbf16>
      %14 = vector.shape_cast %13 : vector<1x1x6x32xbf16> to vector<6x32xbf16>
      %15 = vector.extract_strided_slice %14 {offsets = [0, 0], sizes = [3, 32], strides = [1, 1]} : vector<6x32xbf16> to vector<3x32xbf16>
      %c0_13 = arith.constant 0 : index
      %c0_14 = arith.constant 0 : index
      %c0_15 = arith.constant 0 : index
      %16 = vector.load %arg2[%c0_13, %c0_14, %c0_15] : memref<16x32x128xbf16, #tpu.memory_space<vmem>>, vector<1x32x128xbf16>
      %17 = vector.shape_cast %16 : vector<1x32x128xbf16> to vector<32x128xbf16>
      %cst_16 = arith.constant dense<0.000000e+00> : vector<3x128xf32>
      %18 = tpu.matmul %15, %17, %cst_16 {dimension_numbers = #tpu.dot_dimension_numbers<[1], [0], [0], [1], [0, 0, 1, 1], [], []>} : vector<3x32xbf16>, vector<32x128xbf16>, vector<3x128xf32> -> vector<3x128xf32>
      %19 = arith.addf %10, %18 : vector<3x128xf32>
      %20 = vector.extract_strided_slice %14 {offsets = [1, 0], sizes = [3, 32], strides = [1, 1]} : vector<6x32xbf16> to vector<3x32xbf16>
      %c1 = arith.constant 1 : index
      %c0_17 = arith.constant 0 : index
      %c0_18 = arith.constant 0 : index
      %21 = vector.load %arg2[%c1, %c0_17, %c0_18] : memref<16x32x128xbf16, #tpu.memory_space<vmem>>, vector<1x32x128xbf16>
      %22 = vector.shape_cast %21 : vector<1x32x128xbf16> to vector<32x128xbf16>
      %cst_19 = arith.constant dense<0.000000e+00> : vector<3x128xf32>
      %23 = tpu.matmul %20, %22, %cst_19 {dimension_numbers = #tpu.dot_dimension_numbers<[1], [0], [0], [1], [0, 0, 1, 1], [], []>} : vector<3x32xbf16>, vector<32x128xbf16>, vector<3x128xf32> -> vector<3x128xf32>
      %24 = arith.addf %19, %23 : vector<3x128xf32>
      %25 = vector.extract_strided_slice %14 {offsets = [2, 0], sizes = [3, 32], strides = [1, 1]} : vector<6x32xbf16> to vector<3x32xbf16>
      %c2 = arith.constant 2 : index
      %c0_20 = arith.constant 0 : index
      %c0_21 = arith.constant 0 : index
      %26 = vector.load %arg2[%c2, %c0_20, %c0_21] : memref<16x32x128xbf16, #tpu.memory_space<vmem>>, vector<1x32x128xbf16>
      %27 = vector.shape_cast %26 : vector<1x32x128xbf16> to vector<32x128xbf16>
      %cst_22 = arith.constant dense<0.000000e+00> : vector<3x128xf32>
      %28 = tpu.matmul %25, %27, %cst_22 {dimension_numbers = #tpu.dot_dimension_numbers<[1], [0], [0], [1], [0, 0, 1, 1], [], []>} : vector<3x32xbf16>, vector<32x128xbf16>, vector<3x128xf32> -> vector<3x128xf32>
      %29 = arith.addf %24, %28 : vector<3x128xf32>
      %30 = vector.extract_strided_slice %14 {offsets = [3, 0], sizes = [3, 32], strides = [1, 1]} : vector<6x32xbf16> to vector<3x32xbf16>
      %c3 = arith.constant 3 : index
      %c0_23 = arith.constant 0 : index
      %c0_24 = arith.constant 0 : index
      %31 = vector.load %arg2[%c3, %c0_23, %c0_24] : memref<16x32x128xbf16, #tpu.memory_space<vmem>>, vector<1x32x128xbf16>
      %32 = vector.shape_cast %31 : vector<1x32x128xbf16> to vector<32x128xbf16>
      %cst_25 = arith.constant dense<0.000000e+00> : vector<3x128xf32>
      %33 = tpu.matmul %30, %32, %cst_25 {dimension_numbers = #tpu.dot_dimension_numbers<[1], [0], [0], [1], [0, 0, 1, 1], [], []>} : vector<3x32xbf16>, vector<32x128xbf16>, vector<3x128xf32> -> vector<3x128xf32>
      %34 = arith.addf %29, %33 : vector<3x128xf32>
      %c1_i32_26 = arith.constant 1 : i32
      %35 = arith.addi %arg7, %c1_i32_26 : i32
      %c0_27 = arith.constant 0 : index
      %36 = arith.index_cast %35 : i32 to index
      %c0_28 = arith.constant 0 : index
      %c0_29 = arith.constant 0 : index
      %37 = vector.load %arg1[%c0_27, %36, %c0_28, %c0_29] : memref<1x6x6x32xbf16, #tpu.memory_space<vmem>>, vector<1x1x6x32xbf16>
      %38 = vector.shape_cast %37 : vector<1x1x6x32xbf16> to vector<6x32xbf16>
      %39 = vector.extract_strided_slice %38 {offsets = [0, 0], sizes = [3, 32], strides = [1, 1]} : vector<6x32xbf16> to vector<3x32xbf16>
      %c4 = arith.constant 4 : index
      %c0_30 = arith.constant 0 : index
      %c0_31 = arith.constant 0 : index
      %40 = vector.load %arg2[%c4, %c0_30, %c0_31] : memref<16x32x128xbf16, #tpu.memory_space<vmem>>, vector<1x32x128xbf16>
      %41 = vector.shape_cast %40 : vector<1x32x128xbf16> to vector<32x128xbf16>
      %cst_32 = arith.constant dense<0.000000e+00> : vector<3x128xf32>
      %42 = tpu.matmul %39, %41, %cst_32 {dimension_numbers = #tpu.dot_dimension_numbers<[1], [0], [0], [1], [0, 0, 1, 1], [], []>} : vector<3x32xbf16>, vector<32x128xbf16>, vector<3x128xf32> -> vector<3x128xf32>
      %43 = arith.addf %34, %42 : vector<3x128xf32>
      %44 = vector.extract_strided_slice %38 {offsets = [1, 0], sizes = [3, 32], strides = [1, 1]} : vector<6x32xbf16> to vector<3x32xbf16>
      %c5 = arith.constant 5 : index
      %c0_33 = arith.constant 0 : index
      %c0_34 = arith.constant 0 : index
      %45 = vector.load %arg2[%c5, %c0_33, %c0_34] : memref<16x32x128xbf16, #tpu.memory_space<vmem>>, vector<1x32x128xbf16>
      %46 = vector.shape_cast %45 : vector<1x32x128xbf16> to vector<32x128xbf16>
      %cst_35 = arith.constant dense<0.000000e+00> : vector<3x128xf32>
      %47 = tpu.matmul %44, %46, %cst_35 {dimension_numbers = #tpu.dot_dimension_numbers<[1], [0], [0], [1], [0, 0, 1, 1], [], []>} : vector<3x32xbf16>, vector<32x128xbf16>, vector<3x128xf32> -> vector<3x128xf32>
      %48 = arith.addf %43, %47 : vector<3x128xf32>
      %49 = vector.extract_strided_slice %38 {offsets = [2, 0], sizes = [3, 32], strides = [1, 1]} : vector<6x32xbf16> to vector<3x32xbf16>
      %c6 = arith.constant 6 : index
      %c0_36 = arith.constant 0 : index
      %c0_37 = arith.constant 0 : index
      %50 = vector.load %arg2[%c6, %c0_36, %c0_37] : memref<16x32x128xbf16, #tpu.memory_space<vmem>>, vector<1x32x128xbf16>
      %51 = vector.shape_cast %50 : vector<1x32x128xbf16> to vector<32x128xbf16>
      %cst_38 = arith.constant dense<0.000000e+00> : vector<3x128xf32>
      %52 = tpu.matmul %49, %51, %cst_38 {dimension_numbers = #tpu.dot_dimension_numbers<[1], [0], [0], [1], [0, 0, 1, 1], [], []>} : vector<3x32xbf16>, vector<32x128xbf16>, vector<3x128xf32> -> vector<3x128xf32>
      %53 = arith.addf %48, %52 : vector<3x128xf32>
      %54 = vector.extract_strided_slice %38 {offsets = [3, 0], sizes = [3, 32], strides = [1, 1]} : vector<6x32xbf16> to vector<3x32xbf16>
      %c7 = arith.constant 7 : index
      %c0_39 = arith.constant 0 : index
      %c0_40 = arith.constant 0 : index
      %55 = vector.load %arg2[%c7, %c0_39, %c0_40] : memref<16x32x128xbf16, #tpu.memory_space<vmem>>, vector<1x32x128xbf16>
      %56 = vector.shape_cast %55 : vector<1x32x128xbf16> to vector<32x128xbf16>
      %cst_41 = arith.constant dense<0.000000e+00> : vector<3x128xf32>
      %57 = tpu.matmul %54, %56, %cst_41 {dimension_numbers = #tpu.dot_dimension_numbers<[1], [0], [0], [1], [0, 0, 1, 1], [], []>} : vector<3x32xbf16>, vector<32x128xbf16>, vector<3x128xf32> -> vector<3x128xf32>
      %58 = arith.addf %53, %57 : vector<3x128xf32>
      %c2_i32 = arith.constant 2 : i32
      %59 = arith.addi %arg7, %c2_i32 : i32
      %c0_42 = arith.constant 0 : index
      %60 = arith.index_cast %59 : i32 to index
      %c0_43 = arith.constant 0 : index
      %c0_44 = arith.constant 0 : index
      %61 = vector.load %arg1[%c0_42, %60, %c0_43, %c0_44] : memref<1x6x6x32xbf16, #tpu.memory_space<vmem>>, vector<1x1x6x32xbf16>
      %62 = vector.shape_cast %61 : vector<1x1x6x32xbf16> to vector<6x32xbf16>
      %63 = vector.extract_strided_slice %62 {offsets = [0, 0], sizes = [3, 32], strides = [1, 1]} : vector<6x32xbf16> to vector<3x32xbf16>
      %c8 = arith.constant 8 : index
      %c0_45 = arith.constant 0 : index
      %c0_46 = arith.constant 0 : index
      %64 = vector.load %arg2[%c8, %c0_45, %c0_46] : memref<16x32x128xbf16, #tpu.memory_space<vmem>>, vector<1x32x128xbf16>
      %65 = vector.shape_cast %64 : vector<1x32x128xbf16> to vector<32x128xbf16>
      %cst_47 = arith.constant dense<0.000000e+00> : vector<3x128xf32>
      %66 = tpu.matmul %63, %65, %cst_47 {dimension_numbers = #tpu.dot_dimension_numbers<[1], [0], [0], [1], [0, 0, 1, 1], [], []>} : vector<3x32xbf16>, vector<32x128xbf16>, vector<3x128xf32> -> vector<3x128xf32>
      %67 = arith.addf %58, %66 : vector<3x128xf32>
      %68 = vector.extract_strided_slice %62 {offsets = [1, 0], sizes = [3, 32], strides = [1, 1]} : vector<6x32xbf16> to vector<3x32xbf16>
      %c9 = arith.constant 9 : index
      %c0_48 = arith.constant 0 : index
      %c0_49 = arith.constant 0 : index
      %69 = vector.load %arg2[%c9, %c0_48, %c0_49] : memref<16x32x128xbf16, #tpu.memory_space<vmem>>, vector<1x32x128xbf16>
      %70 = vector.shape_cast %69 : vector<1x32x128xbf16> to vector<32x128xbf16>
      %cst_50 = arith.constant dense<0.000000e+00> : vector<3x128xf32>
      %71 = tpu.matmul %68, %70, %cst_50 {dimension_numbers = #tpu.dot_dimension_numbers<[1], [0], [0], [1], [0, 0, 1, 1], [], []>} : vector<3x32xbf16>, vector<32x128xbf16>, vector<3x128xf32> -> vector<3x128xf32>
      %72 = arith.addf %67, %71 : vector<3x128xf32>
      %73 = vector.extract_strided_slice %62 {offsets = [2, 0], sizes = [3, 32], strides = [1, 1]} : vector<6x32xbf16> to vector<3x32xbf16>
      %c10 = arith.constant 10 : index
      %c0_51 = arith.constant 0 : index
      %c0_52 = arith.constant 0 : index
      %74 = vector.load %arg2[%c10, %c0_51, %c0_52] : memref<16x32x128xbf16, #tpu.memory_space<vmem>>, vector<1x32x128xbf16>
      %75 = vector.shape_cast %74 : vector<1x32x128xbf16> to vector<32x128xbf16>
      %cst_53 = arith.constant dense<0.000000e+00> : vector<3x128xf32>
      %76 = tpu.matmul %73, %75, %cst_53 {dimension_numbers = #tpu.dot_dimension_numbers<[1], [0], [0], [1], [0, 0, 1, 1], [], []>} : vector<3x32xbf16>, vector<32x128xbf16>, vector<3x128xf32> -> vector<3x128xf32>
      %77 = arith.addf %72, %76 : vector<3x128xf32>
      %78 = vector.extract_strided_slice %62 {offsets = [3, 0], sizes = [3, 32], strides = [1, 1]} : vector<6x32xbf16> to vector<3x32xbf16>
      %c11 = arith.constant 11 : index
      %c0_54 = arith.constant 0 : index
      %c0_55 = arith.constant 0 : index
      %79 = vector.load %arg2[%c11, %c0_54, %c0_55] : memref<16x32x128xbf16, #tpu.memory_space<vmem>>, vector<1x32x128xbf16>
      %80 = vector.shape_cast %79 : vector<1x32x128xbf16> to vector<32x128xbf16>
      %cst_56 = arith.constant dense<0.000000e+00> : vector<3x128xf32>
      %81 = tpu.matmul %78, %80, %cst_56 {dimension_numbers = #tpu.dot_dimension_numbers<[1], [0], [0], [1], [0, 0, 1, 1], [], []>} : vector<3x32xbf16>, vector<32x128xbf16>, vector<3x128xf32> -> vector<3x128xf32>
      %82 = arith.addf %77, %81 : vector<3x128xf32>
      %c3_i32_57 = arith.constant 3 : i32
      %83 = arith.addi %arg7, %c3_i32_57 : i32
      %c0_58 = arith.constant 0 : index
      %84 = arith.index_cast %83 : i32 to index
      %c0_59 = arith.constant 0 : index
      %c0_60 = arith.constant 0 : index
      %85 = vector.load %arg1[%c0_58, %84, %c0_59, %c0_60] : memref<1x6x6x32xbf16, #tpu.memory_space<vmem>>, vector<1x1x6x32xbf16>
      %86 = vector.shape_cast %85 : vector<1x1x6x32xbf16> to vector<6x32xbf16>
      %87 = vector.extract_strided_slice %86 {offsets = [0, 0], sizes = [3, 32], strides = [1, 1]} : vector<6x32xbf16> to vector<3x32xbf16>
      %c12 = arith.constant 12 : index
      %c0_61 = arith.constant 0 : index
      %c0_62 = arith.constant 0 : index
      %88 = vector.load %arg2[%c12, %c0_61, %c0_62] : memref<16x32x128xbf16, #tpu.memory_space<vmem>>, vector<1x32x128xbf16>
      %89 = vector.shape_cast %88 : vector<1x32x128xbf16> to vector<32x128xbf16>
      %cst_63 = arith.constant dense<0.000000e+00> : vector<3x128xf32>
      %90 = tpu.matmul %87, %89, %cst_63 {dimension_numbers = #tpu.dot_dimension_numbers<[1], [0], [0], [1], [0, 0, 1, 1], [], []>} : vector<3x32xbf16>, vector<32x128xbf16>, vector<3x128xf32> -> vector<3x128xf32>
      %91 = arith.addf %82, %90 : vector<3x128xf32>
      %92 = vector.extract_strided_slice %86 {offsets = [1, 0], sizes = [3, 32], strides = [1, 1]} : vector<6x32xbf16> to vector<3x32xbf16>
      %c13 = arith.constant 13 : index
      %c0_64 = arith.constant 0 : index
      %c0_65 = arith.constant 0 : index
      %93 = vector.load %arg2[%c13, %c0_64, %c0_65] : memref<16x32x128xbf16, #tpu.memory_space<vmem>>, vector<1x32x128xbf16>
      %94 = vector.shape_cast %93 : vector<1x32x128xbf16> to vector<32x128xbf16>
      %cst_66 = arith.constant dense<0.000000e+00> : vector<3x128xf32>
      %95 = tpu.matmul %92, %94, %cst_66 {dimension_numbers = #tpu.dot_dimension_numbers<[1], [0], [0], [1], [0, 0, 1, 1], [], []>} : vector<3x32xbf16>, vector<32x128xbf16>, vector<3x128xf32> -> vector<3x128xf32>
      %96 = arith.addf %91, %95 : vector<3x128xf32>
      %97 = vector.extract_strided_slice %86 {offsets = [2, 0], sizes = [3, 32], strides = [1, 1]} : vector<6x32xbf16> to vector<3x32xbf16>
      %c14 = arith.constant 14 : index
      %c0_67 = arith.constant 0 : index
      %c0_68 = arith.constant 0 : index
      %98 = vector.load %arg2[%c14, %c0_67, %c0_68] : memref<16x32x128xbf16, #tpu.memory_space<vmem>>, vector<1x32x128xbf16>
      %99 = vector.shape_cast %98 : vector<1x32x128xbf16> to vector<32x128xbf16>
      %cst_69 = arith.constant dense<0.000000e+00> : vector<3x128xf32>
      %100 = tpu.matmul %97, %99, %cst_69 {dimension_numbers = #tpu.dot_dimension_numbers<[1], [0], [0], [1], [0, 0, 1, 1], [], []>} : vector<3x32xbf16>, vector<32x128xbf16>, vector<3x128xf32> -> vector<3x128xf32>
      %101 = arith.addf %96, %100 : vector<3x128xf32>
      %102 = vector.extract_strided_slice %86 {offsets = [3, 0], sizes = [3, 32], strides = [1, 1]} : vector<6x32xbf16> to vector<3x32xbf16>
      %c15 = arith.constant 15 : index
      %c0_70 = arith.constant 0 : index
      %c0_71 = arith.constant 0 : index
      %103 = vector.load %arg2[%c15, %c0_70, %c0_71] : memref<16x32x128xbf16, #tpu.memory_space<vmem>>, vector<1x32x128xbf16>
      %104 = vector.shape_cast %103 : vector<1x32x128xbf16> to vector<32x128xbf16>
      %cst_72 = arith.constant dense<0.000000e+00> : vector<3x128xf32>
      %105 = tpu.matmul %102, %104, %cst_72 {dimension_numbers = #tpu.dot_dimension_numbers<[1], [0], [0], [1], [0, 0, 1, 1], [], []>} : vector<3x32xbf16>, vector<32x128xbf16>, vector<3x128xf32> -> vector<3x128xf32>
      %106 = arith.addf %101, %105 : vector<3x128xf32>
      %107 = vector.broadcast %0 : vector<1x128xf32> to vector<3x128xf32>
      %108 = arith.addf %106, %107 : vector<3x128xf32>
      %c0_73 = arith.constant 0 : index
      %109 = arith.index_cast %arg7 : i32 to index
      %c0_74 = arith.constant 0 : index
      %c0_75 = arith.constant 0 : index
      %110 = vector.load %arg4[%c0_73, %109, %c0_74, %c0_75] : memref<1x3x3x128xf32, #tpu.memory_space<vmem>>, vector<1x1x3x128xf32>
      %111 = vector.shape_cast %110 : vector<1x1x3x128xf32> to vector<3x128xf32>
      %112 = vector.shape_cast %108 : vector<3x128xf32> to vector<1x1x3x128xf32>
      tpu.vector_store %arg4[%c0_73, %109, %c0_74, %c0_75], %112 {strides = array<i32>} : memref<1x3x3x128xf32, #tpu.memory_space<vmem>>, vector<1x1x3x128xf32>,
      %cst_76 = arith.constant dense<0.000000e+00> : vector<128xf32>
      %113 = vector.multi_reduction <add>, %108, %cst_76 [0] : vector<3x128xf32> to vector<128xf32>
      %114 = vector.shape_cast %113 : vector<128xf32> to vector<1x128xf32>
      %115 = arith.addf %arg8, %114 : vector<1x128xf32>
      %116 = arith.mulf %108, %108 : vector<3x128xf32>
      %cst_77 = arith.constant dense<0.000000e+00> : vector<128xf32>
      %117 = vector.multi_reduction <add>, %116, %cst_77 [0] : vector<3x128xf32> to vector<128xf32>
      %118 = vector.shape_cast %117 : vector<128xf32> to vector<1x128xf32>
      %119 = arith.addf %arg9, %118 : vector<1x128xf32>
      scf.yield %115, %119 : vector<1x128xf32>, vector<1x128xf32>
    }
    %c3_i32_1 = arith.constant 3 : i32
    %c0_2 = arith.constant 0 : index
    %c0_3 = arith.constant 0 : index
    %c0_4 = arith.constant 0 : index
    %4 = vector.load %arg5[%c0_2, %c0_3, %c0_4] : memref<1x1x128xf32, #tpu.memory_space<vmem>>, vector<1x1x128xf32>
    %5 = vector.shape_cast %4 : vector<1x1x128xf32> to vector<1x128xf32>
    %6 = vector.shape_cast %3#0 : vector<1x128xf32> to vector<1x1x128xf32>
    tpu.vector_store %arg5[%c0_2, %c0_3, %c0_4], %6 {strides = array<i32>} : memref<1x1x128xf32, #tpu.memory_space<vmem>>, vector<1x1x128xf32>,
    %c0_5 = arith.constant 0 : index
    %c0_6 = arith.constant 0 : index
    %c0_7 = arith.constant 0 : index
    %7 = vector.load %arg6[%c0_5, %c0_6, %c0_7] : memref<1x1x128xf32, #tpu.memory_space<vmem>>, vector<1x1x128xf32>
    %8 = vector.shape_cast %7 : vector<1x1x128xf32> to vector<1x128xf32>
    %9 = vector.shape_cast %3#1 : vector<1x128xf32> to vector<1x1x128xf32>
    tpu.vector_store %arg6[%c0_5, %c0_6, %c0_7], %9 {strides = array<i32>} : memref<1x1x128xf32, #tpu.memory_space<vmem>>, vector<1x1x128xf32>,
    return
  }
  func.func @transform_0(%arg0: i32) -> (i32, i32, i32, i32) {
    %c0_i32 = arith.constant 0 : i32
    %c0_i32_0 = arith.constant 0 : i32
    %c0_i32_1 = arith.constant 0 : i32
    %c0_i32_2 = arith.constant 0 : i32
    return %arg0, %c0_i32, %c0_i32_0, %c0_i32_1 : i32, i32, i32, i32
  }
  func.func @transform_1(%arg0: i32) -> (i32, i32, i32) {
    %c0_i32 = arith.constant 0 : i32
    %c0_i32_0 = arith.constant 0 : i32
    %c0_i32_1 = arith.constant 0 : i32
    %c0_i32_2 = arith.constant 0 : i32
    return %c0_i32, %c0_i32_0, %c0_i32_1 : i32, i32, i32
  }
  func.func @transform_2(%arg0: i32) -> (i32, i32) {
    %c0_i32 = arith.constant 0 : i32
    %c0_i32_0 = arith.constant 0 : i32
    %c0_i32_1 = arith.constant 0 : i32
    return %c0_i32, %c0_i32_0 : i32, i32
  }
  func.func @transform_3(%arg0: i32) -> (i32, i32, i32, i32) {
    %c0_i32 = arith.constant 0 : i32
    %c0_i32_0 = arith.constant 0 : i32
    %c0_i32_1 = arith.constant 0 : i32
    %c0_i32_2 = arith.constant 0 : i32
    return %arg0, %c0_i32, %c0_i32_0, %c0_i32_1 : i32, i32, i32, i32
  }
  func.func @transform_4(%arg0: i32) -> (i32, i32, i32) {
    %c0_i32 = arith.constant 0 : i32
    %c0_i32_0 = arith.constant 0 : i32
    %c0_i32_1 = arith.constant 0 : i32
    return %arg0, %c0_i32, %c0_i32_0 : i32, i32, i32
  }
  func.func @transform_5(%arg0: i32) -> (i32, i32, i32) {
    %c0_i32 = arith.constant 0 : i32
    %c0_i32_0 = arith.constant 0 : i32
    %c0_i32_1 = arith.constant 0 : i32
    return %arg0, %c0_i32, %c0_i32_0 : i32, i32, i32
  }
}

module attributes {stable_mosaic.version = 11 : i64} {
  func.func @_conv_kernel_plain(%arg0: i32, %arg1: memref<1x5x5x64xbf16, #tpu.memory_space<vmem>>, %arg2: memref<16x64x128xbf16, #tpu.memory_space<vmem>>, %arg3: memref<1x128xf32, #tpu.memory_space<vmem>>, %arg4: memref<1x2x2x128xf32, #tpu.memory_space<vmem>>) attributes {dimension_semantics = [#tpu.dimension_semantics<parallel>], iteration_bounds = array<i64: 2>, scalar_prefetch = 0 : i64, scratch_operands = 0 : i64, tpu.core_type = #tpu.core_type<tc>, window_params = [{transform_indices = @transform_0, window_bounds = array<i64: 1, 5, 5, 64>}, {pipeline_mode = #tpu.pipeline_mode<synchronous>, transform_indices = @transform_1, window_bounds = array<i64: 16, 64, 128>}, {pipeline_mode = #tpu.pipeline_mode<synchronous>, transform_indices = @transform_2, window_bounds = array<i64: 1, 128>}, {transform_indices = @transform_3, window_bounds = array<i64: 1, 2, 2, 128>}]} {
    %c0 = arith.constant 0 : index
    %c0_0 = arith.constant 0 : index
    %0 = vector.load %arg3[%c0, %c0_0] : memref<1x128xf32, #tpu.memory_space<vmem>>, vector<1x128xf32>
    %c0_i32 = arith.constant 0 : i32
    %c2_i32 = arith.constant 2 : i32
    %1 = arith.addi %c0_i32, %c2_i32 : i32
    %c1_i32 = arith.constant 1 : i32
    scf.for %arg5 = %c0_i32 to %1 step %c1_i32  : i32 {
      %cst = arith.constant 0.000000e+00 : f32
      %2 = vector.broadcast %cst : f32 to vector<2x128xf32>
      %c0_i32_2 = arith.constant 0 : i32
      %3 = arith.addi %arg5, %c0_i32_2 : i32
      %c0_3 = arith.constant 0 : index
      %4 = arith.index_cast %3 : i32 to index
      %c0_4 = arith.constant 0 : index
      %c0_5 = arith.constant 0 : index
      %5 = vector.load %arg1[%c0_3, %4, %c0_4, %c0_5] : memref<1x5x5x64xbf16, #tpu.memory_space<vmem>>, vector<1x1x5x64xbf16>
      %6 = vector.shape_cast %5 : vector<1x1x5x64xbf16> to vector<5x64xbf16>
      %7 = vector.extract_strided_slice %6 {offsets = [0, 0], sizes = [2, 64], strides = [1, 1]} : vector<5x64xbf16> to vector<2x64xbf16>
      %c0_6 = arith.constant 0 : index
      %c0_7 = arith.constant 0 : index
      %c0_8 = arith.constant 0 : index
      %8 = vector.load %arg2[%c0_6, %c0_7, %c0_8] : memref<16x64x128xbf16, #tpu.memory_space<vmem>>, vector<1x64x128xbf16>
      %9 = vector.shape_cast %8 : vector<1x64x128xbf16> to vector<64x128xbf16>
      %cst_9 = arith.constant dense<0.000000e+00> : vector<2x128xf32>
      %10 = tpu.matmul %7, %9, %cst_9 {dimension_numbers = #tpu.dot_dimension_numbers<[1], [0], [0], [1], [0, 0, 1, 1], [], []>} : vector<2x64xbf16>, vector<64x128xbf16>, vector<2x128xf32> -> vector<2x128xf32>
      %11 = arith.addf %2, %10 : vector<2x128xf32>
      %12 = vector.extract_strided_slice %6 {offsets = [1, 0], sizes = [2, 64], strides = [1, 1]} : vector<5x64xbf16> to vector<2x64xbf16>
      %c1 = arith.constant 1 : index
      %c0_10 = arith.constant 0 : index
      %c0_11 = arith.constant 0 : index
      %13 = vector.load %arg2[%c1, %c0_10, %c0_11] : memref<16x64x128xbf16, #tpu.memory_space<vmem>>, vector<1x64x128xbf16>
      %14 = vector.shape_cast %13 : vector<1x64x128xbf16> to vector<64x128xbf16>
      %cst_12 = arith.constant dense<0.000000e+00> : vector<2x128xf32>
      %15 = tpu.matmul %12, %14, %cst_12 {dimension_numbers = #tpu.dot_dimension_numbers<[1], [0], [0], [1], [0, 0, 1, 1], [], []>} : vector<2x64xbf16>, vector<64x128xbf16>, vector<2x128xf32> -> vector<2x128xf32>
      %16 = arith.addf %11, %15 : vector<2x128xf32>
      %17 = vector.extract_strided_slice %6 {offsets = [2, 0], sizes = [2, 64], strides = [1, 1]} : vector<5x64xbf16> to vector<2x64xbf16>
      %c2 = arith.constant 2 : index
      %c0_13 = arith.constant 0 : index
      %c0_14 = arith.constant 0 : index
      %18 = vector.load %arg2[%c2, %c0_13, %c0_14] : memref<16x64x128xbf16, #tpu.memory_space<vmem>>, vector<1x64x128xbf16>
      %19 = vector.shape_cast %18 : vector<1x64x128xbf16> to vector<64x128xbf16>
      %cst_15 = arith.constant dense<0.000000e+00> : vector<2x128xf32>
      %20 = tpu.matmul %17, %19, %cst_15 {dimension_numbers = #tpu.dot_dimension_numbers<[1], [0], [0], [1], [0, 0, 1, 1], [], []>} : vector<2x64xbf16>, vector<64x128xbf16>, vector<2x128xf32> -> vector<2x128xf32>
      %21 = arith.addf %16, %20 : vector<2x128xf32>
      %22 = vector.extract_strided_slice %6 {offsets = [3, 0], sizes = [2, 64], strides = [1, 1]} : vector<5x64xbf16> to vector<2x64xbf16>
      %c3 = arith.constant 3 : index
      %c0_16 = arith.constant 0 : index
      %c0_17 = arith.constant 0 : index
      %23 = vector.load %arg2[%c3, %c0_16, %c0_17] : memref<16x64x128xbf16, #tpu.memory_space<vmem>>, vector<1x64x128xbf16>
      %24 = vector.shape_cast %23 : vector<1x64x128xbf16> to vector<64x128xbf16>
      %cst_18 = arith.constant dense<0.000000e+00> : vector<2x128xf32>
      %25 = tpu.matmul %22, %24, %cst_18 {dimension_numbers = #tpu.dot_dimension_numbers<[1], [0], [0], [1], [0, 0, 1, 1], [], []>} : vector<2x64xbf16>, vector<64x128xbf16>, vector<2x128xf32> -> vector<2x128xf32>
      %26 = arith.addf %21, %25 : vector<2x128xf32>
      %c1_i32_19 = arith.constant 1 : i32
      %27 = arith.addi %arg5, %c1_i32_19 : i32
      %c0_20 = arith.constant 0 : index
      %28 = arith.index_cast %27 : i32 to index
      %c0_21 = arith.constant 0 : index
      %c0_22 = arith.constant 0 : index
      %29 = vector.load %arg1[%c0_20, %28, %c0_21, %c0_22] : memref<1x5x5x64xbf16, #tpu.memory_space<vmem>>, vector<1x1x5x64xbf16>
      %30 = vector.shape_cast %29 : vector<1x1x5x64xbf16> to vector<5x64xbf16>
      %31 = vector.extract_strided_slice %30 {offsets = [0, 0], sizes = [2, 64], strides = [1, 1]} : vector<5x64xbf16> to vector<2x64xbf16>
      %c4 = arith.constant 4 : index
      %c0_23 = arith.constant 0 : index
      %c0_24 = arith.constant 0 : index
      %32 = vector.load %arg2[%c4, %c0_23, %c0_24] : memref<16x64x128xbf16, #tpu.memory_space<vmem>>, vector<1x64x128xbf16>
      %33 = vector.shape_cast %32 : vector<1x64x128xbf16> to vector<64x128xbf16>
      %cst_25 = arith.constant dense<0.000000e+00> : vector<2x128xf32>
      %34 = tpu.matmul %31, %33, %cst_25 {dimension_numbers = #tpu.dot_dimension_numbers<[1], [0], [0], [1], [0, 0, 1, 1], [], []>} : vector<2x64xbf16>, vector<64x128xbf16>, vector<2x128xf32> -> vector<2x128xf32>
      %35 = arith.addf %26, %34 : vector<2x128xf32>
      %36 = vector.extract_strided_slice %30 {offsets = [1, 0], sizes = [2, 64], strides = [1, 1]} : vector<5x64xbf16> to vector<2x64xbf16>
      %c5 = arith.constant 5 : index
      %c0_26 = arith.constant 0 : index
      %c0_27 = arith.constant 0 : index
      %37 = vector.load %arg2[%c5, %c0_26, %c0_27] : memref<16x64x128xbf16, #tpu.memory_space<vmem>>, vector<1x64x128xbf16>
      %38 = vector.shape_cast %37 : vector<1x64x128xbf16> to vector<64x128xbf16>
      %cst_28 = arith.constant dense<0.000000e+00> : vector<2x128xf32>
      %39 = tpu.matmul %36, %38, %cst_28 {dimension_numbers = #tpu.dot_dimension_numbers<[1], [0], [0], [1], [0, 0, 1, 1], [], []>} : vector<2x64xbf16>, vector<64x128xbf16>, vector<2x128xf32> -> vector<2x128xf32>
      %40 = arith.addf %35, %39 : vector<2x128xf32>
      %41 = vector.extract_strided_slice %30 {offsets = [2, 0], sizes = [2, 64], strides = [1, 1]} : vector<5x64xbf16> to vector<2x64xbf16>
      %c6 = arith.constant 6 : index
      %c0_29 = arith.constant 0 : index
      %c0_30 = arith.constant 0 : index
      %42 = vector.load %arg2[%c6, %c0_29, %c0_30] : memref<16x64x128xbf16, #tpu.memory_space<vmem>>, vector<1x64x128xbf16>
      %43 = vector.shape_cast %42 : vector<1x64x128xbf16> to vector<64x128xbf16>
      %cst_31 = arith.constant dense<0.000000e+00> : vector<2x128xf32>
      %44 = tpu.matmul %41, %43, %cst_31 {dimension_numbers = #tpu.dot_dimension_numbers<[1], [0], [0], [1], [0, 0, 1, 1], [], []>} : vector<2x64xbf16>, vector<64x128xbf16>, vector<2x128xf32> -> vector<2x128xf32>
      %45 = arith.addf %40, %44 : vector<2x128xf32>
      %46 = vector.extract_strided_slice %30 {offsets = [3, 0], sizes = [2, 64], strides = [1, 1]} : vector<5x64xbf16> to vector<2x64xbf16>
      %c7 = arith.constant 7 : index
      %c0_32 = arith.constant 0 : index
      %c0_33 = arith.constant 0 : index
      %47 = vector.load %arg2[%c7, %c0_32, %c0_33] : memref<16x64x128xbf16, #tpu.memory_space<vmem>>, vector<1x64x128xbf16>
      %48 = vector.shape_cast %47 : vector<1x64x128xbf16> to vector<64x128xbf16>
      %cst_34 = arith.constant dense<0.000000e+00> : vector<2x128xf32>
      %49 = tpu.matmul %46, %48, %cst_34 {dimension_numbers = #tpu.dot_dimension_numbers<[1], [0], [0], [1], [0, 0, 1, 1], [], []>} : vector<2x64xbf16>, vector<64x128xbf16>, vector<2x128xf32> -> vector<2x128xf32>
      %50 = arith.addf %45, %49 : vector<2x128xf32>
      %c2_i32_35 = arith.constant 2 : i32
      %51 = arith.addi %arg5, %c2_i32_35 : i32
      %c0_36 = arith.constant 0 : index
      %52 = arith.index_cast %51 : i32 to index
      %c0_37 = arith.constant 0 : index
      %c0_38 = arith.constant 0 : index
      %53 = vector.load %arg1[%c0_36, %52, %c0_37, %c0_38] : memref<1x5x5x64xbf16, #tpu.memory_space<vmem>>, vector<1x1x5x64xbf16>
      %54 = vector.shape_cast %53 : vector<1x1x5x64xbf16> to vector<5x64xbf16>
      %55 = vector.extract_strided_slice %54 {offsets = [0, 0], sizes = [2, 64], strides = [1, 1]} : vector<5x64xbf16> to vector<2x64xbf16>
      %c8 = arith.constant 8 : index
      %c0_39 = arith.constant 0 : index
      %c0_40 = arith.constant 0 : index
      %56 = vector.load %arg2[%c8, %c0_39, %c0_40] : memref<16x64x128xbf16, #tpu.memory_space<vmem>>, vector<1x64x128xbf16>
      %57 = vector.shape_cast %56 : vector<1x64x128xbf16> to vector<64x128xbf16>
      %cst_41 = arith.constant dense<0.000000e+00> : vector<2x128xf32>
      %58 = tpu.matmul %55, %57, %cst_41 {dimension_numbers = #tpu.dot_dimension_numbers<[1], [0], [0], [1], [0, 0, 1, 1], [], []>} : vector<2x64xbf16>, vector<64x128xbf16>, vector<2x128xf32> -> vector<2x128xf32>
      %59 = arith.addf %50, %58 : vector<2x128xf32>
      %60 = vector.extract_strided_slice %54 {offsets = [1, 0], sizes = [2, 64], strides = [1, 1]} : vector<5x64xbf16> to vector<2x64xbf16>
      %c9 = arith.constant 9 : index
      %c0_42 = arith.constant 0 : index
      %c0_43 = arith.constant 0 : index
      %61 = vector.load %arg2[%c9, %c0_42, %c0_43] : memref<16x64x128xbf16, #tpu.memory_space<vmem>>, vector<1x64x128xbf16>
      %62 = vector.shape_cast %61 : vector<1x64x128xbf16> to vector<64x128xbf16>
      %cst_44 = arith.constant dense<0.000000e+00> : vector<2x128xf32>
      %63 = tpu.matmul %60, %62, %cst_44 {dimension_numbers = #tpu.dot_dimension_numbers<[1], [0], [0], [1], [0, 0, 1, 1], [], []>} : vector<2x64xbf16>, vector<64x128xbf16>, vector<2x128xf32> -> vector<2x128xf32>
      %64 = arith.addf %59, %63 : vector<2x128xf32>
      %65 = vector.extract_strided_slice %54 {offsets = [2, 0], sizes = [2, 64], strides = [1, 1]} : vector<5x64xbf16> to vector<2x64xbf16>
      %c10 = arith.constant 10 : index
      %c0_45 = arith.constant 0 : index
      %c0_46 = arith.constant 0 : index
      %66 = vector.load %arg2[%c10, %c0_45, %c0_46] : memref<16x64x128xbf16, #tpu.memory_space<vmem>>, vector<1x64x128xbf16>
      %67 = vector.shape_cast %66 : vector<1x64x128xbf16> to vector<64x128xbf16>
      %cst_47 = arith.constant dense<0.000000e+00> : vector<2x128xf32>
      %68 = tpu.matmul %65, %67, %cst_47 {dimension_numbers = #tpu.dot_dimension_numbers<[1], [0], [0], [1], [0, 0, 1, 1], [], []>} : vector<2x64xbf16>, vector<64x128xbf16>, vector<2x128xf32> -> vector<2x128xf32>
      %69 = arith.addf %64, %68 : vector<2x128xf32>
      %70 = vector.extract_strided_slice %54 {offsets = [3, 0], sizes = [2, 64], strides = [1, 1]} : vector<5x64xbf16> to vector<2x64xbf16>
      %c11 = arith.constant 11 : index
      %c0_48 = arith.constant 0 : index
      %c0_49 = arith.constant 0 : index
      %71 = vector.load %arg2[%c11, %c0_48, %c0_49] : memref<16x64x128xbf16, #tpu.memory_space<vmem>>, vector<1x64x128xbf16>
      %72 = vector.shape_cast %71 : vector<1x64x128xbf16> to vector<64x128xbf16>
      %cst_50 = arith.constant dense<0.000000e+00> : vector<2x128xf32>
      %73 = tpu.matmul %70, %72, %cst_50 {dimension_numbers = #tpu.dot_dimension_numbers<[1], [0], [0], [1], [0, 0, 1, 1], [], []>} : vector<2x64xbf16>, vector<64x128xbf16>, vector<2x128xf32> -> vector<2x128xf32>
      %74 = arith.addf %69, %73 : vector<2x128xf32>
      %c3_i32 = arith.constant 3 : i32
      %75 = arith.addi %arg5, %c3_i32 : i32
      %c0_51 = arith.constant 0 : index
      %76 = arith.index_cast %75 : i32 to index
      %c0_52 = arith.constant 0 : index
      %c0_53 = arith.constant 0 : index
      %77 = vector.load %arg1[%c0_51, %76, %c0_52, %c0_53] : memref<1x5x5x64xbf16, #tpu.memory_space<vmem>>, vector<1x1x5x64xbf16>
      %78 = vector.shape_cast %77 : vector<1x1x5x64xbf16> to vector<5x64xbf16>
      %79 = vector.extract_strided_slice %78 {offsets = [0, 0], sizes = [2, 64], strides = [1, 1]} : vector<5x64xbf16> to vector<2x64xbf16>
      %c12 = arith.constant 12 : index
      %c0_54 = arith.constant 0 : index
      %c0_55 = arith.constant 0 : index
      %80 = vector.load %arg2[%c12, %c0_54, %c0_55] : memref<16x64x128xbf16, #tpu.memory_space<vmem>>, vector<1x64x128xbf16>
      %81 = vector.shape_cast %80 : vector<1x64x128xbf16> to vector<64x128xbf16>
      %cst_56 = arith.constant dense<0.000000e+00> : vector<2x128xf32>
      %82 = tpu.matmul %79, %81, %cst_56 {dimension_numbers = #tpu.dot_dimension_numbers<[1], [0], [0], [1], [0, 0, 1, 1], [], []>} : vector<2x64xbf16>, vector<64x128xbf16>, vector<2x128xf32> -> vector<2x128xf32>
      %83 = arith.addf %74, %82 : vector<2x128xf32>
      %84 = vector.extract_strided_slice %78 {offsets = [1, 0], sizes = [2, 64], strides = [1, 1]} : vector<5x64xbf16> to vector<2x64xbf16>
      %c13 = arith.constant 13 : index
      %c0_57 = arith.constant 0 : index
      %c0_58 = arith.constant 0 : index
      %85 = vector.load %arg2[%c13, %c0_57, %c0_58] : memref<16x64x128xbf16, #tpu.memory_space<vmem>>, vector<1x64x128xbf16>
      %86 = vector.shape_cast %85 : vector<1x64x128xbf16> to vector<64x128xbf16>
      %cst_59 = arith.constant dense<0.000000e+00> : vector<2x128xf32>
      %87 = tpu.matmul %84, %86, %cst_59 {dimension_numbers = #tpu.dot_dimension_numbers<[1], [0], [0], [1], [0, 0, 1, 1], [], []>} : vector<2x64xbf16>, vector<64x128xbf16>, vector<2x128xf32> -> vector<2x128xf32>
      %88 = arith.addf %83, %87 : vector<2x128xf32>
      %89 = vector.extract_strided_slice %78 {offsets = [2, 0], sizes = [2, 64], strides = [1, 1]} : vector<5x64xbf16> to vector<2x64xbf16>
      %c14 = arith.constant 14 : index
      %c0_60 = arith.constant 0 : index
      %c0_61 = arith.constant 0 : index
      %90 = vector.load %arg2[%c14, %c0_60, %c0_61] : memref<16x64x128xbf16, #tpu.memory_space<vmem>>, vector<1x64x128xbf16>
      %91 = vector.shape_cast %90 : vector<1x64x128xbf16> to vector<64x128xbf16>
      %cst_62 = arith.constant dense<0.000000e+00> : vector<2x128xf32>
      %92 = tpu.matmul %89, %91, %cst_62 {dimension_numbers = #tpu.dot_dimension_numbers<[1], [0], [0], [1], [0, 0, 1, 1], [], []>} : vector<2x64xbf16>, vector<64x128xbf16>, vector<2x128xf32> -> vector<2x128xf32>
      %93 = arith.addf %88, %92 : vector<2x128xf32>
      %94 = vector.extract_strided_slice %78 {offsets = [3, 0], sizes = [2, 64], strides = [1, 1]} : vector<5x64xbf16> to vector<2x64xbf16>
      %c15 = arith.constant 15 : index
      %c0_63 = arith.constant 0 : index
      %c0_64 = arith.constant 0 : index
      %95 = vector.load %arg2[%c15, %c0_63, %c0_64] : memref<16x64x128xbf16, #tpu.memory_space<vmem>>, vector<1x64x128xbf16>
      %96 = vector.shape_cast %95 : vector<1x64x128xbf16> to vector<64x128xbf16>
      %cst_65 = arith.constant dense<0.000000e+00> : vector<2x128xf32>
      %97 = tpu.matmul %94, %96, %cst_65 {dimension_numbers = #tpu.dot_dimension_numbers<[1], [0], [0], [1], [0, 0, 1, 1], [], []>} : vector<2x64xbf16>, vector<64x128xbf16>, vector<2x128xf32> -> vector<2x128xf32>
      %98 = arith.addf %93, %97 : vector<2x128xf32>
      %99 = vector.broadcast %0 : vector<1x128xf32> to vector<2x128xf32>
      %100 = arith.addf %98, %99 : vector<2x128xf32>
      %cst_66 = arith.constant 0.000000e+00 : f32
      %101 = vector.broadcast %cst_66 : f32 to vector<2x128xf32>
      %102 = arith.subf %101, %100 : vector<2x128xf32>
      %103 = math.exp %102 : vector<2x128xf32>
      %cst_67 = arith.constant 1.000000e+00 : f32
      %104 = vector.broadcast %cst_67 : f32 to vector<2x128xf32>
      %105 = arith.addf %104, %103 : vector<2x128xf32>
      %cst_68 = arith.constant 1.000000e+00 : f32
      %106 = vector.broadcast %cst_68 : f32 to vector<2x128xf32>
      %107 = arith.divf %106, %105 : vector<2x128xf32>
      %c0_69 = arith.constant 0 : index
      %108 = arith.index_cast %arg5 : i32 to index
      %c0_70 = arith.constant 0 : index
      %c0_71 = arith.constant 0 : index
      %109 = vector.load %arg4[%c0_69, %108, %c0_70, %c0_71] : memref<1x2x2x128xf32, #tpu.memory_space<vmem>>, vector<1x1x2x128xf32>
      %110 = vector.shape_cast %109 : vector<1x1x2x128xf32> to vector<2x128xf32>
      %111 = vector.shape_cast %107 : vector<2x128xf32> to vector<1x1x2x128xf32>
      tpu.vector_store %arg4[%c0_69, %108, %c0_70, %c0_71], %111 {strides = array<i32>} : memref<1x2x2x128xf32, #tpu.memory_space<vmem>>, vector<1x1x2x128xf32>,
    }
    %c2_i32_1 = arith.constant 2 : i32
    return
  }
  func.func @transform_0(%arg0: i32) -> (i32, i32, i32, i32) {
    %c0_i32 = arith.constant 0 : i32
    %c0_i32_0 = arith.constant 0 : i32
    %c0_i32_1 = arith.constant 0 : i32
    %c0_i32_2 = arith.constant 0 : i32
    return %arg0, %c0_i32, %c0_i32_0, %c0_i32_1 : i32, i32, i32, i32
  }
  func.func @transform_1(%arg0: i32) -> (i32, i32, i32) {
    %c0_i32 = arith.constant 0 : i32
    %c0_i32_0 = arith.constant 0 : i32
    %c0_i32_1 = arith.constant 0 : i32
    %c0_i32_2 = arith.constant 0 : i32
    return %c0_i32, %c0_i32_0, %c0_i32_1 : i32, i32, i32
  }
  func.func @transform_2(%arg0: i32) -> (i32, i32) {
    %c0_i32 = arith.constant 0 : i32
    %c0_i32_0 = arith.constant 0 : i32
    %c0_i32_1 = arith.constant 0 : i32
    return %c0_i32, %c0_i32_0 : i32, i32
  }
  func.func @transform_3(%arg0: i32) -> (i32, i32, i32, i32) {
    %c0_i32 = arith.constant 0 : i32
    %c0_i32_0 = arith.constant 0 : i32
    %c0_i32_1 = arith.constant 0 : i32
    %c0_i32_2 = arith.constant 0 : i32
    return %arg0, %c0_i32, %c0_i32_0, %c0_i32_1 : i32, i32, i32, i32
  }
}

</mosaic_0001>

<llo_original>
// kernel: patchgan_forward.5
$region0: #{patchgan_forward.5}
  #allocation0 [shape = 'u32[]', space=smem, size = 0x4, offset = 0x4, fixed_abs, tag = 'smem constant byte address 0x4 - core index']
  #allocation1 [shape = 'u32[72,128]{1,0:T(1,128)}', space=vmem, size = 0x9000, scoped, tag = 'internal scratch']
  %s0 = inlined_call_operand.vmem [shape: bf16[2,17,17,24], index: 0, kind: input, shape index: {}]
  %s1 = inlined_call_operand.vmem [shape: bf16[4,24,128], index: 1, kind: input, shape index: {}]
  %s2 = inlined_call_operand.vmem [shape: f32[1,128], index: 2, kind: input, shape index: {}]
  %s3 = inlined_call_operand.vmem [shape: f32[2,16,16,128], index: 3, kind: output, shape index: {}]
  %s4 = sld [smem:[#allocation0]]
  $region52: #{patchgan_forward.5} parent=0
    _
  %s6 = ssub.s32 1, %s4
  %s7 = scalar_select 0, %s6, %s4
  loop: start=0, step=1, limit=4
  $region2: #{patchgan_forward.5} parent=0 // loop_pre_header
    _
  $region3: #{patchgan_forward.5} parent=0 // loop_header
    %s9 = sphi 0, %s13
    %p10 = scmp.ge.s32.totalorder %s9, 4
    %s19 = sphi 0, %s21
    %s22 = sphi 0, %s19
    %s23 = sphi 0, %s22
    %s39 = sphi 0, %s23
    %s43 = sphi 0, %s43
    %s45 = sphi 0, %s43
    %s46 = sphi 0, %s45
    %s60 = sphi 0, %s46
    %s64 = sphi 0, %s64
    %s66 = sphi 0, %s64
    %s67 = sphi 0, %s66
    %s81 = sphi 0, %s67
    %s87 = sphi 0, %s89
    %s90 = sphi 0, %s87
    %s91 = sphi 0, %s90
    %s107 = sphi 0, %s91
  $region4: #{patchgan_forward.5} parent=0 // loop_header_branch
    %12 = sbr.rel (%p10) target = $region8
  $region5: #{patchgan_forward.5} parent=0 // loop_body
    %s14 = ssub.s32 %s9, 1
    %s15 = ssub.s32 %s9, 2
    %s16 = sadd.s32 %s9, 1
    %s17 = ssub.s32 %s9, %s16
    %p18 = scmp.eq.s32.totalorder %s17, 0
    %s20 = sadd.s32 %s19, 1
    %s21 = scalar_select %p18, %s19, %s20
    %p24 = pneg %p18
    %p25 = scmp.eq.s32.totalorder %s9, 1
    %p26 = por %p24, %p25
    %p27 = scmp.ne.s32.totalorder %s19, %s22
    %p28 = scmp.eq.s32.totalorder %s9, 0
    %p29 = por %p27, %p28
    %p30 = scmp.ne.s32.totalorder %s19, %s22
    %p31 = scmp.eq.s32.totalorder %s14, 1
    %p32 = por %p30, %p31
    %p33 = scmp.ne.s32.totalorder %s22, %s23
    %p34 = scmp.eq.s32.totalorder %s14, 0
    %p35 = por %p33, %p34
    %p36 = scmp.ne.s32.totalorder %s22, %s23
    %p37 = scmp.eq.s32.totalorder %s15, 1
    %p38 = por %p36, %p37
    %p40 = scmp.ne.s32.totalorder %s23, %s39
    %p41 = scmp.eq.s32.totalorder %s15, 0
    %p42 = por %p40, %p41
    %s44 = sadd.s32 %s43, 1
    %p47 = scmp.eq.s32.totalorder %s9, 1
    %p48 = scmp.ne.s32.totalorder %s43, %s45
    %p49 = scmp.eq.s32.totalorder %s9, 0
    %p50 = por %p48, %p49
    %p51 = scmp.ne.s32.totalorder %s43, %s45
    %p52 = scmp.eq.s32.totalorder %s14, 1
    %p53 = por %p51, %p52
    %p54 = scmp.ne.s32.totalorder %s45, %s46
    %p55 = scmp.eq.s32.totalorder %s14, 0
    %p56 = por %p54, %p55
    %p57 = scmp.ne.s32.totalorder %s45, %s46
    %p58 = scmp.eq.s32.totalorder %s15, 1
    %p59 = por %p57, %p58
    %p61 = scmp.ne.s32.totalorder %s46, %s60
    %p62 = scmp.eq.s32.totalorder %s15, 0
    %p63 = por %p61, %p62
    %s65 = sadd.s32 %s64, 1
    %p68 = scmp.eq.s32.totalorder %s9, 1
    %p69 = scmp.ne.s32.totalorder %s64, %s66
    %p70 = scmp.eq.s32.totalorder %s9, 0
    %p71 = por %p69, %p70
    %p72 = scmp.ne.s32.totalorder %s64, %s66
    %p73 = scmp.eq.s32.totalorder %s14, 1
    %p74 = por %p72, %p73
    %p75 = scmp.ne.s32.totalorder %s66, %s67
    %p76 = scmp.eq.s32.totalorder %s14, 0
    %p77 = por %p75, %p76
    %p78 = scmp.ne.s32.totalorder %s66, %s67
    %p79 = scmp.eq.s32.totalorder %s15, 1
    %p80 = por %p78, %p79
    %p82 = scmp.ne.s32.totalorder %s67, %s81
    %p83 = scmp.eq.s32.totalorder %s15, 0
    %p84 = por %p82, %p83
    %s85 = ssub.s32 %s9, %s16
    %p86 = scmp.eq.s32.totalorder %s85, 0
    %s88 = sadd.s32 %s87, 1
    %s89 = scalar_select %p86, %s87, %s88
    %p92 = pneg %p86
    %p93 = scmp.eq.s32.totalorder %s9, 1
    %p94 = por %p92, %p93
    %p95 = scmp.ne.s32.totalorder %s87, %s90
    %p96 = scmp.eq.s32.totalorder %s9, 0
    %p97 = por %p95, %p96
    %p98 = scmp.ne.s32.totalorder %s87, %s90
    %p99 = scmp.eq.s32.totalorder %s14, 1
    %p100 = por %p98, %p99
    %p101 = scmp.ne.s32.totalorder %s90, %s91
    %p102 = scmp.eq.s32.totalorder %s14, 0
    %p103 = por %p101, %p102
    %p104 = scmp.ne.s32.totalorder %s90, %s91
    %p105 = scmp.eq.s32.totalorder %s15, 1
    %p106 = por %p104, %p105
    %p108 = scmp.ne.s32.totalorder %s91, %s107
    %p109 = scmp.eq.s32.totalorder %s15, 0
    %p110 = por %p108, %p109
    %p111 = scmp.le.s32.totalorder 1, %s9
    %p112 = scmp.lt.s32.totalorder %s9, 3
    %p113 = pnand %p111, %p112
    %p114 = pneg %p113
    // Predicated region
    $region9: #{patchgan_forward.5} parent=5 // pred_check
      _
    $region10: #{patchgan_forward.5} parent=5 // pred_check_branch
      %116 = sbr.rel (%p113) target = $region12
    $region11: #{patchgan_forward.5} parent=5 // pred_region
      %s117 = ssub.s32 %s9, 1
      // Predicated region
      $region13: #{patchgan_forward.5} parent=11 // pred_check
        %p118 = pneg %p56
      $region14: #{patchgan_forward.5} parent=11 // pred_check_branch
        %120 = sbr.rel (%p118) target = $region16
      $region15: #{patchgan_forward.5} parent=11 // pred_region
        _
      $region16: #{patchgan_forward.5} parent=11 // pred_fallthru
        _
      // Predicated region
      $region17: #{patchgan_forward.5} parent=11 // pred_check
        %p121 = pneg %p77
      $region18: #{patchgan_forward.5} parent=11 // pred_check_branch
        %123 = sbr.rel (%p121) target = $region20
      $region19: #{patchgan_forward.5} parent=11 // pred_region
        _
      $region20: #{patchgan_forward.5} parent=11 // pred_fallthru
        _
    $region12: #{patchgan_forward.5} parent=5 // pred_fallthru
      _
    %p124 = scmp.lt.s32.totalorder %s9, 2
    // Predicated region
    $region21: #{patchgan_forward.5} parent=5 // pred_check
      %p125 = pneg %p124
    $region22: #{patchgan_forward.5} parent=5 // pred_check_branch
      %127 = sbr.rel (%p125) target = $region24
    $region23: #{patchgan_forward.5} parent=5 // pred_region
      // Predicated region
      $region25: #{patchgan_forward.5} parent=23 // pred_check
        %p128 = pneg %p29
      $region26: #{patchgan_forward.5} parent=23 // pred_check_branch
        %130 = sbr.rel (%p128) target = $region28
      $region27: #{patchgan_forward.5} parent=23 // pred_region
        %p131 = scmp.lt.s32.totalorder %s9, 1
        %s132 = scalar_select %p131, %s9, 1
        %s133 = smul.addr %s132, 51
        %s134 = smul.addr %s133, 4
        %s135 = scalar_lea.vmem %s0, %s134
      $region28: #{patchgan_forward.5} parent=23 // pred_fallthru
        _
    $region24: #{patchgan_forward.5} parent=5 // pred_fallthru
      _
    %p136 = scmp.le.s32.totalorder 1, %s9
    %p137 = scmp.lt.s32.totalorder %s9, 3
    %p138 = pnand %p136, %p137
    %p139 = pneg %p138
    // Predicated region
    $region29: #{patchgan_forward.5} parent=5 // pred_check
      _
    $region30: #{patchgan_forward.5} parent=5 // pred_check_branch
      %141 = sbr.rel (%p138) target = $region32
    $region31: #{patchgan_forward.5} parent=5 // pred_region
      %s142 = ssub.s32 %s9, 1
      %p143 = scmp.lt.s32.totalorder %s14, 1
      %s144 = scalar_select %p143, %s14, 1
      %s145 = smul.addr %s144, 51
      %s146 = smul.addr %s145, 4
      %s147 = scalar_lea.vmem %s0, %s146
      %p148 = pneg %p35
      %p149 = pneg %p32
      %p150 = pneg %p56
      %p151 = pneg %p53
      %p152 = pneg %p77
      %p153 = pneg %p74
      %p154 = pneg %p103
      %p155 = pneg %p100
      %p156 = scmp.lt.s32.totalorder %s14, 1
      %s157 = scalar_select %p156, %s14, 1
      %s158 = smul.addr %s157, 32
      %s159 = smul.addr %s158, 8
      %s160 = scalar_lea.vmem %s3, %s159
      %p161 = scmp.lt.s32.totalorder %s14, 1
      %s162 = scalar_select %p161, %s14, 1
      %s163 = smul.addr %s162, 51
      %s164 = smul.addr %s163, 4
      %s165 = scalar_lea.vmem %s0, %s164
      %p166 = scmp.lt.s32.totalorder %s14, 1
      %s167 = scalar_select %p166, %s14, 1
      %s168 = smul.addr %s167, 32
      %s169 = smul.addr %s168, 8
      %s170 = scalar_lea.vmem %s3, %s169
      %v172 = vld [vmem:[%s2] sm:$0x1]
      loop: start=0, step=1, limit=16
      $region33: #{patchgan_forward.5} parent=31 // loop_pre_header
        _
      $region34: #{patchgan_forward.5} parent=31 // loop_header
        %s174 = sphi 0, %s178
        %p175 = scmp.ge.s32.totalorder %s174, 16
      $region35: #{patchgan_forward.5} parent=31 // loop_header_branch
        %177 = sbr.rel (%p175) target = $region39
      $region36: #{patchgan_forward.5} parent=31 // loop_body
        %s179 = smul.u32 %s174, 3
        %s180 = smul.addr %s179, 4
        %s181 = scalar_lea.vmem %s165, %s180
        %v182 = vld [vmem:[%s181] sm:$0xf]
        %v183 = vld [vmem:[%s181 + $0x4] sm:$0xf]
        %v184 = vld [vmem:[%s181 + $0x8] sm:$0x1]
        %v185 = vld [vmem:[%s1] sm:$0xf]
        %v186 = vld [vmem:[%s1 + $0x4] sm:$0xf]
        %v187 = vld [vmem:[%s1 + $0x8] sm:$0xf]
        %s188 = scalar_lea.vmem %s1, 12
        %v189 = vld [vmem:[%s188] sm:$0xf]
        %v190 = vld [vmem:[%s188 + $0x4] sm:$0xf]
        %v191 = vld [vmem:[%s188 + $0x8] sm:$0xf]
        %v195 = vunpack.c.l.b16 %v182
        %v196 = vunpack.c.l.b16 %v183
        %v197 = vunpack.c.l.b16 %v184
        %v198 = vpack.c.b16 %v196, %v195
        %v199 = vpack.c.b16 %v197, %v197
        %vm200 = vsmask.f32 7424
        %v202 = vshrl.u32 %v198, 16
        %v204 = vshll.u32 %v198, 16
        %v206 = vrot.slane %v204, 1
        %v207 = vor.u32 %v202, %v206
        %v209 = vshll.u32 %v199, 16
        %v211 = vrot.slane %v209, 1
        %v212 = vsel %vm200, %v207, %v211
        %v216 = vunpack.c.l.b16 %v189
        %v217 = vunpack.c.l.b16 %v190
        %v218 = vunpack.c.l.b16 %v191
        %v219 = vpack.c.b16 %v217, %v216
        %v220 = vpack.c.b16 %v218, %v218
        %vm222 = vcmask 195584
        %v224 = vsel %vm222, %v212, 0
        %vm226 = vcmask 1043456
        %v228 = vsel %vm226, %v220, 0
        %230 = vmatpush.bf16.msra.mxu0 0
        %231 = vmatpush.bf16.msra.mxu0 0
        %232 = vmatpush.bf16.msra.mxu0 0
        %233 = vmatpush.bf16.msra.mxu0 0
        %234 = vmatpush.bf16.msra.mxu0 0
        %235 = vmatpush.bf16.msra.mxu0 0
        %236 = vmatpush.bf16.msra.mxu0 %v228
        %237 = vmatpush.bf16.msra.mxu0 %v219
        %238 = vmatmul.bf16.gmra.mxu0 %v224
        %v239 = vpop.f32.mrf.mxu0
        %v240 = vadd.f32 0.0, %v239
        %v241 = vpop.f32.mrf.mxu0
        %v242 = vadd.f32 0.0, %v241
        %243 = vdwg.mxu0
        %v247 = vunpack.c.l.b16 %v185
        %v248 = vunpack.c.l.b16 %v186
        %v249 = vunpack.c.l.b16 %v187
        %v250 = vpack.c.b16 %v248, %v247
        %v251 = vpack.c.b16 %v249, %v249
        %v253 = vsel %vm222, %v198, 0
        %v256 = vsel %vm226, %v251, 0
        %258 = vmatpush.bf16.msra.mxu0 0
        %259 = vmatpush.bf16.msra.mxu0 0
        %260 = vmatpush.bf16.msra.mxu0 0
        %261 = vmatpush.bf16.msra.mxu0 0
        %262 = vmatpush.bf16.msra.mxu0 0
        %263 = vmatpush.bf16.msra.mxu0 0
        %264 = vmatpush.bf16.msra.mxu0 %v256
        %265 = vmatpush.bf16.msra.mxu0 %v250
        %266 = vmatmul.bf16.gmra.mxu0 %v253
        %v267 = vpop.f32.mrf.mxu0
        %v268 = vadd.f32 %v240, %v267
        %v269 = vpop.f32.mrf.mxu0
        %v270 = vadd.f32 %v242, %v269
        %271 = vdwg.mxu0
        %s272 = sadd.s32 %s174, 1
        %s273 = smul.u32 %s272, 3
        %s274 = smul.addr %s273, 4
        %s275 = scalar_lea.vmem %s165, %s274
        %v276 = vld [vmem:[%s275] sm:$0xf]
        %v277 = vld [vmem:[%s275 + $0x4] sm:$0xf]
        %v278 = vld [vmem:[%s275 + $0x8] sm:$0x1]
        %s279 = scalar_lea.vmem %s1, 24
        %v280 = vld [vmem:[%s279] sm:$0xf]
        %v281 = vld [vmem:[%s279 + $0x4] sm:$0xf]
        %v282 = vld [vmem:[%s279 + $0x8] sm:$0xf]
        %v285 = vunpack.c.l.b16 %v276
        %v286 = vunpack.c.l.b16 %v277
        %v287 = vpack.c.b16 %v286, %v285
        %v291 = vunpack.c.l.b16 %v280
        %v292 = vunpack.c.l.b16 %v281
        %v293 = vunpack.c.l.b16 %v282
        %v294 = vpack.c.b16 %v292, %v291
        %v295 = vpack.c.b16 %v293, %v293
        %v298 = vsel %vm222, %v287, 0
        %v301 = vsel %vm226, %v295, 0
        %303 = vmatpush.bf16.msra.mxu0 0
        %304 = vmatpush.bf16.msra.mxu0 0
        %305 = vmatpush.bf16.msra.mxu0 0
        %306 = vmatpush.bf16.msra.mxu0 0
        %307 = vmatpush.bf16.msra.mxu0 0
        %308 = vmatpush.bf16.msra.mxu0 0
        %309 = vmatpush.bf16.msra.mxu0 %v301
        %310 = vmatpush.bf16.msra.mxu0 %v294
        %311 = vmatmul.bf16.gmra.mxu0 %v298
        %v312 = vpop.f32.mrf.mxu0
        %v313 = vadd.f32 0.0, %v312
        %v314 = vpop.f32.mrf.mxu0
        %v315 = vadd.f32 0.0, %v314
        %316 = vdwg.mxu0
        %v317 = vadd.f32 %v268, %v313
        %v318 = vadd.f32 %v270, %v315
        %s319 = scalar_lea.vmem %s1, 36
        %v320 = vld [vmem:[%s319] sm:$0xf]
        %v321 = vld [vmem:[%s319 + $0x4] sm:$0xf]
        %v322 = vld [vmem:[%s319 + $0x8] sm:$0xf]
        %v324 = vunpack.c.l.b16 %v278
        %v325 = vpack.c.b16 %v324, %v324
        %v326 = vshrl.u32 %v287, 16
        %v328 = vshll.u32 %v287, 16
        %v330 = vrot.slane %v328, 1
        %v331 = vor.u32 %v326, %v330
        %v333 = vshll.u32 %v325, 16
        %v335 = vrot.slane %v333, 1
        %v336 = vsel %vm200, %v331, %v335
        %v340 = vunpack.c.l.b16 %v320
        %v341 = vunpack.c.l.b16 %v321
        %v342 = vunpack.c.l.b16 %v322
        %v343 = vpack.c.b16 %v341, %v340
        %v344 = vpack.c.b16 %v342, %v342
        %v347 = vsel %vm222, %v336, 0
        %v350 = vsel %vm226, %v344, 0
        %352 = vmatpush.bf16.msra.mxu0 0
        %353 = vmatpush.bf16.msra.mxu0 0
        %354 = vmatpush.bf16.msra.mxu0 0
        %355 = vmatpush.bf16.msra.mxu0 0
        %356 = vmatpush.bf16.msra.mxu0 0
        %357 = vmatpush.bf16.msra.mxu0 0
        %358 = vmatpush.bf16.msra.mxu0 %v350
        %359 = vmatpush.bf16.msra.mxu0 %v343
        %360 = vmatmul.bf16.gmra.mxu0 %v347
        %v361 = vpop.f32.mrf.mxu0
        %v362 = vadd.f32 0.0, %v361
        %v363 = vpop.f32.mrf.mxu0
        %v364 = vadd.f32 0.0, %v363
        %365 = vdwg.mxu0
        %v366 = vadd.f32 %v317, %v362
        %v367 = vadd.f32 %v318, %v364
        %v369 = vperm.slane %v172, 0
        %v371 = vadd.f32 %v366, %v369
        %v372 = vadd.f32 %v367, %v369
        %vm373 = vcmp.ge.f32.partialorder %v371, 0.0
        %vm374 = vcmp.ge.f32.partialorder %v372, 0.0
        %v375 = vmul.f32 %v371, 0.2
        %v376 = vmul.f32 %v372, 0.2
        %v377 = vsel %vm373, %v371, %v375
        %v378 = vsel %vm374, %v372, %v376
        %s379 = smul.u32 %s174, 16
        %s380 = scalar_lea.vmem %s170, %s379
        %381 = vst [vmem:[%s380] sm:$0xff] %v377
        %382 = vst [vmem:[%s380 + $0x8] sm:$0xff] %v378
      $region37: #{patchgan_forward.5} parent=31 // loop_footer
        %s178 = sadd.s32 1, %s174
      $region38: #{patchgan_forward.5} parent=31 // loop_footer_branch
        %173 = sbr.rel target = $region34
      $region39: #{patchgan_forward.5} parent=31 // loop_exit
        _
      %p383 = scmp.lt.s32.totalorder %s14, 1
      %s384 = scalar_select %p383, %s14, 1
      %s385 = smul.addr %s384, 32
      %s386 = smul.addr %s385, 8
      %s387 = scalar_lea.vmem %s3, %s386
      // Predicated region
      $region40: #{patchgan_forward.5} parent=31 // pred_check
        %p388 = pneg %p100
      $region41: #{patchgan_forward.5} parent=31 // pred_check_branch
        %390 = sbr.rel (%p388) target = $region43
      $region42: #{patchgan_forward.5} parent=31 // pred_region
        _
      $region43: #{patchgan_forward.5} parent=31 // pred_fallthru
        _
    $region32: #{patchgan_forward.5} parent=5 // pred_fallthru
      _
    %p391 = scmp.le.s32.totalorder 2, %s9
    // Predicated region
    $region44: #{patchgan_forward.5} parent=5 // pred_check
      %p392 = pneg %p391
    $region45: #{patchgan_forward.5} parent=5 // pred_check_branch
      %394 = sbr.rel (%p392) target = $region47
    $region46: #{patchgan_forward.5} parent=5 // pred_region
      %s395 = ssub.s32 %s9, 2
      // Predicated region
      $region48: #{patchgan_forward.5} parent=46 // pred_check
        %p396 = pneg %p106
      $region49: #{patchgan_forward.5} parent=46 // pred_check_branch
        %398 = sbr.rel (%p396) target = $region51
      $region50: #{patchgan_forward.5} parent=46 // pred_region
        %p399 = scmp.lt.s32.totalorder %s15, 1
        %s400 = scalar_select %p399, %s15, 1
        %s401 = smul.addr %s400, 32
        %s402 = smul.addr %s401, 8
        %s403 = scalar_lea.vmem %s3, %s402
      $region51: #{patchgan_forward.5} parent=46 // pred_fallthru
        _
    $region47: #{patchgan_forward.5} parent=5 // pred_fallthru
      _
  $region6: #{patchgan_forward.5} parent=0 // loop_footer
    %s13 = sadd.s32 1, %s9
  $region7: #{patchgan_forward.5} parent=0 // loop_footer_branch
    %8 = sbr.rel target = $region3
  $region8: #{patchgan_forward.5} parent=0 // loop_exit
    _

// kernel: patchgan_forward.6
$region0: #{patchgan_forward.6}
  #allocation0 [shape = 'u32[]', space=smem, size = 0x4, offset = 0x4, fixed_abs, tag = 'smem constant byte address 0x4 - core index']
  #allocation1 [shape = 'u32[72,128]{1,0:T(1,128)}', space=vmem, size = 0x9000, scoped, tag = 'internal scratch']
  %s0 = inlined_call_operand.vmem [shape: bf16[2,9,9,32], index: 0, kind: input, shape index: {}]
  %s1 = inlined_call_operand.vmem [shape: bf16[4,32,128], index: 1, kind: input, shape index: {}]
  %s2 = inlined_call_operand.vmem [shape: f32[1,128], index: 2, kind: input, shape index: {}]
  %s3 = inlined_call_operand.vmem [shape: f32[2,8,8,128], index: 3, kind: output, shape index: {0}]
  %s4 = inlined_call_operand.vmem [shape: f32[2,1,128], index: 4, kind: output, shape index: {1}]
  %s5 = inlined_call_operand.vmem [shape: f32[2,1,128], index: 5, kind: output, shape index: {2}]
  %6 = xla_tuple %s3, %s4, %s5
  %s7 = sld [smem:[#allocation0]]
  $region68: #{patchgan_forward.6} parent=0
    _
  %s9 = ssub.s32 1, %s7
  %s10 = scalar_select 0, %s9, %s7
  loop: start=0, step=1, limit=4
  $region2: #{patchgan_forward.6} parent=0 // loop_pre_header
    _
  $region3: #{patchgan_forward.6} parent=0 // loop_header
    %s12 = sphi 0, %s16
    %p13 = scmp.ge.s32.totalorder %s12, 4
    %s22 = sphi 0, %s24
    %s25 = sphi 0, %s22
    %s26 = sphi 0, %s25
    %s42 = sphi 0, %s26
    %s46 = sphi 0, %s46
    %s48 = sphi 0, %s46
    %s49 = sphi 0, %s48
    %s63 = sphi 0, %s49
    %s67 = sphi 0, %s67
    %s69 = sphi 0, %s67
    %s70 = sphi 0, %s69
    %s84 = sphi 0, %s70
    %s90 = sphi 0, %s92
    %s93 = sphi 0, %s90
    %s94 = sphi 0, %s93
    %s110 = sphi 0, %s94
    %s116 = sphi 0, %s118
    %s119 = sphi 0, %s116
    %s120 = sphi 0, %s119
    %s136 = sphi 0, %s120
    %s142 = sphi 0, %s144
    %s145 = sphi 0, %s142
    %s146 = sphi 0, %s145
    %s162 = sphi 0, %s146
  $region4: #{patchgan_forward.6} parent=0 // loop_header_branch
    %15 = sbr.rel (%p13) target = $region8
  $region5: #{patchgan_forward.6} parent=0 // loop_body
    %s17 = ssub.s32 %s12, 1
    %s18 = ssub.s32 %s12, 2
    %s19 = sadd.s32 %s12, 1
    %s20 = ssub.s32 %s12, %s19
    %p21 = scmp.eq.s32.totalorder %s20, 0
    %s23 = sadd.s32 %s22, 1
    %s24 = scalar_select %p21, %s22, %s23
    %p27 = pneg %p21
    %p28 = scmp.eq.s32.totalorder %s12, 1
    %p29 = por %p27, %p28
    %p30 = scmp.ne.s32.totalorder %s22, %s25
    %p31 = scmp.eq.s32.totalorder %s12, 0
    %p32 = por %p30, %p31
    %p33 = scmp.ne.s32.totalorder %s22, %s25
    %p34 = scmp.eq.s32.totalorder %s17, 1
    %p35 = por %p33, %p34
    %p36 = scmp.ne.s32.totalorder %s25, %s26
    %p37 = scmp.eq.s32.totalorder %s17, 0
    %p38 = por %p36, %p37
    %p39 = scmp.ne.s32.totalorder %s25, %s26
    %p40 = scmp.eq.s32.totalorder %s18, 1
    %p41 = por %p39, %p40
    %p43 = scmp.ne.s32.totalorder %s26, %s42
    %p44 = scmp.eq.s32.totalorder %s18, 0
    %p45 = por %p43, %p44
    %s47 = sadd.s32 %s46, 1
    %p50 = scmp.eq.s32.totalorder %s12, 1
    %p51 = scmp.ne.s32.totalorder %s46, %s48
    %p52 = scmp.eq.s32.totalorder %s12, 0
    %p53 = por %p51, %p52
    %p54 = scmp.ne.s32.totalorder %s46, %s48
    %p55 = scmp.eq.s32.totalorder %s17, 1
    %p56 = por %p54, %p55
    %p57 = scmp.ne.s32.totalorder %s48, %s49
    %p58 = scmp.eq.s32.totalorder %s17, 0
    %p59 = por %p57, %p58
    %p60 = scmp.ne.s32.totalorder %s48, %s49
    %p61 = scmp.eq.s32.totalorder %s18, 1
    %p62 = por %p60, %p61
    %p64 = scmp.ne.s32.totalorder %s49, %s63
    %p65 = scmp.eq.s32.totalorder %s18, 0
    %p66 = por %p64, %p65
    %s68 = sadd.s32 %s67, 1
    %p71 = scmp.eq.s32.totalorder %s12, 1
    %p72 = scmp.ne.s32.totalorder %s67, %s69
    %p73 = scmp.eq.s32.totalorder %s12, 0
    %p74 = por %p72, %p73
    %p75 = scmp.ne.s32.totalorder %s67, %s69
    %p76 = scmp.eq.s32.totalorder %s17, 1
    %p77 = por %p75, %p76
    %p78 = scmp.ne.s32.totalorder %s69, %s70
    %p79 = scmp.eq.s32.totalorder %s17, 0
    %p80 = por %p78, %p79
    %p81 = scmp.ne.s32.totalorder %s69, %s70
    %p82 = scmp.eq.s32.totalorder %s18, 1
    %p83 = por %p81, %p82
    %p85 = scmp.ne.s32.totalorder %s70, %s84
    %p86 = scmp.eq.s32.totalorder %s18, 0
    %p87 = por %p85, %p86
    %s88 = ssub.s32 %s12, %s19
    %p89 = scmp.eq.s32.totalorder %s88, 0
    %s91 = sadd.s32 %s90, 1
    %s92 = scalar_select %p89, %s90, %s91
    %p95 = pneg %p89
    %p96 = scmp.eq.s32.totalorder %s12, 1
    %p97 = por %p95, %p96
    %p98 = scmp.ne.s32.totalorder %s90, %s93
    %p99 = scmp.eq.s32.totalorder %s12, 0
    %p100 = por %p98, %p99
    %p101 = scmp.ne.s32.totalorder %s90, %s93
    %p102 = scmp.eq.s32.totalorder %s17, 1
    %p103 = por %p101, %p102
    %p104 = scmp.ne.s32.totalorder %s93, %s94
    %p105 = scmp.eq.s32.totalorder %s17, 0
    %p106 = por %p104, %p105
    %p107 = scmp.ne.s32.totalorder %s93, %s94
    %p108 = scmp.eq.s32.totalorder %s18, 1
    %p109 = por %p107, %p108
    %p111 = scmp.ne.s32.totalorder %s94, %s110
    %p112 = scmp.eq.s32.totalorder %s18, 0
    %p113 = por %p111, %p112
    %s114 = ssub.s32 %s12, %s19
    %p115 = scmp.eq.s32.totalorder %s114, 0
    %s117 = sadd.s32 %s116, 1
    %s118 = scalar_select %p115, %s116, %s117
    %p121 = pneg %p115
    %p122 = scmp.eq.s32.totalorder %s12, 1
    %p123 = por %p121, %p122
    %p124 = scmp.ne.s32.totalorder %s116, %s119
    %p125 = scmp.eq.s32.totalorder %s12, 0
    %p126 = por %p124, %p125
    %p127 = scmp.ne.s32.totalorder %s116, %s119
    %p128 = scmp.eq.s32.totalorder %s17, 1
    %p129 = por %p127, %p128
    %p130 = scmp.ne.s32.totalorder %s119, %s120
    %p131 = scmp.eq.s32.totalorder %s17, 0
    %p132 = por %p130, %p131
    %p133 = scmp.ne.s32.totalorder %s119, %s120
    %p134 = scmp.eq.s32.totalorder %s18, 1
    %p135 = por %p133, %p134
    %p137 = scmp.ne.s32.totalorder %s120, %s136
    %p138 = scmp.eq.s32.totalorder %s18, 0
    %p139 = por %p137, %p138
    %s140 = ssub.s32 %s12, %s19
    %p141 = scmp.eq.s32.totalorder %s140, 0
    %s143 = sadd.s32 %s142, 1
    %s144 = scalar_select %p141, %s142, %s143
    %p147 = pneg %p141
    %p148 = scmp.eq.s32.totalorder %s12, 1
    %p149 = por %p147, %p148
    %p150 = scmp.ne.s32.totalorder %s142, %s145
    %p151 = scmp.eq.s32.totalorder %s12, 0
    %p152 = por %p150, %p151
    %p153 = scmp.ne.s32.totalorder %s142, %s145
    %p154 = scmp.eq.s32.totalorder %s17, 1
    %p155 = por %p153, %p154
    %p156 = scmp.ne.s32.totalorder %s145, %s146
    %p157 = scmp.eq.s32.totalorder %s17, 0
    %p158 = por %p156, %p157
    %p159 = scmp.ne.s32.totalorder %s145, %s146
    %p160 = scmp.eq.s32.totalorder %s18, 1
    %p161 = por %p159, %p160
    %p163 = scmp.ne.s32.totalorder %s146, %s162
    %p164 = scmp.eq.s32.totalorder %s18, 0
    %p165 = por %p163, %p164
    %p166 = scmp.le.s32.totalorder 1, %s12
    %p167 = scmp.lt.s32.totalorder %s12, 3
    %p168 = pnand %p166, %p167
    %p169 = pneg %p168
    // Predicated region
    $region9: #{patchgan_forward.6} parent=5 // pred_check
      _
    $region10: #{patchgan_forward.6} parent=5 // pred_check_branch
      %171 = sbr.rel (%p168) target = $region12
    $region11: #{patchgan_forward.6} parent=5 // pred_region
      %s172 = ssub.s32 %s12, 1
      // Predicated region
      $region13: #{patchgan_forward.6} parent=11 // pred_check
        %p173 = pneg %p59
      $region14: #{patchgan_forward.6} parent=11 // pred_check_branch
        %175 = sbr.rel (%p173) target = $region16
      $region15: #{patchgan_forward.6} parent=11 // pred_region
        _
      $region16: #{patchgan_forward.6} parent=11 // pred_fallthru
        _
      // Predicated region
      $region17: #{patchgan_forward.6} parent=11 // pred_check
        %p176 = pneg %p80
      $region18: #{patchgan_forward.6} parent=11 // pred_check_branch
        %178 = sbr.rel (%p176) target = $region20
      $region19: #{patchgan_forward.6} parent=11 // pred_region
        _
      $region20: #{patchgan_forward.6} parent=11 // pred_fallthru
        _
    $region12: #{patchgan_forward.6} parent=5 // pred_fallthru
      _
    %p179 = scmp.lt.s32.totalorder %s12, 2
    // Predicated region
    $region21: #{patchgan_forward.6} parent=5 // pred_check
      %p180 = pneg %p179
    $region22: #{patchgan_forward.6} parent=5 // pred_check_branch
      %182 = sbr.rel (%p180) target = $region24
    $region23: #{patchgan_forward.6} parent=5 // pred_region
      // Predicated region
      $region25: #{patchgan_forward.6} parent=23 // pred_check
        %p183 = pneg %p32
      $region26: #{patchgan_forward.6} parent=23 // pred_check_branch
        %185 = sbr.rel (%p183) target = $region28
      $region27: #{patchgan_forward.6} parent=23 // pred_region
        %p186 = scmp.lt.s32.totalorder %s12, 1
        %s187 = scalar_select %p186, %s12, 1
        %s188 = smul.addr %s187, 18
        %s189 = smul.addr %s188, 4
        %s190 = scalar_lea.vmem %s0, %s189
      $region28: #{patchgan_forward.6} parent=23 // pred_fallthru
        _
    $region24: #{patchgan_forward.6} parent=5 // pred_fallthru
      _
    %p191 = scmp.le.s32.totalorder 1, %s12
    %p192 = scmp.lt.s32.totalorder %s12, 3
    %p193 = pnand %p191, %p192
    %p194 = pneg %p193
    // Predicated region
    $region29: #{patchgan_forward.6} parent=5 // pred_check
      _
    $region30: #{patchgan_forward.6} parent=5 // pred_check_branch
      %196 = sbr.rel (%p193) target = $region32
    $region31: #{patchgan_forward.6} parent=5 // pred_region
      %s197 = ssub.s32 %s12, 1
      %p198 = scmp.lt.s32.totalorder %s17, 1
      %s199 = scalar_select %p198, %s17, 1
      %s200 = smul.addr %s199, 18
      %s201 = smul.addr %s200, 4
      %s202 = scalar_lea.vmem %s0, %s201
      %p203 = pneg %p38
      %p204 = pneg %p35
      %p205 = pneg %p59
      %p206 = pneg %p56
      %p207 = pneg %p80
      %p208 = pneg %p77
      %p209 = pneg %p106
      %p210 = pneg %p103
      %p211 = scmp.lt.s32.totalorder %s17, 1
      %s212 = scalar_select %p211, %s17, 1
      %s213 = smul.addr %s212, 8
      %s214 = smul.addr %s213, 8
      %s215 = scalar_lea.vmem %s3, %s214
      %p216 = pneg %p132
      %p217 = pneg %p129
      %p218 = scmp.lt.s32.totalorder %s17, 1
      %s219 = scalar_select %p218, %s17, 1
      %s220 = scalar_lea.vmem %s4, %s219
      %p221 = pneg %p158
      %p222 = pneg %p155
      %p223 = scmp.lt.s32.totalorder %s17, 1
      %s224 = scalar_select %p223, %s17, 1
      %s225 = scalar_lea.vmem %s5, %s224
      %p226 = scmp.lt.s32.totalorder %s17, 1
      %s227 = scalar_select %p226, %s17, 1
      %s228 = smul.addr %s227, 18
      %s229 = smul.addr %s228, 4
      %s230 = scalar_lea.vmem %s0, %s229
      %p231 = scmp.lt.s32.totalorder %s17, 1
      %s232 = scalar_select %p231, %s17, 1
      %s233 = smul.addr %s232, 8
      %s234 = smul.addr %s233, 8
      %s235 = scalar_lea.vmem %s3, %s234
      %p236 = scmp.lt.s32.totalorder %s17, 1
      %s237 = scalar_select %p236, %s17, 1
      %s238 = scalar_lea.vmem %s4, %s237
      %p239 = scmp.lt.s32.totalorder %s17, 1
      %s240 = scalar_select %p239, %s17, 1
      %s241 = scalar_lea.vmem %s5, %s240
      %v243 = vld [vmem:[%s2] sm:$0x1]
      loop: start=0, step=1, limit=8
      $region33: #{patchgan_forward.6} parent=31 // loop_pre_header
        _
      $region34: #{patchgan_forward.6} parent=31 // loop_header
        %s245 = sphi 0, %s249
        %p246 = scmp.ge.s32.totalorder %s245, 8
        %v250 = vphi 0.0, %v434
        %v251 = vphi 0.0, %v442
      $region35: #{patchgan_forward.6} parent=31 // loop_header_branch
        %248 = sbr.rel (%p246) target = $region39
      $region36: #{patchgan_forward.6} parent=31 // loop_body
        %s252 = smul.u32 %s245, 2
        %s253 = smul.addr %s252, 4
        %s254 = scalar_lea.vmem %s230, %s253
        %v255 = vld [vmem:[%s254] sm:$0xf]
        %v256 = vld [vmem:[%s254 + $0x4] sm:$0x1]
        %v257 = vld [vmem:[%s1] sm:$0xf]
        %v258 = vld [vmem:[%s1 + $0x4] sm:$0xf]
        %v259 = vld [vmem:[%s1 + $0x8] sm:$0xf]
        %v260 = vld [vmem:[%s1 + $0xc] sm:$0xf]
        %s261 = scalar_lea.vmem %s1, 16
        %v262 = vld [vmem:[%s261] sm:$0xf]
        %v263 = vld [vmem:[%s261 + $0x4] sm:$0xf]
        %v264 = vld [vmem:[%s261 + $0x8] sm:$0xf]
        %v265 = vld [vmem:[%s261 + $0xc] sm:$0xf]
        %v268 = vunpack.c.l.b16 %v255
        %v269 = vunpack.c.l.b16 %v256
        %v270 = vpack.c.b16 %v269, %v268
        %v272 = vshrl.u32 %v270, 16
        %v274 = vshll.u32 %v270, 16
        %v276 = vrot.slane %v274, 1
        %v277 = vor.u32 %v272, %v276
        %v282 = vunpack.c.l.b16 %v262
        %v283 = vunpack.c.l.b16 %v263
        %v284 = vunpack.c.l.b16 %v264
        %v285 = vunpack.c.l.b16 %v265
        %v286 = vpack.c.b16 %v283, %v282
        %v287 = vpack.c.b16 %v285, %v284
        %vm290 = vcmask 261120
        %v292 = vsel %vm290, %v277, 0
        %294 = vmatpush.bf16.msra.mxu0 0
        %295 = vmatpush.bf16.msra.mxu0 0
        %296 = vmatpush.bf16.msra.mxu0 0
        %297 = vmatpush.bf16.msra.mxu0 0
        %298 = vmatpush.bf16.msra.mxu0 0
        %299 = vmatpush.bf16.msra.mxu0 0
        %300 = vmatpush.bf16.msra.mxu0 %v287
        %301 = vmatpush.bf16.msra.mxu0 %v286
        %302 = vmatmul.bf16.gmra.mxu0 %v292
        %v303 = vpop.f32.mrf.mxu0
        %v304 = vadd.f32 0.0, %v303
        %v305 = vpop.f32.mrf.mxu0
        %306 = vdwg.mxu0
        %v311 = vunpack.c.l.b16 %v257
        %v312 = vunpack.c.l.b16 %v258
        %v313 = vunpack.c.l.b16 %v259
        %v314 = vunpack.c.l.b16 %v260
        %v315 = vpack.c.b16 %v312, %v311
        %v316 = vpack.c.b16 %v314, %v313
        %v320 = vsel %vm290, %v255, 0
        %322 = vmatpush.bf16.msra.mxu0 0
        %323 = vmatpush.bf16.msra.mxu0 0
        %324 = vmatpush.bf16.msra.mxu0 0
        %325 = vmatpush.bf16.msra.mxu0 0
        %326 = vmatpush.bf16.msra.mxu0 0
        %327 = vmatpush.bf16.msra.mxu0 0
        %328 = vmatpush.bf16.msra.mxu0 %v316
        %329 = vmatpush.bf16.msra.mxu0 %v315
        %330 = vmatmul.bf16.gmra.mxu0 %v320
        %v331 = vpop.f32.mrf.mxu0
        %v332 = vadd.f32 %v304, %v331
        %v333 = vpop.f32.mrf.mxu0
        %334 = vdwg.mxu0
        %s335 = sadd.s32 %s245, 1
        %s336 = smul.u32 %s335, 2
        %s337 = smul.addr %s336, 4
        %s338 = scalar_lea.vmem %s230, %s337
        %v339 = vld [vmem:[%s338] sm:$0xf]
        %v340 = vld [vmem:[%s338 + $0x4] sm:$0x1]
        %s341 = scalar_lea.vmem %s1, 32
        %v342 = vld [vmem:[%s341] sm:$0xf]
        %v343 = vld [vmem:[%s341 + $0x4] sm:$0xf]
        %v344 = vld [vmem:[%s341 + $0x8] sm:$0xf]
        %v345 = vld [vmem:[%s341 + $0xc] sm:$0xf]
        %v350 = vunpack.c.l.b16 %v342
        %v351 = vunpack.c.l.b16 %v343
        %v352 = vunpack.c.l.b16 %v344
        %v353 = vunpack.c.l.b16 %v345
        %v354 = vpack.c.b16 %v351, %v350
        %v355 = vpack.c.b16 %v353, %v352
        %v359 = vsel %vm290, %v339, 0
        %361 = vmatpush.bf16.msra.mxu0 0
        %362 = vmatpush.bf16.msra.mxu0 0
        %363 = vmatpush.bf16.msra.mxu0 0
        %364 = vmatpush.bf16.msra.mxu0 0
        %365 = vmatpush.bf16.msra.mxu0 0
        %366 = vmatpush.bf16.msra.mxu0 0
        %367 = vmatpush.bf16.msra.mxu0 %v355
        %368 = vmatpush.bf16.msra.mxu0 %v354
        %369 = vmatmul.bf16.gmra.mxu0 %v359
        %v370 = vpop.f32.mrf.mxu0
        %v371 = vadd.f32 0.0, %v370
        %v372 = vpop.f32.mrf.mxu0
        %373 = vdwg.mxu0
        %v374 = vadd.f32 %v332, %v371
        %s375 = scalar_lea.vmem %s1, 48
        %v376 = vld [vmem:[%s375] sm:$0xf]
        %v377 = vld [vmem:[%s375 + $0x4] sm:$0xf]
        %v378 = vld [vmem:[%s375 + $0x8] sm:$0xf]
        %v379 = vld [vmem:[%s375 + $0xc] sm:$0xf]
        %v382 = vunpack.c.l.b16 %v339
        %v383 = vunpack.c.l.b16 %v340
        %v384 = vpack.c.b16 %v383, %v382
        %v386 = vshrl.u32 %v384, 16
        %v388 = vshll.u32 %v384, 16
        %v390 = vrot.slane %v388, 1
        %v391 = vor.u32 %v386, %v390
        %v396 = vunpack.c.l.b16 %v376
        %v397 = vunpack.c.l.b16 %v377
        %v398 = vunpack.c.l.b16 %v378
        %v399 = vunpack.c.l.b16 %v379
        %v400 = vpack.c.b16 %v397, %v396
        %v401 = vpack.c.b16 %v399, %v398
        %v405 = vsel %vm290, %v391, 0
        %407 = vmatpush.bf16.msra.mxu0 0
        %408 = vmatpush.bf16.msra.mxu0 0
        %409 = vmatpush.bf16.msra.mxu0 0
        %410 = vmatpush.bf16.msra.mxu0 0
        %411 = vmatpush.bf16.msra.mxu0 0
        %412 = vmatpush.bf16.msra.mxu0 0
        %413 = vmatpush.bf16.msra.mxu0 %v401
        %414 = vmatpush.bf16.msra.mxu0 %v400
        %415 = vmatmul.bf16.gmra.mxu0 %v405
        %v416 = vpop.f32.mrf.mxu0
        %v417 = vadd.f32 0.0, %v416
        %v418 = vpop.f32.mrf.mxu0
        %419 = vdwg.mxu0
        %v420 = vadd.f32 %v374, %v417
        %v422 = vperm.slane %v243, 0
        %v424 = vadd.f32 %v420, %v422
        %s425 = smul.u32 %s245, 8
        %s426 = scalar_lea.vmem %s235, %s425
        %427 = vst [vmem:[%s426] sm:$0xff] %v424
        %v428 = vrot.slane %v424, 4
        %v429 = vadd.f32 %v424, %v428
        %v430 = vrot.slane %v429, 2
        %v431 = vadd.f32 %v429, %v430
        %v432 = vrot.slane %v431, 1
        %v433 = vadd.f32 %v431, %v432
        %v434 = vadd.f32 %v250, %v433
        %v435 = vmul.f32 %v424, %v424
        %v436 = vrot.slane %v435, 4
        %v437 = vadd.f32 %v435, %v436
        %v438 = vrot.slane %v437, 2
        %v439 = vadd.f32 %v437, %v438
        %v440 = vrot.slane %v439, 1
        %v441 = vadd.f32 %v439, %v440
        %v442 = vadd.f32 %v251, %v441
      $region37: #{patchgan_forward.6} parent=31 // loop_footer
        %s249 = sadd.s32 1, %s245
      $region38: #{patchgan_forward.6} parent=31 // loop_footer_branch
        %244 = sbr.rel target = $region34
      $region39: #{patchgan_forward.6} parent=31 // loop_exit
        _
      %443 = vst [vmem:[%s238] sm:$0x1] %v250
      %444 = vst [vmem:[%s241] sm:$0x1] %v251
      %p445 = scmp.lt.s32.totalorder %s17, 1
      %s446 = scalar_select %p445, %s17, 1
      %s447 = smul.addr %s446, 8
      %s448 = smul.addr %s447, 8
      %s449 = scalar_lea.vmem %s3, %s448
      %p450 = scmp.lt.s32.totalorder %s17, 1
      %s451 = scalar_select %p450, %s17, 1
      %s452 = scalar_lea.vmem %s4, %s451
      %p453 = scmp.lt.s32.totalorder %s17, 1
      %s454 = scalar_select %p453, %s17, 1
      %s455 = scalar_lea.vmem %s5, %s454
      // Predicated region
      $region40: #{patchgan_forward.6} parent=31 // pred_check
        %p456 = pneg %p103
      $region41: #{patchgan_forward.6} parent=31 // pred_check_branch
        %458 = sbr.rel (%p456) target = $region43
      $region42: #{patchgan_forward.6} parent=31 // pred_region
        _
      $region43: #{patchgan_forward.6} parent=31 // pred_fallthru
        _
      // Predicated region
      $region44: #{patchgan_forward.6} parent=31 // pred_check
        %p459 = pneg %p129
      $region45: #{patchgan_forward.6} parent=31 // pred_check_branch
        %461 = sbr.rel (%p459) target = $region47
      $region46: #{patchgan_forward.6} parent=31 // pred_region
        _
      $region47: #{patchgan_forward.6} parent=31 // pred_fallthru
        _
      // Predicated region
      $region48: #{patchgan_forward.6} parent=31 // pred_check
        %p462 = pneg %p155
      $region49: #{patchgan_forward.6} parent=31 // pred_check_branch
        %464 = sbr.rel (%p462) target = $region51
      $region50: #{patchgan_forward.6} parent=31 // pred_region
        _
      $region51: #{patchgan_forward.6} parent=31 // pred_fallthru
        _
    $region32: #{patchgan_forward.6} parent=5 // pred_fallthru
      _
    %p465 = scmp.le.s32.totalorder 2, %s12
    // Predicated region
    $region52: #{patchgan_forward.6} parent=5 // pred_check
      %p466 = pneg %p465
    $region53: #{patchgan_forward.6} parent=5 // pred_check_branch
      %468 = sbr.rel (%p466) target = $region55
    $region54: #{patchgan_forward.6} parent=5 // pred_region
      %s469 = ssub.s32 %s12, 2
      // Predicated region
      $region56: #{patchgan_forward.6} parent=54 // pred_check
        %p470 = pneg %p109
      $region57: #{patchgan_forward.6} parent=54 // pred_check_branch
        %472 = sbr.rel (%p470) target = $region59
      $region58: #{patchgan_forward.6} parent=54 // pred_region
        %p473 = scmp.lt.s32.totalorder %s18, 1
        %s474 = scalar_select %p473, %s18, 1
        %s475 = smul.addr %s474, 8
        %s476 = smul.addr %s475, 8
        %s477 = scalar_lea.vmem %s3, %s476
      $region59: #{patchgan_forward.6} parent=54 // pred_fallthru
        _
      // Predicated region
      $region60: #{patchgan_forward.6} parent=54 // pred_check
        %p478 = pneg %p135
      $region61: #{patchgan_forward.6} parent=54 // pred_check_branch
        %480 = sbr.rel (%p478) target = $region63
      $region62: #{patchgan_forward.6} parent=54 // pred_region
        %p481 = scmp.lt.s32.totalorder %s18, 1
        %s482 = scalar_select %p481, %s18, 1
        %s483 = scalar_lea.vmem %s4, %s482
      $region63: #{patchgan_forward.6} parent=54 // pred_fallthru
        _
      // Predicated region
      $region64: #{patchgan_forward.6} parent=54 // pred_check
        %p484 = pneg %p161
      $region65: #{patchgan_forward.6} parent=54 // pred_check_branch
        %486 = sbr.rel (%p484) target = $region67
      $region66: #{patchgan_forward.6} parent=54 // pred_region
        %p487 = scmp.lt.s32.totalorder %s18, 1
        %s488 = scalar_select %p487, %s18, 1
        %s489 = scalar_lea.vmem %s5, %s488
      $region67: #{patchgan_forward.6} parent=54 // pred_fallthru
        _
    $region55: #{patchgan_forward.6} parent=5 // pred_fallthru
      _
  $region6: #{patchgan_forward.6} parent=0 // loop_footer
    %s16 = sadd.s32 1, %s12
  $region7: #{patchgan_forward.6} parent=0 // loop_footer_branch
    %11 = sbr.rel target = $region3
  $region8: #{patchgan_forward.6} parent=0 // loop_exit
    _

// kernel: patchgan_forward.7
$region0: #{patchgan_forward.7}
  #allocation0 [shape = 'u32[]', space=smem, size = 0x4, offset = 0x4, fixed_abs, tag = 'smem constant byte address 0x4 - core index']
  #allocation1 [shape = 'u32[72,128]{1,0:T(1,128)}', space=vmem, size = 0x9000, scoped, tag = 'internal scratch']
  %s0 = inlined_call_operand.vmem [shape: bf16[2,5,5,64], index: 0, kind: input, shape index: {}]
  %s1 = inlined_call_operand.vmem [shape: bf16[4,64,128], index: 1, kind: input, shape index: {}]
  %s2 = inlined_call_operand.vmem [shape: f32[1,128], index: 2, kind: input, shape index: {}]
  %s3 = inlined_call_operand.vmem [shape: f32[2,4,4,128], index: 3, kind: output, shape index: {0}]
  %s4 = inlined_call_operand.vmem [shape: f32[2,1,128], index: 4, kind: output, shape index: {1}]
  %s5 = inlined_call_operand.vmem [shape: f32[2,1,128], index: 5, kind: output, shape index: {2}]
  %6 = xla_tuple %s3, %s4, %s5
  %s7 = sld [smem:[#allocation0]]
  $region68: #{patchgan_forward.7} parent=0
    _
  %s9 = ssub.s32 1, %s7
  %s10 = scalar_select 0, %s9, %s7
  loop: start=0, step=1, limit=4
  $region2: #{patchgan_forward.7} parent=0 // loop_pre_header
    _
  $region3: #{patchgan_forward.7} parent=0 // loop_header
    %s12 = sphi 0, %s16
    %p13 = scmp.ge.s32.totalorder %s12, 4
    %s22 = sphi 0, %s24
    %s25 = sphi 0, %s22
    %s26 = sphi 0, %s25
    %s42 = sphi 0, %s26
    %s46 = sphi 0, %s46
    %s48 = sphi 0, %s46
    %s49 = sphi 0, %s48
    %s63 = sphi 0, %s49
    %s67 = sphi 0, %s67
    %s69 = sphi 0, %s67
    %s70 = sphi 0, %s69
    %s84 = sphi 0, %s70
    %s90 = sphi 0, %s92
    %s93 = sphi 0, %s90
    %s94 = sphi 0, %s93
    %s110 = sphi 0, %s94
    %s116 = sphi 0, %s118
    %s119 = sphi 0, %s116
    %s120 = sphi 0, %s119
    %s136 = sphi 0, %s120
    %s142 = sphi 0, %s144
    %s145 = sphi 0, %s142
    %s146 = sphi 0, %s145
    %s162 = sphi 0, %s146
  $region4: #{patchgan_forward.7} parent=0 // loop_header_branch
    %15 = sbr.rel (%p13) target = $region8
  $region5: #{patchgan_forward.7} parent=0 // loop_body
    %s17 = ssub.s32 %s12, 1
    %s18 = ssub.s32 %s12, 2
    %s19 = sadd.s32 %s12, 1
    %s20 = ssub.s32 %s12, %s19
    %p21 = scmp.eq.s32.totalorder %s20, 0
    %s23 = sadd.s32 %s22, 1
    %s24 = scalar_select %p21, %s22, %s23
    %p27 = pneg %p21
    %p28 = scmp.eq.s32.totalorder %s12, 1
    %p29 = por %p27, %p28
    %p30 = scmp.ne.s32.totalorder %s22, %s25
    %p31 = scmp.eq.s32.totalorder %s12, 0
    %p32 = por %p30, %p31
    %p33 = scmp.ne.s32.totalorder %s22, %s25
    %p34 = scmp.eq.s32.totalorder %s17, 1
    %p35 = por %p33, %p34
    %p36 = scmp.ne.s32.totalorder %s25, %s26
    %p37 = scmp.eq.s32.totalorder %s17, 0
    %p38 = por %p36, %p37
    %p39 = scmp.ne.s32.totalorder %s25, %s26
    %p40 = scmp.eq.s32.totalorder %s18, 1
    %p41 = por %p39, %p40
    %p43 = scmp.ne.s32.totalorder %s26, %s42
    %p44 = scmp.eq.s32.totalorder %s18, 0
    %p45 = por %p43, %p44
    %s47 = sadd.s32 %s46, 1
    %p50 = scmp.eq.s32.totalorder %s12, 1
    %p51 = scmp.ne.s32.totalorder %s46, %s48
    %p52 = scmp.eq.s32.totalorder %s12, 0
    %p53 = por %p51, %p52
    %p54 = scmp.ne.s32.totalorder %s46, %s48
    %p55 = scmp.eq.s32.totalorder %s17, 1
    %p56 = por %p54, %p55
    %p57 = scmp.ne.s32.totalorder %s48, %s49
    %p58 = scmp.eq.s32.totalorder %s17, 0
    %p59 = por %p57, %p58
    %p60 = scmp.ne.s32.totalorder %s48, %s49
    %p61 = scmp.eq.s32.totalorder %s18, 1
    %p62 = por %p60, %p61
    %p64 = scmp.ne.s32.totalorder %s49, %s63
    %p65 = scmp.eq.s32.totalorder %s18, 0
    %p66 = por %p64, %p65
    %s68 = sadd.s32 %s67, 1
    %p71 = scmp.eq.s32.totalorder %s12, 1
    %p72 = scmp.ne.s32.totalorder %s67, %s69
    %p73 = scmp.eq.s32.totalorder %s12, 0
    %p74 = por %p72, %p73
    %p75 = scmp.ne.s32.totalorder %s67, %s69
    %p76 = scmp.eq.s32.totalorder %s17, 1
    %p77 = por %p75, %p76
    %p78 = scmp.ne.s32.totalorder %s69, %s70
    %p79 = scmp.eq.s32.totalorder %s17, 0
    %p80 = por %p78, %p79
    %p81 = scmp.ne.s32.totalorder %s69, %s70
    %p82 = scmp.eq.s32.totalorder %s18, 1
    %p83 = por %p81, %p82
    %p85 = scmp.ne.s32.totalorder %s70, %s84
    %p86 = scmp.eq.s32.totalorder %s18, 0
    %p87 = por %p85, %p86
    %s88 = ssub.s32 %s12, %s19
    %p89 = scmp.eq.s32.totalorder %s88, 0
    %s91 = sadd.s32 %s90, 1
    %s92 = scalar_select %p89, %s90, %s91
    %p95 = pneg %p89
    %p96 = scmp.eq.s32.totalorder %s12, 1
    %p97 = por %p95, %p96
    %p98 = scmp.ne.s32.totalorder %s90, %s93
    %p99 = scmp.eq.s32.totalorder %s12, 0
    %p100 = por %p98, %p99
    %p101 = scmp.ne.s32.totalorder %s90, %s93
    %p102 = scmp.eq.s32.totalorder %s17, 1
    %p103 = por %p101, %p102
    %p104 = scmp.ne.s32.totalorder %s93, %s94
    %p105 = scmp.eq.s32.totalorder %s17, 0
    %p106 = por %p104, %p105
    %p107 = scmp.ne.s32.totalorder %s93, %s94
    %p108 = scmp.eq.s32.totalorder %s18, 1
    %p109 = por %p107, %p108
    %p111 = scmp.ne.s32.totalorder %s94, %s110
    %p112 = scmp.eq.s32.totalorder %s18, 0
    %p113 = por %p111, %p112
    %s114 = ssub.s32 %s12, %s19
    %p115 = scmp.eq.s32.totalorder %s114, 0
    %s117 = sadd.s32 %s116, 1
    %s118 = scalar_select %p115, %s116, %s117
    %p121 = pneg %p115
    %p122 = scmp.eq.s32.totalorder %s12, 1
    %p123 = por %p121, %p122
    %p124 = scmp.ne.s32.totalorder %s116, %s119
    %p125 = scmp.eq.s32.totalorder %s12, 0
    %p126 = por %p124, %p125
    %p127 = scmp.ne.s32.totalorder %s116, %s119
    %p128 = scmp.eq.s32.totalorder %s17, 1
    %p129 = por %p127, %p128
    %p130 = scmp.ne.s32.totalorder %s119, %s120
    %p131 = scmp.eq.s32.totalorder %s17, 0
    %p132 = por %p130, %p131
    %p133 = scmp.ne.s32.totalorder %s119, %s120
    %p134 = scmp.eq.s32.totalorder %s18, 1
    %p135 = por %p133, %p134
    %p137 = scmp.ne.s32.totalorder %s120, %s136
    %p138 = scmp.eq.s32.totalorder %s18, 0
    %p139 = por %p137, %p138
    %s140 = ssub.s32 %s12, %s19
    %p141 = scmp.eq.s32.totalorder %s140, 0
    %s143 = sadd.s32 %s142, 1
    %s144 = scalar_select %p141, %s142, %s143
    %p147 = pneg %p141
    %p148 = scmp.eq.s32.totalorder %s12, 1
    %p149 = por %p147, %p148
    %p150 = scmp.ne.s32.totalorder %s142, %s145
    %p151 = scmp.eq.s32.totalorder %s12, 0
    %p152 = por %p150, %p151
    %p153 = scmp.ne.s32.totalorder %s142, %s145
    %p154 = scmp.eq.s32.totalorder %s17, 1
    %p155 = por %p153, %p154
    %p156 = scmp.ne.s32.totalorder %s145, %s146
    %p157 = scmp.eq.s32.totalorder %s17, 0
    %p158 = por %p156, %p157
    %p159 = scmp.ne.s32.totalorder %s145, %s146
    %p160 = scmp.eq.s32.totalorder %s18, 1
    %p161 = por %p159, %p160
    %p163 = scmp.ne.s32.totalorder %s146, %s162
    %p164 = scmp.eq.s32.totalorder %s18, 0
    %p165 = por %p163, %p164
    %p166 = scmp.le.s32.totalorder 1, %s12
    %p167 = scmp.lt.s32.totalorder %s12, 3
    %p168 = pnand %p166, %p167
    %p169 = pneg %p168
    // Predicated region
    $region9: #{patchgan_forward.7} parent=5 // pred_check
      _
    $region10: #{patchgan_forward.7} parent=5 // pred_check_branch
      %171 = sbr.rel (%p168) target = $region12
    $region11: #{patchgan_forward.7} parent=5 // pred_region
      %s172 = ssub.s32 %s12, 1
      // Predicated region
      $region13: #{patchgan_forward.7} parent=11 // pred_check
        %p173 = pneg %p59
      $region14: #{patchgan_forward.7} parent=11 // pred_check_branch
        %175 = sbr.rel (%p173) target = $region16
      $region15: #{patchgan_forward.7} parent=11 // pred_region
        _
      $region16: #{patchgan_forward.7} parent=11 // pred_fallthru
        _
      // Predicated region
      $region17: #{patchgan_forward.7} parent=11 // pred_check
        %p176 = pneg %p80
      $region18: #{patchgan_forward.7} parent=11 // pred_check_branch
        %178 = sbr.rel (%p176) target = $region20
      $region19: #{patchgan_forward.7} parent=11 // pred_region
        _
      $region20: #{patchgan_forward.7} parent=11 // pred_fallthru
        _
    $region12: #{patchgan_forward.7} parent=5 // pred_fallthru
      _
    %p179 = scmp.lt.s32.totalorder %s12, 2
    // Predicated region
    $region21: #{patchgan_forward.7} parent=5 // pred_check
      %p180 = pneg %p179
    $region22: #{patchgan_forward.7} parent=5 // pred_check_branch
      %182 = sbr.rel (%p180) target = $region24
    $region23: #{patchgan_forward.7} parent=5 // pred_region
      // Predicated region
      $region25: #{patchgan_forward.7} parent=23 // pred_check
        %p183 = pneg %p32
      $region26: #{patchgan_forward.7} parent=23 // pred_check_branch
        %185 = sbr.rel (%p183) target = $region28
      $region27: #{patchgan_forward.7} parent=23 // pred_region
        %p186 = scmp.lt.s32.totalorder %s12, 1
        %s187 = scalar_select %p186, %s12, 1
        %s188 = smul.addr %s187, 5
        %s189 = smul.addr %s188, 4
        %s190 = scalar_lea.vmem %s0, %s189
      $region28: #{patchgan_forward.7} parent=23 // pred_fallthru
        _
    $region24: #{patchgan_forward.7} parent=5 // pred_fallthru
      _
    %p191 = scmp.le.s32.totalorder 1, %s12
    %p192 = scmp.lt.s32.totalorder %s12, 3
    %p193 = pnand %p191, %p192
    %p194 = pneg %p193
    // Predicated region
    $region29: #{patchgan_forward.7} parent=5 // pred_check
      _
    $region30: #{patchgan_forward.7} parent=5 // pred_check_branch
      %196 = sbr.rel (%p193) target = $region32
    $region31: #{patchgan_forward.7} parent=5 // pred_region
      %s197 = ssub.s32 %s12, 1
      %p198 = scmp.lt.s32.totalorder %s17, 1
      %s199 = scalar_select %p198, %s17, 1
      %s200 = smul.addr %s199, 5
      %s201 = smul.addr %s200, 4
      %s202 = scalar_lea.vmem %s0, %s201
      %p203 = pneg %p38
      %p204 = pneg %p35
      %p205 = pneg %p59
      %p206 = pneg %p56
      %p207 = pneg %p80
      %p208 = pneg %p77
      %p209 = pneg %p106
      %p210 = pneg %p103
      %p211 = scmp.lt.s32.totalorder %s17, 1
      %s212 = scalar_select %p211, %s17, 1
      %s213 = smul.addr %s212, 4
      %s214 = smul.addr %s213, 4
      %s215 = scalar_lea.vmem %s3, %s214
      %p216 = pneg %p132
      %p217 = pneg %p129
      %p218 = scmp.lt.s32.totalorder %s17, 1
      %s219 = scalar_select %p218, %s17, 1
      %s220 = scalar_lea.vmem %s4, %s219
      %p221 = pneg %p158
      %p222 = pneg %p155
      %p223 = scmp.lt.s32.totalorder %s17, 1
      %s224 = scalar_select %p223, %s17, 1
      %s225 = scalar_lea.vmem %s5, %s224
      %p226 = scmp.lt.s32.totalorder %s17, 1
      %s227 = scalar_select %p226, %s17, 1
      %s228 = smul.addr %s227, 5
      %s229 = smul.addr %s228, 4
      %s230 = scalar_lea.vmem %s0, %s229
      %p231 = scmp.lt.s32.totalorder %s17, 1
      %s232 = scalar_select %p231, %s17, 1
      %s233 = smul.addr %s232, 4
      %s234 = smul.addr %s233, 4
      %s235 = scalar_lea.vmem %s3, %s234
      %p236 = scmp.lt.s32.totalorder %s17, 1
      %s237 = scalar_select %p236, %s17, 1
      %s238 = scalar_lea.vmem %s4, %s237
      %p239 = scmp.lt.s32.totalorder %s17, 1
      %s240 = scalar_select %p239, %s17, 1
      %s241 = scalar_lea.vmem %s5, %s240
      %v243 = vld [vmem:[%s2] sm:$0x1]
      loop: start=0, step=1, limit=4
      $region33: #{patchgan_forward.7} parent=31 // loop_pre_header
        _
      $region34: #{patchgan_forward.7} parent=31 // loop_header
        %s245 = sphi 0, %s249
        %p246 = scmp.ge.s32.totalorder %s245, 4
        %v250 = vphi 0.0, %v492
        %v251 = vphi 0.0, %v501
      $region35: #{patchgan_forward.7} parent=31 // loop_header_branch
        %248 = sbr.rel (%p246) target = $region39
      $region36: #{patchgan_forward.7} parent=31 // loop_body
        %s252 = smul.addr %s245, 4
        %s253 = scalar_lea.vmem %s230, %s252
        %v254 = vld [vmem:[%s253] sm:$0x7]
        %v255 = vld [vmem:[%s1] sm:$0xf]
        %v256 = vld [vmem:[%s1 + $0x4] sm:$0xf]
        %v257 = vld [vmem:[%s1 + $0x8] sm:$0xf]
        %v258 = vld [vmem:[%s1 + $0xc] sm:$0xf]
        %v259 = vld [vmem:[%s1 + $0x10] sm:$0xf]
        %v260 = vld [vmem:[%s1 + $0x14] sm:$0xf]
        %v261 = vld [vmem:[%s1 + $0x18] sm:$0xf]
        %v262 = vld [vmem:[%s1 + $0x1c] sm:$0xf]
        %s263 = scalar_lea.vmem %s1, 32
        %v264 = vld [vmem:[%s263] sm:$0xf]
        %v265 = vld [vmem:[%s263 + $0x4] sm:$0xf]
        %v266 = vld [vmem:[%s263 + $0x8] sm:$0xf]
        %v267 = vld [vmem:[%s263 + $0xc] sm:$0xf]
        %v268 = vld [vmem:[%s263 + $0x10] sm:$0xf]
        %v269 = vld [vmem:[%s263 + $0x14] sm:$0xf]
        %v270 = vld [vmem:[%s263 + $0x18] sm:$0xf]
        %v271 = vld [vmem:[%s263 + $0x1c] sm:$0xf]
        %v273 = vunpack.c.l.b16 %v254
        %v274 = vpack.c.b16 %v273, %v273
        %v276 = vshrl.u32 %v274, 16
        %v278 = vshll.u32 %v274, 16
        %v280 = vrot.slane %v278, 1
        %v281 = vor.u32 %v276, %v280
        %v290 = vunpack.c.l.b16 %v264
        %v291 = vunpack.c.l.b16 %v265
        %v292 = vunpack.c.l.b16 %v266
        %v293 = vunpack.c.l.b16 %v267
        %v294 = vunpack.c.l.b16 %v268
        %v295 = vunpack.c.l.b16 %v269
        %v296 = vunpack.c.l.b16 %v270
        %v297 = vunpack.c.l.b16 %v271
        %v298 = vpack.c.b16 %v291, %v290
        %v299 = vpack.c.b16 %v293, %v292
        %v300 = vpack.c.b16 %v295, %v294
        %v301 = vpack.c.b16 %v297, %v296
        %vm306 = vcmask 523264
        %v308 = vsel %vm306, %v281, 0
        %310 = vmatpush.bf16.msra.mxu0 0
        %311 = vmatpush.bf16.msra.mxu0 0
        %312 = vmatpush.bf16.msra.mxu0 0
        %313 = vmatpush.bf16.msra.mxu0 0
        %314 = vmatpush.bf16.msra.mxu0 %v301
        %315 = vmatpush.bf16.msra.mxu0 %v300
        %316 = vmatpush.bf16.msra.mxu0 %v299
        %317 = vmatpush.bf16.msra.mxu0 %v298
        %318 = vmatmul.bf16.gmra.mxu0 %v308
        %v319 = vpop.f32.mrf.mxu0
        %v320 = vadd.f32 0.0, %v319
        %v321 = vpop.f32.mrf.mxu0
        %322 = vdwg.mxu0
        %v331 = vunpack.c.l.b16 %v255
        %v332 = vunpack.c.l.b16 %v256
        %v333 = vunpack.c.l.b16 %v257
        %v334 = vunpack.c.l.b16 %v258
        %v335 = vunpack.c.l.b16 %v259
        %v336 = vunpack.c.l.b16 %v260
        %v337 = vunpack.c.l.b16 %v261
        %v338 = vunpack.c.l.b16 %v262
        %v339 = vpack.c.b16 %v332, %v331
        %v340 = vpack.c.b16 %v334, %v333
        %v341 = vpack.c.b16 %v336, %v335
        %v342 = vpack.c.b16 %v338, %v337
        %v348 = vsel %vm306, %v254, 0
        %350 = vmatpush.bf16.msra.mxu0 0
        %351 = vmatpush.bf16.msra.mxu0 0
        %352 = vmatpush.bf16.msra.mxu0 0
        %353 = vmatpush.bf16.msra.mxu0 0
        %354 = vmatpush.bf16.msra.mxu0 %v342
        %355 = vmatpush.bf16.msra.mxu0 %v341
        %356 = vmatpush.bf16.msra.mxu0 %v340
        %357 = vmatpush.bf16.msra.mxu0 %v339
        %358 = vmatmul.bf16.gmra.mxu0 %v348
        %v359 = vpop.f32.mrf.mxu0
        %v360 = vadd.f32 %v320, %v359
        %v361 = vpop.f32.mrf.mxu0
        %362 = vdwg.mxu0
        %s363 = sadd.s32 %s245, 1
        %s364 = smul.addr %s363, 4
        %s365 = scalar_lea.vmem %s230, %s364
        %v366 = vld [vmem:[%s365] sm:$0x7]
        %s367 = scalar_lea.vmem %s1, 64
        %v368 = vld [vmem:[%s367] sm:$0xf]
        %v369 = vld [vmem:[%s367 + $0x4] sm:$0xf]
        %v370 = vld [vmem:[%s367 + $0x8] sm:$0xf]
        %v371 = vld [vmem:[%s367 + $0xc] sm:$0xf]
        %v372 = vld [vmem:[%s367 + $0x10] sm:$0xf]
        %v373 = vld [vmem:[%s367 + $0x14] sm:$0xf]
        %v374 = vld [vmem:[%s367 + $0x18] sm:$0xf]
        %v375 = vld [vmem:[%s367 + $0x1c] sm:$0xf]
        %v384 = vunpack.c.l.b16 %v368
        %v385 = vunpack.c.l.b16 %v369
        %v386 = vunpack.c.l.b16 %v370
        %v387 = vunpack.c.l.b16 %v371
        %v388 = vunpack.c.l.b16 %v372
        %v389 = vunpack.c.l.b16 %v373
        %v390 = vunpack.c.l.b16 %v374
        %v391 = vunpack.c.l.b16 %v375
        %v392 = vpack.c.b16 %v385, %v384
        %v393 = vpack.c.b16 %v387, %v386
        %v394 = vpack.c.b16 %v389, %v388
        %v395 = vpack.c.b16 %v391, %v390
        %v401 = vsel %vm306, %v366, 0
        %403 = vmatpush.bf16.msra.mxu0 0
        %404 = vmatpush.bf16.msra.mxu0 0
        %405 = vmatpush.bf16.msra.mxu0 0
        %406 = vmatpush.bf16.msra.mxu0 0
        %407 = vmatpush.bf16.msra.mxu0 %v395
        %408 = vmatpush.bf16.msra.mxu0 %v394
        %409 = vmatpush.bf16.msra.mxu0 %v393
        %410 = vmatpush.bf16.msra.mxu0 %v392
        %411 = vmatmul.bf16.gmra.mxu0 %v401
        %v412 = vpop.f32.mrf.mxu0
        %v413 = vadd.f32 0.0, %v412
        %v414 = vpop.f32.mrf.mxu0
        %415 = vdwg.mxu0
        %v416 = vadd.f32 %v360, %v413
        %s417 = scalar_lea.vmem %s1, 96
        %v418 = vld [vmem:[%s417] sm:$0xf]
        %v419 = vld [vmem:[%s417 + $0x4] sm:$0xf]
        %v420 = vld [vmem:[%s417 + $0x8] sm:$0xf]
        %v421 = vld [vmem:[%s417 + $0xc] sm:$0xf]
        %v422 = vld [vmem:[%s417 + $0x10] sm:$0xf]
        %v423 = vld [vmem:[%s417 + $0x14] sm:$0xf]
        %v424 = vld [vmem:[%s417 + $0x18] sm:$0xf]
        %v425 = vld [vmem:[%s417 + $0x1c] sm:$0xf]
        %v427 = vunpack.c.l.b16 %v366
        %v428 = vpack.c.b16 %v427, %v427
        %v430 = vshrl.u32 %v428, 16
        %v432 = vshll.u32 %v428, 16
        %v434 = vrot.slane %v432, 1
        %v435 = vor.u32 %v430, %v434
        %v444 = vunpack.c.l.b16 %v418
        %v445 = vunpack.c.l.b16 %v419
        %v446 = vunpack.c.l.b16 %v420
        %v447 = vunpack.c.l.b16 %v421
        %v448 = vunpack.c.l.b16 %v422
        %v449 = vunpack.c.l.b16 %v423
        %v450 = vunpack.c.l.b16 %v424
        %v451 = vunpack.c.l.b16 %v425
        %v452 = vpack.c.b16 %v445, %v444
        %v453 = vpack.c.b16 %v447, %v446
        %v454 = vpack.c.b16 %v449, %v448
        %v455 = vpack.c.b16 %v451, %v450
        %v461 = vsel %vm306, %v435, 0
        %463 = vmatpush.bf16.msra.mxu0 0
        %464 = vmatpush.bf16.msra.mxu0 0
        %465 = vmatpush.bf16.msra.mxu0 0
        %466 = vmatpush.bf16.msra.mxu0 0
        %467 = vmatpush.bf16.msra.mxu0 %v455
        %468 = vmatpush.bf16.msra.mxu0 %v454
        %469 = vmatpush.bf16.msra.mxu0 %v453
        %470 = vmatpush.bf16.msra.mxu0 %v452
        %471 = vmatmul.bf16.gmra.mxu0 %v461
        %v472 = vpop.f32.mrf.mxu0
        %v473 = vadd.f32 0.0, %v472
        %v474 = vpop.f32.mrf.mxu0
        %475 = vdwg.mxu0
        %v476 = vadd.f32 %v416, %v473
        %v478 = vperm.slane %v243, 0
        %v480 = vadd.f32 %v476, %v478
        %s481 = smul.u32 %s245, 4
        %s482 = scalar_lea.vmem %s235, %s481
        %483 = vst [vmem:[%s482] sm:$0xf] %v480
        %vm484 = vcmask 1043456
        %v485 = vsel %vm484, %v480, 0.0
        %v486 = vrot.slane %v485, 4
        %v487 = vadd.f32 %v485, %v486
        %v488 = vrot.slane %v487, 2
        %v489 = vadd.f32 %v487, %v488
        %v490 = vrot.slane %v489, 1
        %v491 = vadd.f32 %v489, %v490
        %v492 = vadd.f32 %v250, %v491
        %v493 = vmul.f32 %v480, %v480
        %v494 = vsel %vm484, %v493, 0.0
        %v495 = vrot.slane %v494, 4
        %v496 = vadd.f32 %v494, %v495
        %v497 = vrot.slane %v496, 2
        %v498 = vadd.f32 %v496, %v497
        %v499 = vrot.slane %v498, 1
        %v500 = vadd.f32 %v498, %v499
        %v501 = vadd.f32 %v251, %v500
      $region37: #{patchgan_forward.7} parent=31 // loop_footer
        %s249 = sadd.s32 1, %s245
      $region38: #{patchgan_forward.7} parent=31 // loop_footer_branch
        %244 = sbr.rel target = $region34
      $region39: #{patchgan_forward.7} parent=31 // loop_exit
        _
      %502 = vst [vmem:[%s238] sm:$0x1] %v250
      %503 = vst [vmem:[%s241] sm:$0x1] %v251
      %p504 = scmp.lt.s32.totalorder %s17, 1
      %s505 = scalar_select %p504, %s17, 1
      %s506 = smul.addr %s505, 4
      %s507 = smul.addr %s506, 4
      %s508 = scalar_lea.vmem %s3, %s507
      %p509 = scmp.lt.s32.totalorder %s17, 1
      %s510 = scalar_select %p509, %s17, 1
      %s511 = scalar_lea.vmem %s4, %s510
      %p512 = scmp.lt.s32.totalorder %s17, 1
      %s513 = scalar_select %p512, %s17, 1
      %s514 = scalar_lea.vmem %s5, %s513
      // Predicated region
      $region40: #{patchgan_forward.7} parent=31 // pred_check
        %p515 = pneg %p103
      $region41: #{patchgan_forward.7} parent=31 // pred_check_branch
        %517 = sbr.rel (%p515) target = $region43
      $region42: #{patchgan_forward.7} parent=31 // pred_region
        _
      $region43: #{patchgan_forward.7} parent=31 // pred_fallthru
        _
      // Predicated region
      $region44: #{patchgan_forward.7} parent=31 // pred_check
        %p518 = pneg %p129
      $region45: #{patchgan_forward.7} parent=31 // pred_check_branch
        %520 = sbr.rel (%p518) target = $region47
      $region46: #{patchgan_forward.7} parent=31 // pred_region
        _
      $region47: #{patchgan_forward.7} parent=31 // pred_fallthru
        _
      // Predicated region
      $region48: #{patchgan_forward.7} parent=31 // pred_check
        %p521 = pneg %p155
      $region49: #{patchgan_forward.7} parent=31 // pred_check_branch
        %523 = sbr.rel (%p521) target = $region51
      $region50: #{patchgan_forward.7} parent=31 // pred_region
        _
      $region51: #{patchgan_forward.7} parent=31 // pred_fallthru
        _
    $region32: #{patchgan_forward.7} parent=5 // pred_fallthru
      _
    %p524 = scmp.le.s32.totalorder 2, %s12
    // Predicated region
    $region52: #{patchgan_forward.7} parent=5 // pred_check
      %p525 = pneg %p524
    $region53: #{patchgan_forward.7} parent=5 // pred_check_branch
      %527 = sbr.rel (%p525) target = $region55
    $region54: #{patchgan_forward.7} parent=5 // pred_region
      %s528 = ssub.s32 %s12, 2
      // Predicated region
      $region56: #{patchgan_forward.7} parent=54 // pred_check
        %p529 = pneg %p109
      $region57: #{patchgan_forward.7} parent=54 // pred_check_branch
        %531 = sbr.rel (%p529) target = $region59
      $region58: #{patchgan_forward.7} parent=54 // pred_region
        %p532 = scmp.lt.s32.totalorder %s18, 1
        %s533 = scalar_select %p532, %s18, 1
        %s534 = smul.addr %s533, 4
        %s535 = smul.addr %s534, 4
        %s536 = scalar_lea.vmem %s3, %s535
      $region59: #{patchgan_forward.7} parent=54 // pred_fallthru
        _
      // Predicated region
      $region60: #{patchgan_forward.7} parent=54 // pred_check
        %p537 = pneg %p135
      $region61: #{patchgan_forward.7} parent=54 // pred_check_branch
        %539 = sbr.rel (%p537) target = $region63
      $region62: #{patchgan_forward.7} parent=54 // pred_region
        %p540 = scmp.lt.s32.totalorder %s18, 1
        %s541 = scalar_select %p540, %s18, 1
        %s542 = scalar_lea.vmem %s4, %s541
      $region63: #{patchgan_forward.7} parent=54 // pred_fallthru
        _
      // Predicated region
      $region64: #{patchgan_forward.7} parent=54 // pred_check
        %p543 = pneg %p161
      $region65: #{patchgan_forward.7} parent=54 // pred_check_branch
        %545 = sbr.rel (%p543) target = $region67
      $region66: #{patchgan_forward.7} parent=54 // pred_region
        %p546 = scmp.lt.s32.totalorder %s18, 1
        %s547 = scalar_select %p546, %s18, 1
        %s548 = scalar_lea.vmem %s5, %s547
      $region67: #{patchgan_forward.7} parent=54 // pred_fallthru
        _
    $region55: #{patchgan_forward.7} parent=5 // pred_fallthru
      _
  $region6: #{patchgan_forward.7} parent=0 // loop_footer
    %s16 = sadd.s32 1, %s12
  $region7: #{patchgan_forward.7} parent=0 // loop_footer_branch
    %11 = sbr.rel target = $region3
  $region8: #{patchgan_forward.7} parent=0 // loop_exit
    _

// kernel: patchgan_forward.8
$region0: #{patchgan_forward.8}
  #allocation0 [shape = 'u32[]', space=smem, size = 0x4, offset = 0x4, fixed_abs, tag = 'smem constant byte address 0x4 - core index']
  #allocation1 [shape = 'u32[72,128]{1,0:T(1,128)}', space=vmem, size = 0x9000, scoped, tag = 'internal scratch']
  %s0 = inlined_call_operand.vmem [shape: bf16[2,6,6,32], index: 0, kind: input, shape index: {}]
  %s1 = inlined_call_operand.vmem [shape: bf16[16,32,128], index: 1, kind: input, shape index: {}]
  %s2 = inlined_call_operand.vmem [shape: f32[1,128], index: 2, kind: input, shape index: {}]
  %s3 = inlined_call_operand.vmem [shape: f32[2,3,3,128], index: 3, kind: output, shape index: {0}]
  %s4 = inlined_call_operand.vmem [shape: f32[2,1,128], index: 4, kind: output, shape index: {1}]
  %s5 = inlined_call_operand.vmem [shape: f32[2,1,128], index: 5, kind: output, shape index: {2}]
  %6 = xla_tuple %s3, %s4, %s5
  %s7 = sld [smem:[#allocation0]]
  $region68: #{patchgan_forward.8} parent=0
    _
  %s9 = ssub.s32 1, %s7
  %s10 = scalar_select 0, %s9, %s7
  loop: start=0, step=1, limit=4
  $region2: #{patchgan_forward.8} parent=0 // loop_pre_header
    _
  $region3: #{patchgan_forward.8} parent=0 // loop_header
    %s12 = sphi 0, %s16
    %p13 = scmp.ge.s32.totalorder %s12, 4
    %s22 = sphi 0, %s24
    %s25 = sphi 0, %s22
    %s26 = sphi 0, %s25
    %s42 = sphi 0, %s26
    %s46 = sphi 0, %s46
    %s48 = sphi 0, %s46
    %s49 = sphi 0, %s48
    %s63 = sphi 0, %s49
    %s67 = sphi 0, %s67
    %s69 = sphi 0, %s67
    %s70 = sphi 0, %s69
    %s84 = sphi 0, %s70
    %s90 = sphi 0, %s92
    %s93 = sphi 0, %s90
    %s94 = sphi 0, %s93
    %s110 = sphi 0, %s94
    %s116 = sphi 0, %s118
    %s119 = sphi 0, %s116
    %s120 = sphi 0, %s119
    %s136 = sphi 0, %s120
    %s142 = sphi 0, %s144
    %s145 = sphi 0, %s142
    %s146 = sphi 0, %s145
    %s162 = sphi 0, %s146
  $region4: #{patchgan_forward.8} parent=0 // loop_header_branch
    %15 = sbr.rel (%p13) target = $region8
  $region5: #{patchgan_forward.8} parent=0 // loop_body
    %s17 = ssub.s32 %s12, 1
    %s18 = ssub.s32 %s12, 2
    %s19 = sadd.s32 %s12, 1
    %s20 = ssub.s32 %s12, %s19
    %p21 = scmp.eq.s32.totalorder %s20, 0
    %s23 = sadd.s32 %s22, 1
    %s24 = scalar_select %p21, %s22, %s23
    %p27 = pneg %p21
    %p28 = scmp.eq.s32.totalorder %s12, 1
    %p29 = por %p27, %p28
    %p30 = scmp.ne.s32.totalorder %s22, %s25
    %p31 = scmp.eq.s32.totalorder %s12, 0
    %p32 = por %p30, %p31
    %p33 = scmp.ne.s32.totalorder %s22, %s25
    %p34 = scmp.eq.s32.totalorder %s17, 1
    %p35 = por %p33, %p34
    %p36 = scmp.ne.s32.totalorder %s25, %s26
    %p37 = scmp.eq.s32.totalorder %s17, 0
    %p38 = por %p36, %p37
    %p39 = scmp.ne.s32.totalorder %s25, %s26
    %p40 = scmp.eq.s32.totalorder %s18, 1
    %p41 = por %p39, %p40
    %p43 = scmp.ne.s32.totalorder %s26, %s42
    %p44 = scmp.eq.s32.totalorder %s18, 0
    %p45 = por %p43, %p44
    %s47 = sadd.s32 %s46, 1
    %p50 = scmp.eq.s32.totalorder %s12, 1
    %p51 = scmp.ne.s32.totalorder %s46, %s48
    %p52 = scmp.eq.s32.totalorder %s12, 0
    %p53 = por %p51, %p52
    %p54 = scmp.ne.s32.totalorder %s46, %s48
    %p55 = scmp.eq.s32.totalorder %s17, 1
    %p56 = por %p54, %p55
    %p57 = scmp.ne.s32.totalorder %s48, %s49
    %p58 = scmp.eq.s32.totalorder %s17, 0
    %p59 = por %p57, %p58
    %p60 = scmp.ne.s32.totalorder %s48, %s49
    %p61 = scmp.eq.s32.totalorder %s18, 1
    %p62 = por %p60, %p61
    %p64 = scmp.ne.s32.totalorder %s49, %s63
    %p65 = scmp.eq.s32.totalorder %s18, 0
    %p66 = por %p64, %p65
    %s68 = sadd.s32 %s67, 1
    %p71 = scmp.eq.s32.totalorder %s12, 1
    %p72 = scmp.ne.s32.totalorder %s67, %s69
    %p73 = scmp.eq.s32.totalorder %s12, 0
    %p74 = por %p72, %p73
    %p75 = scmp.ne.s32.totalorder %s67, %s69
    %p76 = scmp.eq.s32.totalorder %s17, 1
    %p77 = por %p75, %p76
    %p78 = scmp.ne.s32.totalorder %s69, %s70
    %p79 = scmp.eq.s32.totalorder %s17, 0
    %p80 = por %p78, %p79
    %p81 = scmp.ne.s32.totalorder %s69, %s70
    %p82 = scmp.eq.s32.totalorder %s18, 1
    %p83 = por %p81, %p82
    %p85 = scmp.ne.s32.totalorder %s70, %s84
    %p86 = scmp.eq.s32.totalorder %s18, 0
    %p87 = por %p85, %p86
    %s88 = ssub.s32 %s12, %s19
    %p89 = scmp.eq.s32.totalorder %s88, 0
    %s91 = sadd.s32 %s90, 1
    %s92 = scalar_select %p89, %s90, %s91
    %p95 = pneg %p89
    %p96 = scmp.eq.s32.totalorder %s12, 1
    %p97 = por %p95, %p96
    %p98 = scmp.ne.s32.totalorder %s90, %s93
    %p99 = scmp.eq.s32.totalorder %s12, 0
    %p100 = por %p98, %p99
    %p101 = scmp.ne.s32.totalorder %s90, %s93
    %p102 = scmp.eq.s32.totalorder %s17, 1
    %p103 = por %p101, %p102
    %p104 = scmp.ne.s32.totalorder %s93, %s94
    %p105 = scmp.eq.s32.totalorder %s17, 0
    %p106 = por %p104, %p105
    %p107 = scmp.ne.s32.totalorder %s93, %s94
    %p108 = scmp.eq.s32.totalorder %s18, 1
    %p109 = por %p107, %p108
    %p111 = scmp.ne.s32.totalorder %s94, %s110
    %p112 = scmp.eq.s32.totalorder %s18, 0
    %p113 = por %p111, %p112
    %s114 = ssub.s32 %s12, %s19
    %p115 = scmp.eq.s32.totalorder %s114, 0
    %s117 = sadd.s32 %s116, 1
    %s118 = scalar_select %p115, %s116, %s117
    %p121 = pneg %p115
    %p122 = scmp.eq.s32.totalorder %s12, 1
    %p123 = por %p121, %p122
    %p124 = scmp.ne.s32.totalorder %s116, %s119
    %p125 = scmp.eq.s32.totalorder %s12, 0
    %p126 = por %p124, %p125
    %p127 = scmp.ne.s32.totalorder %s116, %s119
    %p128 = scmp.eq.s32.totalorder %s17, 1
    %p129 = por %p127, %p128
    %p130 = scmp.ne.s32.totalorder %s119, %s120
    %p131 = scmp.eq.s32.totalorder %s17, 0
    %p132 = por %p130, %p131
    %p133 = scmp.ne.s32.totalorder %s119, %s120
    %p134 = scmp.eq.s32.totalorder %s18, 1
    %p135 = por %p133, %p134
    %p137 = scmp.ne.s32.totalorder %s120, %s136
    %p138 = scmp.eq.s32.totalorder %s18, 0
    %p139 = por %p137, %p138
    %s140 = ssub.s32 %s12, %s19
    %p141 = scmp.eq.s32.totalorder %s140, 0
    %s143 = sadd.s32 %s142, 1
    %s144 = scalar_select %p141, %s142, %s143
    %p147 = pneg %p141
    %p148 = scmp.eq.s32.totalorder %s12, 1
    %p149 = por %p147, %p148
    %p150 = scmp.ne.s32.totalorder %s142, %s145
    %p151 = scmp.eq.s32.totalorder %s12, 0
    %p152 = por %p150, %p151
    %p153 = scmp.ne.s32.totalorder %s142, %s145
    %p154 = scmp.eq.s32.totalorder %s17, 1
    %p155 = por %p153, %p154
    %p156 = scmp.ne.s32.totalorder %s145, %s146
    %p157 = scmp.eq.s32.totalorder %s17, 0
    %p158 = por %p156, %p157
    %p159 = scmp.ne.s32.totalorder %s145, %s146
    %p160 = scmp.eq.s32.totalorder %s18, 1
    %p161 = por %p159, %p160
    %p163 = scmp.ne.s32.totalorder %s146, %s162
    %p164 = scmp.eq.s32.totalorder %s18, 0
    %p165 = por %p163, %p164
    %p166 = scmp.le.s32.totalorder 1, %s12
    %p167 = scmp.lt.s32.totalorder %s12, 3
    %p168 = pnand %p166, %p167
    %p169 = pneg %p168
    // Predicated region
    $region9: #{patchgan_forward.8} parent=5 // pred_check
      _
    $region10: #{patchgan_forward.8} parent=5 // pred_check_branch
      %171 = sbr.rel (%p168) target = $region12
    $region11: #{patchgan_forward.8} parent=5 // pred_region
      %s172 = ssub.s32 %s12, 1
      // Predicated region
      $region13: #{patchgan_forward.8} parent=11 // pred_check
        %p173 = pneg %p59
      $region14: #{patchgan_forward.8} parent=11 // pred_check_branch
        %175 = sbr.rel (%p173) target = $region16
      $region15: #{patchgan_forward.8} parent=11 // pred_region
        _
      $region16: #{patchgan_forward.8} parent=11 // pred_fallthru
        _
      // Predicated region
      $region17: #{patchgan_forward.8} parent=11 // pred_check
        %p176 = pneg %p80
      $region18: #{patchgan_forward.8} parent=11 // pred_check_branch
        %178 = sbr.rel (%p176) target = $region20
      $region19: #{patchgan_forward.8} parent=11 // pred_region
        _
      $region20: #{patchgan_forward.8} parent=11 // pred_fallthru
        _
    $region12: #{patchgan_forward.8} parent=5 // pred_fallthru
      _
    %p179 = scmp.lt.s32.totalorder %s12, 2
    // Predicated region
    $region21: #{patchgan_forward.8} parent=5 // pred_check
      %p180 = pneg %p179
    $region22: #{patchgan_forward.8} parent=5 // pred_check_branch
      %182 = sbr.rel (%p180) target = $region24
    $region23: #{patchgan_forward.8} parent=5 // pred_region
      // Predicated region
      $region25: #{patchgan_forward.8} parent=23 // pred_check
        %p183 = pneg %p32
      $region26: #{patchgan_forward.8} parent=23 // pred_check_branch
        %185 = sbr.rel (%p183) target = $region28
      $region27: #{patchgan_forward.8} parent=23 // pred_region
        %p186 = scmp.lt.s32.totalorder %s12, 1
        %s187 = scalar_select %p186, %s12, 1
        %s188 = smul.addr %s187, 6
        %s189 = smul.addr %s188, 4
        %s190 = scalar_lea.vmem %s0, %s189
      $region28: #{patchgan_forward.8} parent=23 // pred_fallthru
        _
    $region24: #{patchgan_forward.8} parent=5 // pred_fallthru
      _
    %p191 = scmp.le.s32.totalorder 1, %s12
    %p192 = scmp.lt.s32.totalorder %s12, 3
    %p193 = pnand %p191, %p192
    %p194 = pneg %p193
    // Predicated region
    $region29: #{patchgan_forward.8} parent=5 // pred_check
      _
    $region30: #{patchgan_forward.8} parent=5 // pred_check_branch
      %196 = sbr.rel (%p193) target = $region32
    $region31: #{patchgan_forward.8} parent=5 // pred_region
      %s197 = ssub.s32 %s12, 1
      %p198 = scmp.lt.s32.totalorder %s17, 1
      %s199 = scalar_select %p198, %s17, 1
      %s200 = smul.addr %s199, 6
      %s201 = smul.addr %s200, 4
      %s202 = scalar_lea.vmem %s0, %s201
      %p203 = pneg %p38
      %p204 = pneg %p35
      %p205 = pneg %p59
      %p206 = pneg %p56
      %p207 = pneg %p80
      %p208 = pneg %p77
      %p209 = pneg %p106
      %p210 = pneg %p103
      %p211 = scmp.lt.s32.totalorder %s17, 1
      %s212 = scalar_select %p211, %s17, 1
      %s213 = smul.addr %s212, 3
      %s214 = smul.addr %s213, 4
      %s215 = scalar_lea.vmem %s3, %s214
      %p216 = pneg %p132
      %p217 = pneg %p129
      %p218 = scmp.lt.s32.totalorder %s17, 1
      %s219 = scalar_select %p218, %s17, 1
      %s220 = scalar_lea.vmem %s4, %s219
      %p221 = pneg %p158
      %p222 = pneg %p155
      %p223 = scmp.lt.s32.totalorder %s17, 1
      %s224 = scalar_select %p223, %s17, 1
      %s225 = scalar_lea.vmem %s5, %s224
      %p226 = scmp.lt.s32.totalorder %s17, 1
      %s227 = scalar_select %p226, %s17, 1
      %s228 = smul.addr %s227, 6
      %s229 = smul.addr %s228, 4
      %s230 = scalar_lea.vmem %s0, %s229
      %p231 = scmp.lt.s32.totalorder %s17, 1
      %s232 = scalar_select %p231, %s17, 1
      %s233 = smul.addr %s232, 3
      %s234 = smul.addr %s233, 4
      %s235 = scalar_lea.vmem %s3, %s234
      %p236 = scmp.lt.s32.totalorder %s17, 1
      %s237 = scalar_select %p236, %s17, 1
      %s238 = scalar_lea.vmem %s4, %s237
      %p239 = scmp.lt.s32.totalorder %s17, 1
      %s240 = scalar_select %p239, %s17, 1
      %s241 = scalar_lea.vmem %s5, %s240
      %v243 = vld [vmem:[%s2] sm:$0x1]
      loop: start=0, step=1, limit=3
      $region33: #{patchgan_forward.8} parent=31 // loop_pre_header
        _
      $region34: #{patchgan_forward.8} parent=31 // loop_header
        %s245 = sphi 0, %s249
        %p246 = scmp.ge.s32.totalorder %s245, 3
        %v250 = vphi 0.0, %v880
        %v251 = vphi 0.0, %v889
      $region35: #{patchgan_forward.8} parent=31 // loop_header_branch
        %248 = sbr.rel (%p246) target = $region39
      $region36: #{patchgan_forward.8} parent=31 // loop_body
        %s252 = smul.addr %s245, 4
        %s253 = scalar_lea.vmem %s230, %s252
        %v254 = vld [vmem:[%s253] sm:$0x7]
        %v255 = vld [vmem:[%s1] sm:$0xf]
        %v256 = vld [vmem:[%s1 + $0x4] sm:$0xf]
        %v257 = vld [vmem:[%s1 + $0x8] sm:$0xf]
        %v258 = vld [vmem:[%s1 + $0xc] sm:$0xf]
        %s259 = scalar_lea.vmem %s1, 16
        %v260 = vld [vmem:[%s259] sm:$0xf]
        %v261 = vld [vmem:[%s259 + $0x4] sm:$0xf]
        %v262 = vld [vmem:[%s259 + $0x8] sm:$0xf]
        %v263 = vld [vmem:[%s259 + $0xc] sm:$0xf]
        %v265 = vunpack.c.l.b16 %v254
        %v266 = vpack.c.b16 %v265, %v265
        %v268 = vshrl.u32 %v266, 16
        %v270 = vshll.u32 %v266, 16
        %v272 = vrot.slane %v270, 1
        %v273 = vor.u32 %v268, %v272
        %v278 = vunpack.c.l.b16 %v260
        %v279 = vunpack.c.l.b16 %v261
        %v280 = vunpack.c.l.b16 %v262
        %v281 = vunpack.c.l.b16 %v263
        %v282 = vpack.c.b16 %v279, %v278
        %v283 = vpack.c.b16 %v281, %v280
        %vm286 = vcmask 261120
        %v288 = vsel %vm286, %v273, 0
        %290 = vmatpush.bf16.msra.mxu0 0
        %291 = vmatpush.bf16.msra.mxu0 0
        %292 = vmatpush.bf16.msra.mxu0 0
        %293 = vmatpush.bf16.msra.mxu0 0
        %294 = vmatpush.bf16.msra.mxu0 0
        %295 = vmatpush.bf16.msra.mxu0 0
        %296 = vmatpush.bf16.msra.mxu0 %v283
        %297 = vmatpush.bf16.msra.mxu0 %v282
        %298 = vmatmul.bf16.gmra.mxu0 %v288
        %v299 = vpop.f32.mrf.mxu0
        %v300 = vadd.f32 0.0, %v299
        %v301 = vpop.f32.mrf.mxu0
        %302 = vdwg.mxu0
        %v307 = vunpack.c.l.b16 %v255
        %v308 = vunpack.c.l.b16 %v256
        %v309 = vunpack.c.l.b16 %v257
        %v310 = vunpack.c.l.b16 %v258
        %v311 = vpack.c.b16 %v308, %v307
        %v312 = vpack.c.b16 %v310, %v309
        %v316 = vsel %vm286, %v254, 0
        %318 = vmatpush.bf16.msra.mxu0 0
        %319 = vmatpush.bf16.msra.mxu0 0
        %320 = vmatpush.bf16.msra.mxu0 0
        %321 = vmatpush.bf16.msra.mxu0 0
        %322 = vmatpush.bf16.msra.mxu0 0
        %323 = vmatpush.bf16.msra.mxu0 0
        %324 = vmatpush.bf16.msra.mxu0 %v312
        %325 = vmatpush.bf16.msra.mxu0 %v311
        %326 = vmatmul.bf16.gmra.mxu0 %v316
        %v327 = vpop.f32.mrf.mxu0
        %v328 = vadd.f32 %v300, %v327
        %v329 = vpop.f32.mrf.mxu0
        %330 = vdwg.mxu0
        %s331 = scalar_lea.vmem %s1, 32
        %v332 = vld [vmem:[%s331] sm:$0xf]
        %v333 = vld [vmem:[%s331 + $0x4] sm:$0xf]
        %v334 = vld [vmem:[%s331 + $0x8] sm:$0xf]
        %v335 = vld [vmem:[%s331 + $0xc] sm:$0xf]
        %v336 = vrot.slane %v266, 1
        %v341 = vunpack.c.l.b16 %v332
        %v342 = vunpack.c.l.b16 %v333
        %v343 = vunpack.c.l.b16 %v334
        %v344 = vunpack.c.l.b16 %v335
        %v345 = vpack.c.b16 %v342, %v341
        %v346 = vpack.c.b16 %v344, %v343
        %v350 = vsel %vm286, %v336, 0
        %352 = vmatpush.bf16.msra.mxu0 0
        %353 = vmatpush.bf16.msra.mxu0 0
        %354 = vmatpush.bf16.msra.mxu0 0
        %355 = vmatpush.bf16.msra.mxu0 0
        %356 = vmatpush.bf16.msra.mxu0 0
        %357 = vmatpush.bf16.msra.mxu0 0
        %358 = vmatpush.bf16.msra.mxu0 %v346
        %359 = vmatpush.bf16.msra.mxu0 %v345
        %360 = vmatmul.bf16.gmra.mxu0 %v350
        %v361 = vpop.f32.mrf.mxu0
        %v362 = vadd.f32 0.0, %v361
        %v363 = vpop.f32.mrf.mxu0
        %364 = vdwg.mxu0
        %v365 = vadd.f32 %v328, %v362
        %s366 = scalar_lea.vmem %s1, 48
        %v367 = vld [vmem:[%s366] sm:$0xf]
        %v368 = vld [vmem:[%s366 + $0x4] sm:$0xf]
        %v369 = vld [vmem:[%s366 + $0x8] sm:$0xf]
        %v370 = vld [vmem:[%s366 + $0xc] sm:$0xf]
        %v371 = vrot.slane %v268, 1
        %v372 = vrot.slane %v270, 2
        %v373 = vor.u32 %v371, %v372
        %v378 = vunpack.c.l.b16 %v367
        %v379 = vunpack.c.l.b16 %v368
        %v380 = vunpack.c.l.b16 %v369
        %v381 = vunpack.c.l.b16 %v370
        %v382 = vpack.c.b16 %v379, %v378
        %v383 = vpack.c.b16 %v381, %v380
        %v387 = vsel %vm286, %v373, 0
        %389 = vmatpush.bf16.msra.mxu0 0
        %390 = vmatpush.bf16.msra.mxu0 0
        %391 = vmatpush.bf16.msra.mxu0 0
        %392 = vmatpush.bf16.msra.mxu0 0
        %393 = vmatpush.bf16.msra.mxu0 0
        %394 = vmatpush.bf16.msra.mxu0 0
        %395 = vmatpush.bf16.msra.mxu0 %v383
        %396 = vmatpush.bf16.msra.mxu0 %v382
        %397 = vmatmul.bf16.gmra.mxu0 %v387
        %v398 = vpop.f32.mrf.mxu0
        %v399 = vadd.f32 0.0, %v398
        %v400 = vpop.f32.mrf.mxu0
        %401 = vdwg.mxu0
        %v402 = vadd.f32 %v365, %v399
        %s403 = sadd.s32 %s245, 1
        %s404 = smul.addr %s403, 4
        %s405 = scalar_lea.vmem %s230, %s404
        %v406 = vld [vmem:[%s405] sm:$0x7]
        %s407 = scalar_lea.vmem %s1, 64
        %v408 = vld [vmem:[%s407] sm:$0xf]
        %v409 = vld [vmem:[%s407 + $0x4] sm:$0xf]
        %v410 = vld [vmem:[%s407 + $0x8] sm:$0xf]
        %v411 = vld [vmem:[%s407 + $0xc] sm:$0xf]
        %v416 = vunpack.c.l.b16 %v408
        %v417 = vunpack.c.l.b16 %v409
        %v418 = vunpack.c.l.b16 %v410
        %v419 = vunpack.c.l.b16 %v411
        %v420 = vpack.c.b16 %v417, %v416
        %v421 = vpack.c.b16 %v419, %v418
        %v425 = vsel %vm286, %v406, 0
        %427 = vmatpush.bf16.msra.mxu0 0
        %428 = vmatpush.bf16.msra.mxu0 0
        %429 = vmatpush.bf16.msra.mxu0 0
        %430 = vmatpush.bf16.msra.mxu0 0
        %431 = vmatpush.bf16.msra.mxu0 0
        %432 = vmatpush.bf16.msra.mxu0 0
        %433 = vmatpush.bf16.msra.mxu0 %v421
        %434 = vmatpush.bf16.msra.mxu0 %v420
        %435 = vmatmul.bf16.gmra.mxu0 %v425
        %v436 = vpop.f32.mrf.mxu0
        %v437 = vadd.f32 0.0, %v436
        %v438 = vpop.f32.mrf.mxu0
        %439 = vdwg.mxu0
        %v440 = vadd.f32 %v402, %v437
        %s441 = scalar_lea.vmem %s1, 80
        %v442 = vld [vmem:[%s441] sm:$0xf]
        %v443 = vld [vmem:[%s441 + $0x4] sm:$0xf]
        %v444 = vld [vmem:[%s441 + $0x8] sm:$0xf]
        %v445 = vld [vmem:[%s441 + $0xc] sm:$0xf]
        %v447 = vunpack.c.l.b16 %v406
        %v448 = vpack.c.b16 %v447, %v447
        %v450 = vshrl.u32 %v448, 16
        %v452 = vshll.u32 %v448, 16
        %v454 = vrot.slane %v452, 1
        %v455 = vor.u32 %v450, %v454
        %v460 = vunpack.c.l.b16 %v442
        %v461 = vunpack.c.l.b16 %v443
        %v462 = vunpack.c.l.b16 %v444
        %v463 = vunpack.c.l.b16 %v445
        %v464 = vpack.c.b16 %v461, %v460
        %v465 = vpack.c.b16 %v463, %v462
        %v469 = vsel %vm286, %v455, 0
        %471 = vmatpush.bf16.msra.mxu0 0
        %472 = vmatpush.bf16.msra.mxu0 0
        %473 = vmatpush.bf16.msra.mxu0 0
        %474 = vmatpush.bf16.msra.mxu0 0
        %475 = vmatpush.bf16.msra.mxu0 0
        %476 = vmatpush.bf16.msra.mxu0 0
        %477 = vmatpush.bf16.msra.mxu0 %v465
        %478 = vmatpush.bf16.msra.mxu0 %v464
        %479 = vmatmul.bf16.gmra.mxu0 %v469
        %v480 = vpop.f32.mrf.mxu0
        %v481 = vadd.f32 0.0, %v480
        %v482 = vpop.f32.mrf.mxu0
        %483 = vdwg.mxu0
        %v484 = vadd.f32 %v440, %v481
        %s485 = scalar_lea.vmem %s1, 96
        %v486 = vld [vmem:[%s485] sm:$0xf]
        %v487 = vld [vmem:[%s485 + $0x4] sm:$0xf]
        %v488 = vld [vmem:[%s485 + $0x8] sm:$0xf]
        %v489 = vld [vmem:[%s485 + $0xc] sm:$0xf]
        %v490 = vrot.slane %v448, 1
        %v495 = vunpack.c.l.b16 %v486
        %v496 = vunpack.c.l.b16 %v487
        %v497 = vunpack.c.l.b16 %v488
        %v498 = vunpack.c.l.b16 %v489
        %v499 = vpack.c.b16 %v496, %v495
        %v500 = vpack.c.b16 %v498, %v497
        %v504 = vsel %vm286, %v490, 0
        %506 = vmatpush.bf16.msra.mxu0 0
        %507 = vmatpush.bf16.msra.mxu0 0
        %508 = vmatpush.bf16.msra.mxu0 0
        %509 = vmatpush.bf16.msra.mxu0 0
        %510 = vmatpush.bf16.msra.mxu0 0
        %511 = vmatpush.bf16.msra.mxu0 0
        %512 = vmatpush.bf16.msra.mxu0 %v500
        %513 = vmatpush.bf16.msra.mxu0 %v499
        %514 = vmatmul.bf16.gmra.mxu0 %v504
        %v515 = vpop.f32.mrf.mxu0
        %v516 = vadd.f32 0.0, %v515
        %v517 = vpop.f32.mrf.mxu0
        %518 = vdwg.mxu0
        %v519 = vadd.f32 %v484, %v516
        %s520 = scalar_lea.vmem %s1, 112
        %v521 = vld [vmem:[%s520] sm:$0xf]
        %v522 = vld [vmem:[%s520 + $0x4] sm:$0xf]
        %v523 = vld [vmem:[%s520 + $0x8] sm:$0xf]
        %v524 = vld [vmem:[%s520 + $0xc] sm:$0xf]
        %v525 = vrot.slane %v450, 1
        %v526 = vrot.slane %v452, 2
        %v527 = vor.u32 %v525, %v526
        %v532 = vunpack.c.l.b16 %v521
        %v533 = vunpack.c.l.b16 %v522
        %v534 = vunpack.c.l.b16 %v523
        %v535 = vunpack.c.l.b16 %v524
        %v536 = vpack.c.b16 %v533, %v532
        %v537 = vpack.c.b16 %v535, %v534
        %v541 = vsel %vm286, %v527, 0
        %543 = vmatpush.bf16.msra.mxu0 0
        %544 = vmatpush.bf16.msra.mxu0 0
        %545 = vmatpush.bf16.msra.mxu0 0
        %546 = vmatpush.bf16.msra.mxu0 0
        %547 = vmatpush.bf16.msra.mxu0 0
        %548 = vmatpush.bf16.msra.mxu0 0
        %549 = vmatpush.bf16.msra.mxu0 %v537
        %550 = vmatpush.bf16.msra.mxu0 %v536
        %551 = vmatmul.bf16.gmra.mxu0 %v541
        %v552 = vpop.f32.mrf.mxu0
        %v553 = vadd.f32 0.0, %v552
        %v554 = vpop.f32.mrf.mxu0
        %555 = vdwg.mxu0
        %v556 = vadd.f32 %v519, %v553
        %s557 = sadd.s32 %s245, 2
        %s558 = smul.addr %s557, 4
        %s559 = scalar_lea.vmem %s230, %s558
        %v560 = vld [vmem:[%s559] sm:$0x7]
        %s561 = scalar_lea.vmem %s1, 128
        %v562 = vld [vmem:[%s561] sm:$0xf]
        %v563 = vld [vmem:[%s561 + $0x4] sm:$0xf]
        %v564 = vld [vmem:[%s561 + $0x8] sm:$0xf]
        %v565 = vld [vmem:[%s561 + $0xc] sm:$0xf]
        %v570 = vunpack.c.l.b16 %v562
        %v571 = vunpack.c.l.b16 %v563
        %v572 = vunpack.c.l.b16 %v564
        %v573 = vunpack.c.l.b16 %v565
        %v574 = vpack.c.b16 %v571, %v570
        %v575 = vpack.c.b16 %v573, %v572
        %v579 = vsel %vm286, %v560, 0
        %581 = vmatpush.bf16.msra.mxu0 0
        %582 = vmatpush.bf16.msra.mxu0 0
        %583 = vmatpush.bf16.msra.mxu0 0
        %584 = vmatpush.bf16.msra.mxu0 0
        %585 = vmatpush.bf16.msra.mxu0 0
        %586 = vmatpush.bf16.msra.mxu0 0
        %587 = vmatpush.bf16.msra.mxu0 %v575
        %588 = vmatpush.bf16.msra.mxu0 %v574
        %589 = vmatmul.bf16.gmra.mxu0 %v579
        %v590 = vpop.f32.mrf.mxu0
        %v591 = vadd.f32 0.0, %v590
        %v592 = vpop.f32.mrf.mxu0
        %593 = vdwg.mxu0
        %v594 = vadd.f32 %v556, %v591
        %s595 = scalar_lea.vmem %s1, 144
        %v596 = vld [vmem:[%s595] sm:$0xf]
        %v597 = vld [vmem:[%s595 + $0x4] sm:$0xf]
        %v598 = vld [vmem:[%s595 + $0x8] sm:$0xf]
        %v599 = vld [vmem:[%s595 + $0xc] sm:$0xf]
        %v601 = vunpack.c.l.b16 %v560
        %v602 = vpack.c.b16 %v601, %v601
        %v604 = vshrl.u32 %v602, 16
        %v606 = vshll.u32 %v602, 16
        %v608 = vrot.slane %v606, 1
        %v609 = vor.u32 %v604, %v608
        %v614 = vunpack.c.l.b16 %v596
        %v615 = vunpack.c.l.b16 %v597
        %v616 = vunpack.c.l.b16 %v598
        %v617 = vunpack.c.l.b16 %v599
        %v618 = vpack.c.b16 %v615, %v614
        %v619 = vpack.c.b16 %v617, %v616
        %v623 = vsel %vm286, %v609, 0
        %625 = vmatpush.bf16.msra.mxu0 0
        %626 = vmatpush.bf16.msra.mxu0 0
        %627 = vmatpush.bf16.msra.mxu0 0
        %628 = vmatpush.bf16.msra.mxu0 0
        %629 = vmatpush.bf16.msra.mxu0 0
        %630 = vmatpush.bf16.msra.mxu0 0
        %631 = vmatpush.bf16.msra.mxu0 %v619
        %632 = vmatpush.bf16.msra.mxu0 %v618
        %633 = vmatmul.bf16.gmra.mxu0 %v623
        %v634 = vpop.f32.mrf.mxu0
        %v635 = vadd.f32 0.0, %v634
        %v636 = vpop.f32.mrf.mxu0
        %637 = vdwg.mxu0
        %v638 = vadd.f32 %v594, %v635
        %s639 = scalar_lea.vmem %s1, 160
        %v640 = vld [vmem:[%s639] sm:$0xf]
        %v641 = vld [vmem:[%s639 + $0x4] sm:$0xf]
        %v642 = vld [vmem:[%s639 + $0x8] sm:$0xf]
        %v643 = vld [vmem:[%s639 + $0xc] sm:$0xf]
        %v644 = vrot.slane %v602, 1
        %v649 = vunpack.c.l.b16 %v640
        %v650 = vunpack.c.l.b16 %v641
        %v651 = vunpack.c.l.b16 %v642
        %v652 = vunpack.c.l.b16 %v643
        %v653 = vpack.c.b16 %v650, %v649
        %v654 = vpack.c.b16 %v652, %v651
        %v658 = vsel %vm286, %v644, 0
        %660 = vmatpush.bf16.msra.mxu0 0
        %661 = vmatpush.bf16.msra.mxu0 0
        %662 = vmatpush.bf16.msra.mxu0 0
        %663 = vmatpush.bf16.msra.mxu0 0
        %664 = vmatpush.bf16.msra.mxu0 0
        %665 = vmatpush.bf16.msra.mxu0 0
        %666 = vmatpush.bf16.msra.mxu0 %v654
        %667 = vmatpush.bf16.msra.mxu0 %v653
        %668 = vmatmul.bf16.gmra.mxu0 %v658
        %v669 = vpop.f32.mrf.mxu0
        %v670 = vadd.f32 0.0, %v669
        %v671 = vpop.f32.mrf.mxu0
        %672 = vdwg.mxu0
        %v673 = vadd.f32 %v638, %v670
        %s674 = scalar_lea.vmem %s1, 176
        %v675 = vld [vmem:[%s674] sm:$0xf]
        %v676 = vld [vmem:[%s674 + $0x4] sm:$0xf]
        %v677 = vld [vmem:[%s674 + $0x8] sm:$0xf]
        %v678 = vld [vmem:[%s674 + $0xc] sm:$0xf]
        %v679 = vrot.slane %v604, 1
        %v680 = vrot.slane %v606, 2
        %v681 = vor.u32 %v679, %v680
        %v686 = vunpack.c.l.b16 %v675
        %v687 = vunpack.c.l.b16 %v676
        %v688 = vunpack.c.l.b16 %v677
        %v689 = vunpack.c.l.b16 %v678
        %v690 = vpack.c.b16 %v687, %v686
        %v691 = vpack.c.b16 %v689, %v688
        %v695 = vsel %vm286, %v681, 0
        %697 = vmatpush.bf16.msra.mxu0 0
        %698 = vmatpush.bf16.msra.mxu0 0
        %699 = vmatpush.bf16.msra.mxu0 0
        %700 = vmatpush.bf16.msra.mxu0 0
        %701 = vmatpush.bf16.msra.mxu0 0
        %702 = vmatpush.bf16.msra.mxu0 0
        %703 = vmatpush.bf16.msra.mxu0 %v691
        %704 = vmatpush.bf16.msra.mxu0 %v690
        %705 = vmatmul.bf16.gmra.mxu0 %v695
        %v706 = vpop.f32.mrf.mxu0
        %v707 = vadd.f32 0.0, %v706
        %v708 = vpop.f32.mrf.mxu0
        %709 = vdwg.mxu0
        %v710 = vadd.f32 %v673, %v707
        %s711 = sadd.s32 %s245, 3
        %s712 = smul.addr %s711, 4
        %s713 = scalar_lea.vmem %s230, %s712
        %v714 = vld [vmem:[%s713] sm:$0x7]
        %s715 = scalar_lea.vmem %s1, 192
        %v716 = vld [vmem:[%s715] sm:$0xf]
        %v717 = vld [vmem:[%s715 + $0x4] sm:$0xf]
        %v718 = vld [vmem:[%s715 + $0x8] sm:$0xf]
        %v719 = vld [vmem:[%s715 + $0xc] sm:$0xf]
        %v724 = vunpack.c.l.b16 %v716
        %v725 = vunpack.c.l.b16 %v717
        %v726 = vunpack.c.l.b16 %v718
        %v727 = vunpack.c.l.b16 %v719
        %v728 = vpack.c.b16 %v725, %v724
        %v729 = vpack.c.b16 %v727, %v726
        %v733 = vsel %vm286, %v714, 0
        %735 = vmatpush.bf16.msra.mxu0 0
        %736 = vmatpush.bf16.msra.mxu0 0
        %737 = vmatpush.bf16.msra.mxu0 0
        %738 = vmatpush.bf16.msra.mxu0 0
        %739 = vmatpush.bf16.msra.mxu0 0
        %740 = vmatpush.bf16.msra.mxu0 0
        %741 = vmatpush.bf16.msra.mxu0 %v729
        %742 = vmatpush.bf16.msra.mxu0 %v728
        %743 = vmatmul.bf16.gmra.mxu0 %v733
        %v744 = vpop.f32.mrf.mxu0
        %v745 = vadd.f32 0.0, %v744
        %v746 = vpop.f32.mrf.mxu0
        %747 = vdwg.mxu0
        %v748 = vadd.f32 %v710, %v745
        %s749 = scalar_lea.vmem %s1, 208
        %v750 = vld [vmem:[%s749] sm:$0xf]
        %v751 = vld [vmem:[%s749 + $0x4] sm:$0xf]
        %v752 = vld [vmem:[%s749 + $0x8] sm:$0xf]
        %v753 = vld [vmem:[%s749 + $0xc] sm:$0xf]
        %v755 = vunpack.c.l.b16 %v714
        %v756 = vpack.c.b16 %v755, %v755
        %v758 = vshrl.u32 %v756, 16
        %v760 = vshll.u32 %v756, 16
        %v762 = vrot.slane %v760, 1
        %v763 = vor.u32 %v758, %v762
        %v768 = vunpack.c.l.b16 %v750
        %v769 = vunpack.c.l.b16 %v751
        %v770 = vunpack.c.l.b16 %v752
        %v771 = vunpack.c.l.b16 %v753
        %v772 = vpack.c.b16 %v769, %v768
        %v773 = vpack.c.b16 %v771, %v770
        %v777 = vsel %vm286, %v763, 0
        %779 = vmatpush.bf16.msra.mxu0 0
        %780 = vmatpush.bf16.msra.mxu0 0
        %781 = vmatpush.bf16.msra.mxu0 0
        %782 = vmatpush.bf16.msra.mxu0 0
        %783 = vmatpush.bf16.msra.mxu0 0
        %784 = vmatpush.bf16.msra.mxu0 0
        %785 = vmatpush.bf16.msra.mxu0 %v773
        %786 = vmatpush.bf16.msra.mxu0 %v772
        %787 = vmatmul.bf16.gmra.mxu0 %v777
        %v788 = vpop.f32.mrf.mxu0
        %v789 = vadd.f32 0.0, %v788
        %v790 = vpop.f32.mrf.mxu0
        %791 = vdwg.mxu0
        %v792 = vadd.f32 %v748, %v789
        %s793 = scalar_lea.vmem %s1, 224
        %v794 = vld [vmem:[%s793] sm:$0xf]
        %v795 = vld [vmem:[%s793 + $0x4] sm:$0xf]
        %v796 = vld [vmem:[%s793 + $0x8] sm:$0xf]
        %v797 = vld [vmem:[%s793 + $0xc] sm:$0xf]
        %v798 = vrot.slane %v756, 1
        %v803 = vunpack.c.l.b16 %v794
        %v804 = vunpack.c.l.b16 %v795
        %v805 = vunpack.c.l.b16 %v796
        %v806 = vunpack.c.l.b16 %v797
        %v807 = vpack.c.b16 %v804, %v803
        %v808 = vpack.c.b16 %v806, %v805
        %v812 = vsel %vm286, %v798, 0
        %814 = vmatpush.bf16.msra.mxu0 0
        %815 = vmatpush.bf16.msra.mxu0 0
        %816 = vmatpush.bf16.msra.mxu0 0
        %817 = vmatpush.bf16.msra.mxu0 0
        %818 = vmatpush.bf16.msra.mxu0 0
        %819 = vmatpush.bf16.msra.mxu0 0
        %820 = vmatpush.bf16.msra.mxu0 %v808
        %821 = vmatpush.bf16.msra.mxu0 %v807
        %822 = vmatmul.bf16.gmra.mxu0 %v812
        %v823 = vpop.f32.mrf.mxu0
        %v824 = vadd.f32 0.0, %v823
        %v825 = vpop.f32.mrf.mxu0
        %826 = vdwg.mxu0
        %v827 = vadd.f32 %v792, %v824
        %s828 = scalar_lea.vmem %s1, 240
        %v829 = vld [vmem:[%s828] sm:$0xf]
        %v830 = vld [vmem:[%s828 + $0x4] sm:$0xf]
        %v831 = vld [vmem:[%s828 + $0x8] sm:$0xf]
        %v832 = vld [vmem:[%s828 + $0xc] sm:$0xf]
        %v833 = vrot.slane %v758, 1
        %v834 = vrot.slane %v760, 2
        %v835 = vor.u32 %v833, %v834
        %v840 = vunpack.c.l.b16 %v829
        %v841 = vunpack.c.l.b16 %v830
        %v842 = vunpack.c.l.b16 %v831
        %v843 = vunpack.c.l.b16 %v832
        %v844 = vpack.c.b16 %v841, %v840
        %v845 = vpack.c.b16 %v843, %v842
        %v849 = vsel %vm286, %v835, 0
        %851 = vmatpush.bf16.msra.mxu0 0
        %852 = vmatpush.bf16.msra.mxu0 0
        %853 = vmatpush.bf16.msra.mxu0 0
        %854 = vmatpush.bf16.msra.mxu0 0
        %855 = vmatpush.bf16.msra.mxu0 0
        %856 = vmatpush.bf16.msra.mxu0 0
        %857 = vmatpush.bf16.msra.mxu0 %v845
        %858 = vmatpush.bf16.msra.mxu0 %v844
        %859 = vmatmul.bf16.gmra.mxu0 %v849
        %v860 = vpop.f32.mrf.mxu0
        %v861 = vadd.f32 0.0, %v860
        %v862 = vpop.f32.mrf.mxu0
        %863 = vdwg.mxu0
        %v864 = vadd.f32 %v827, %v861
        %v866 = vperm.slane %v243, 0
        %v868 = vadd.f32 %v864, %v866
        %s869 = smul.u32 %s245, 4
        %s870 = scalar_lea.vmem %s235, %s869
        %871 = vst [vmem:[%s870] sm:$0x7] %v868
        %vm872 = vcmask 1042432
        %v873 = vsel %vm872, %v868, 0.0
        %v874 = vrot.slane %v873, 4
        %v875 = vadd.f32 %v873, %v874
        %v876 = vrot.slane %v875, 2
        %v877 = vadd.f32 %v875, %v876
        %v878 = vrot.slane %v877, 1
        %v879 = vadd.f32 %v877, %v878
        %v880 = vadd.f32 %v250, %v879
        %v881 = vmul.f32 %v868, %v868
        %v882 = vsel %vm872, %v881, 0.0
        %v883 = vrot.slane %v882, 4
        %v884 = vadd.f32 %v882, %v883
        %v885 = vrot.slane %v884, 2
        %v886 = vadd.f32 %v884, %v885
        %v887 = vrot.slane %v886, 1
        %v888 = vadd.f32 %v886, %v887
        %v889 = vadd.f32 %v251, %v888
      $region37: #{patchgan_forward.8} parent=31 // loop_footer
        %s249 = sadd.s32 1, %s245
      $region38: #{patchgan_forward.8} parent=31 // loop_footer_branch
        %244 = sbr.rel target = $region34
      $region39: #{patchgan_forward.8} parent=31 // loop_exit
        _
      %890 = vst [vmem:[%s238] sm:$0x1] %v250
      %891 = vst [vmem:[%s241] sm:$0x1] %v251
      %p892 = scmp.lt.s32.totalorder %s17, 1
      %s893 = scalar_select %p892, %s17, 1
      %s894 = smul.addr %s893, 3
      %s895 = smul.addr %s894, 4
      %s896 = scalar_lea.vmem %s3, %s895
      %p897 = scmp.lt.s32.totalorder %s17, 1
      %s898 = scalar_select %p897, %s17, 1
      %s899 = scalar_lea.vmem %s4, %s898
      %p900 = scmp.lt.s32.totalorder %s17, 1
      %s901 = scalar_select %p900, %s17, 1
      %s902 = scalar_lea.vmem %s5, %s901
      // Predicated region
      $region40: #{patchgan_forward.8} parent=31 // pred_check
        %p903 = pneg %p103
      $region41: #{patchgan_forward.8} parent=31 // pred_check_branch
        %905 = sbr.rel (%p903) target = $region43
      $region42: #{patchgan_forward.8} parent=31 // pred_region
        _
      $region43: #{patchgan_forward.8} parent=31 // pred_fallthru
        _
      // Predicated region
      $region44: #{patchgan_forward.8} parent=31 // pred_check
        %p906 = pneg %p129
      $region45: #{patchgan_forward.8} parent=31 // pred_check_branch
        %908 = sbr.rel (%p906) target = $region47
      $region46: #{patchgan_forward.8} parent=31 // pred_region
        _
      $region47: #{patchgan_forward.8} parent=31 // pred_fallthru
        _
      // Predicated region
      $region48: #{patchgan_forward.8} parent=31 // pred_check
        %p909 = pneg %p155
      $region49: #{patchgan_forward.8} parent=31 // pred_check_branch
        %911 = sbr.rel (%p909) target = $region51
      $region50: #{patchgan_forward.8} parent=31 // pred_region
        _
      $region51: #{patchgan_forward.8} parent=31 // pred_fallthru
        _
    $region32: #{patchgan_forward.8} parent=5 // pred_fallthru
      _
    %p912 = scmp.le.s32.totalorder 2, %s12
    // Predicated region
    $region52: #{patchgan_forward.8} parent=5 // pred_check
      %p913 = pneg %p912
    $region53: #{patchgan_forward.8} parent=5 // pred_check_branch
      %915 = sbr.rel (%p913) target = $region55
    $region54: #{patchgan_forward.8} parent=5 // pred_region
      %s916 = ssub.s32 %s12, 2
      // Predicated region
      $region56: #{patchgan_forward.8} parent=54 // pred_check
        %p917 = pneg %p109
      $region57: #{patchgan_forward.8} parent=54 // pred_check_branch
        %919 = sbr.rel (%p917) target = $region59
      $region58: #{patchgan_forward.8} parent=54 // pred_region
        %p920 = scmp.lt.s32.totalorder %s18, 1
        %s921 = scalar_select %p920, %s18, 1
        %s922 = smul.addr %s921, 3
        %s923 = smul.addr %s922, 4
        %s924 = scalar_lea.vmem %s3, %s923
      $region59: #{patchgan_forward.8} parent=54 // pred_fallthru
        _
      // Predicated region
      $region60: #{patchgan_forward.8} parent=54 // pred_check
        %p925 = pneg %p135
      $region61: #{patchgan_forward.8} parent=54 // pred_check_branch
        %927 = sbr.rel (%p925) target = $region63
      $region62: #{patchgan_forward.8} parent=54 // pred_region
        %p928 = scmp.lt.s32.totalorder %s18, 1
        %s929 = scalar_select %p928, %s18, 1
        %s930 = scalar_lea.vmem %s4, %s929
      $region63: #{patchgan_forward.8} parent=54 // pred_fallthru
        _
      // Predicated region
      $region64: #{patchgan_forward.8} parent=54 // pred_check
        %p931 = pneg %p161
      $region65: #{patchgan_forward.8} parent=54 // pred_check_branch
        %933 = sbr.rel (%p931) target = $region67
      $region66: #{patchgan_forward.8} parent=54 // pred_region
        %p934 = scmp.lt.s32.totalorder %s18, 1
        %s935 = scalar_select %p934, %s18, 1
        %s936 = scalar_lea.vmem %s5, %s935
      $region67: #{patchgan_forward.8} parent=54 // pred_fallthru
        _
    $region55: #{patchgan_forward.8} parent=5 // pred_fallthru
      _
  $region6: #{patchgan_forward.8} parent=0 // loop_footer
    %s16 = sadd.s32 1, %s12
  $region7: #{patchgan_forward.8} parent=0 // loop_footer_branch
    %11 = sbr.rel target = $region3
  $region8: #{patchgan_forward.8} parent=0 // loop_exit
    _

// kernel: patchgan_forward.9
$region0: #{patchgan_forward.9}
  #allocation0 [shape = 'u32[]', space=smem, size = 0x4, offset = 0x4, fixed_abs, tag = 'smem constant byte address 0x4 - core index']
  #allocation1 [shape = 'u32[72,128]{1,0:T(1,128)}', space=vmem, size = 0x9000, scoped, tag = 'internal scratch']
  %s0 = inlined_call_operand.vmem [shape: bf16[2,5,5,64], index: 0, kind: input, shape index: {}]
  %s1 = inlined_call_operand.vmem [shape: bf16[16,64,128], index: 1, kind: input, shape index: {}]
  %s2 = inlined_call_operand.vmem [shape: f32[1,128], index: 2, kind: input, shape index: {}]
  %s3 = inlined_call_operand.vmem [shape: f32[2,2,2,128], index: 3, kind: output, shape index: {}]
  %s4 = sld [smem:[#allocation0]]
  $region52: #{patchgan_forward.9} parent=0
    _
  %s6 = ssub.s32 1, %s4
  %s7 = scalar_select 0, %s6, %s4
  loop: start=0, step=1, limit=4
  $region2: #{patchgan_forward.9} parent=0 // loop_pre_header
    _
  $region3: #{patchgan_forward.9} parent=0 // loop_header
    %s9 = sphi 0, %s13
    %p10 = scmp.ge.s32.totalorder %s9, 4
    %s19 = sphi 0, %s21
    %s22 = sphi 0, %s19
    %s23 = sphi 0, %s22
    %s39 = sphi 0, %s23
    %s43 = sphi 0, %s43
    %s45 = sphi 0, %s43
    %s46 = sphi 0, %s45
    %s60 = sphi 0, %s46
    %s64 = sphi 0, %s64
    %s66 = sphi 0, %s64
    %s67 = sphi 0, %s66
    %s81 = sphi 0, %s67
    %s87 = sphi 0, %s89
    %s90 = sphi 0, %s87
    %s91 = sphi 0, %s90
    %s107 = sphi 0, %s91
  $region4: #{patchgan_forward.9} parent=0 // loop_header_branch
    %12 = sbr.rel (%p10) target = $region8
  $region5: #{patchgan_forward.9} parent=0 // loop_body
    %s14 = ssub.s32 %s9, 1
    %s15 = ssub.s32 %s9, 2
    %s16 = sadd.s32 %s9, 1
    %s17 = ssub.s32 %s9, %s16
    %p18 = scmp.eq.s32.totalorder %s17, 0
    %s20 = sadd.s32 %s19, 1
    %s21 = scalar_select %p18, %s19, %s20
    %p24 = pneg %p18
    %p25 = scmp.eq.s32.totalorder %s9, 1
    %p26 = por %p24, %p25
    %p27 = scmp.ne.s32.totalorder %s19, %s22
    %p28 = scmp.eq.s32.totalorder %s9, 0
    %p29 = por %p27, %p28
    %p30 = scmp.ne.s32.totalorder %s19, %s22
    %p31 = scmp.eq.s32.totalorder %s14, 1
    %p32 = por %p30, %p31
    %p33 = scmp.ne.s32.totalorder %s22, %s23
    %p34 = scmp.eq.s32.totalorder %s14, 0
    %p35 = por %p33, %p34
    %p36 = scmp.ne.s32.totalorder %s22, %s23
    %p37 = scmp.eq.s32.totalorder %s15, 1
    %p38 = por %p36, %p37
    %p40 = scmp.ne.s32.totalorder %s23, %s39
    %p41 = scmp.eq.s32.totalorder %s15, 0
    %p42 = por %p40, %p41
    %s44 = sadd.s32 %s43, 1
    %p47 = scmp.eq.s32.totalorder %s9, 1
    %p48 = scmp.ne.s32.totalorder %s43, %s45
    %p49 = scmp.eq.s32.totalorder %s9, 0
    %p50 = por %p48, %p49
    %p51 = scmp.ne.s32.totalorder %s43, %s45
    %p52 = scmp.eq.s32.totalorder %s14, 1
    %p53 = por %p51, %p52
    %p54 = scmp.ne.s32.totalorder %s45, %s46
    %p55 = scmp.eq.s32.totalorder %s14, 0
    %p56 = por %p54, %p55
    %p57 = scmp.ne.s32.totalorder %s45, %s46
    %p58 = scmp.eq.s32.totalorder %s15, 1
    %p59 = por %p57, %p58
    %p61 = scmp.ne.s32.totalorder %s46, %s60
    %p62 = scmp.eq.s32.totalorder %s15, 0
    %p63 = por %p61, %p62
    %s65 = sadd.s32 %s64, 1
    %p68 = scmp.eq.s32.totalorder %s9, 1
    %p69 = scmp.ne.s32.totalorder %s64, %s66
    %p70 = scmp.eq.s32.totalorder %s9, 0
    %p71 = por %p69, %p70
    %p72 = scmp.ne.s32.totalorder %s64, %s66
    %p73 = scmp.eq.s32.totalorder %s14, 1
    %p74 = por %p72, %p73
    %p75 = scmp.ne.s32.totalorder %s66, %s67
    %p76 = scmp.eq.s32.totalorder %s14, 0
    %p77 = por %p75, %p76
    %p78 = scmp.ne.s32.totalorder %s66, %s67
    %p79 = scmp.eq.s32.totalorder %s15, 1
    %p80 = por %p78, %p79
    %p82 = scmp.ne.s32.totalorder %s67, %s81
    %p83 = scmp.eq.s32.totalorder %s15, 0
    %p84 = por %p82, %p83
    %s85 = ssub.s32 %s9, %s16
    %p86 = scmp.eq.s32.totalorder %s85, 0
    %s88 = sadd.s32 %s87, 1
    %s89 = scalar_select %p86, %s87, %s88
    %p92 = pneg %p86
    %p93 = scmp.eq.s32.totalorder %s9, 1
    %p94 = por %p92, %p93
    %p95 = scmp.ne.s32.totalorder %s87, %s90
    %p96 = scmp.eq.s32.totalorder %s9, 0
    %p97 = por %p95, %p96
    %p98 = scmp.ne.s32.totalorder %s87, %s90
    %p99 = scmp.eq.s32.totalorder %s14, 1
    %p100 = por %p98, %p99
    %p101 = scmp.ne.s32.totalorder %s90, %s91
    %p102 = scmp.eq.s32.totalorder %s14, 0
    %p103 = por %p101, %p102
    %p104 = scmp.ne.s32.totalorder %s90, %s91
    %p105 = scmp.eq.s32.totalorder %s15, 1
    %p106 = por %p104, %p105
    %p108 = scmp.ne.s32.totalorder %s91, %s107
    %p109 = scmp.eq.s32.totalorder %s15, 0
    %p110 = por %p108, %p109
    %p111 = scmp.le.s32.totalorder 1, %s9
    %p112 = scmp.lt.s32.totalorder %s9, 3
    %p113 = pnand %p111, %p112
    %p114 = pneg %p113
    // Predicated region
    $region9: #{patchgan_forward.9} parent=5 // pred_check
      _
    $region10: #{patchgan_forward.9} parent=5 // pred_check_branch
      %116 = sbr.rel (%p113) target = $region12
    $region11: #{patchgan_forward.9} parent=5 // pred_region
      %s117 = ssub.s32 %s9, 1
      // Predicated region
      $region13: #{patchgan_forward.9} parent=11 // pred_check
        %p118 = pneg %p56
      $region14: #{patchgan_forward.9} parent=11 // pred_check_branch
        %120 = sbr.rel (%p118) target = $region16
      $region15: #{patchgan_forward.9} parent=11 // pred_region
        _
      $region16: #{patchgan_forward.9} parent=11 // pred_fallthru
        _
      // Predicated region
      $region17: #{patchgan_forward.9} parent=11 // pred_check
        %p121 = pneg %p77
      $region18: #{patchgan_forward.9} parent=11 // pred_check_branch
        %123 = sbr.rel (%p121) target = $region20
      $region19: #{patchgan_forward.9} parent=11 // pred_region
        _
      $region20: #{patchgan_forward.9} parent=11 // pred_fallthru
        _
    $region12: #{patchgan_forward.9} parent=5 // pred_fallthru
      _
    %p124 = scmp.lt.s32.totalorder %s9, 2
    // Predicated region
    $region21: #{patchgan_forward.9} parent=5 // pred_check
      %p125 = pneg %p124
    $region22: #{patchgan_forward.9} parent=5 // pred_check_branch
      %127 = sbr.rel (%p125) target = $region24
    $region23: #{patchgan_forward.9} parent=5 // pred_region
      // Predicated region
      $region25: #{patchgan_forward.9} parent=23 // pred_check
        %p128 = pneg %p29
      $region26: #{patchgan_forward.9} parent=23 // pred_check_branch
        %130 = sbr.rel (%p128) target = $region28
      $region27: #{patchgan_forward.9} parent=23 // pred_region
        %p131 = scmp.lt.s32.totalorder %s9, 1
        %s132 = scalar_select %p131, %s9, 1
        %s133 = smul.addr %s132, 5
        %s134 = smul.addr %s133, 4
        %s135 = scalar_lea.vmem %s0, %s134
      $region28: #{patchgan_forward.9} parent=23 // pred_fallthru
        _
    $region24: #{patchgan_forward.9} parent=5 // pred_fallthru
      _
    %p136 = scmp.le.s32.totalorder 1, %s9
    %p137 = scmp.lt.s32.totalorder %s9, 3
    %p138 = pnand %p136, %p137
    %p139 = pneg %p138
    // Predicated region
    $region29: #{patchgan_forward.9} parent=5 // pred_check
      _
    $region30: #{patchgan_forward.9} parent=5 // pred_check_branch
      %141 = sbr.rel (%p138) target = $region32
    $region31: #{patchgan_forward.9} parent=5 // pred_region
      %s142 = ssub.s32 %s9, 1
      %p143 = scmp.lt.s32.totalorder %s14, 1
      %s144 = scalar_select %p143, %s14, 1
      %s145 = smul.addr %s144, 5
      %s146 = smul.addr %s145, 4
      %s147 = scalar_lea.vmem %s0, %s146
      %p148 = pneg %p35
      %p149 = pneg %p32
      %p150 = pneg %p56
      %p151 = pneg %p53
      %p152 = pneg %p77
      %p153 = pneg %p74
      %p154 = pneg %p103
      %p155 = pneg %p100
      %p156 = scmp.lt.s32.totalorder %s14, 1
      %s157 = scalar_select %p156, %s14, 1
      %s158 = smul.addr %s157, 2
      %s159 = smul.addr %s158, 2
      %s160 = scalar_lea.vmem %s3, %s159
      %p161 = scmp.lt.s32.totalorder %s14, 1
      %s162 = scalar_select %p161, %s14, 1
      %s163 = smul.addr %s162, 5
      %s164 = smul.addr %s163, 4
      %s165 = scalar_lea.vmem %s0, %s164
      %p166 = scmp.lt.s32.totalorder %s14, 1
      %s167 = scalar_select %p166, %s14, 1
      %s168 = smul.addr %s167, 2
      %s169 = smul.addr %s168, 2
      %s170 = scalar_lea.vmem %s3, %s169
      %v172 = vld [vmem:[%s2] sm:$0x1]
      loop: start=0, step=1, limit=2
      $region33: #{patchgan_forward.9} parent=31 // loop_pre_header
        _
      $region34: #{patchgan_forward.9} parent=31 // loop_header
        %s174 = sphi 0, %s178
        %p175 = scmp.ge.s32.totalorder %s174, 2
      $region35: #{patchgan_forward.9} parent=31 // loop_header_branch
        %177 = sbr.rel (%p175) target = $region39
      $region36: #{patchgan_forward.9} parent=31 // loop_body
        %s179 = smul.addr %s174, 4
        %s180 = scalar_lea.vmem %s165, %s179
        %v181 = vld [vmem:[%s180] sm:$0x7]
        %v182 = vld [vmem:[%s1] sm:$0xf]
        %v183 = vld [vmem:[%s1 + $0x4] sm:$0xf]
        %v184 = vld [vmem:[%s1 + $0x8] sm:$0xf]
        %v185 = vld [vmem:[%s1 + $0xc] sm:$0xf]
        %v186 = vld [vmem:[%s1 + $0x10] sm:$0xf]
        %v187 = vld [vmem:[%s1 + $0x14] sm:$0xf]
        %v188 = vld [vmem:[%s1 + $0x18] sm:$0xf]
        %v189 = vld [vmem:[%s1 + $0x1c] sm:$0xf]
        %s190 = scalar_lea.vmem %s1, 32
        %v191 = vld [vmem:[%s190] sm:$0xf]
        %v192 = vld [vmem:[%s190 + $0x4] sm:$0xf]
        %v193 = vld [vmem:[%s190 + $0x8] sm:$0xf]
        %v194 = vld [vmem:[%s190 + $0xc] sm:$0xf]
        %v195 = vld [vmem:[%s190 + $0x10] sm:$0xf]
        %v196 = vld [vmem:[%s190 + $0x14] sm:$0xf]
        %v197 = vld [vmem:[%s190 + $0x18] sm:$0xf]
        %v198 = vld [vmem:[%s190 + $0x1c] sm:$0xf]
        %v200 = vunpack.c.l.b16 %v181
        %v201 = vpack.c.b16 %v200, %v200
        %v203 = vshrl.u32 %v201, 16
        %v205 = vshll.u32 %v201, 16
        %v207 = vrot.slane %v205, 1
        %v208 = vor.u32 %v203, %v207
        %v217 = vunpack.c.l.b16 %v191
        %v218 = vunpack.c.l.b16 %v192
        %v219 = vunpack.c.l.b16 %v193
        %v220 = vunpack.c.l.b16 %v194
        %v221 = vunpack.c.l.b16 %v195
        %v222 = vunpack.c.l.b16 %v196
        %v223 = vunpack.c.l.b16 %v197
        %v224 = vunpack.c.l.b16 %v198
        %v225 = vpack.c.b16 %v218, %v217
        %v226 = vpack.c.b16 %v220, %v219
        %v227 = vpack.c.b16 %v222, %v221
        %v228 = vpack.c.b16 %v224, %v223
        %vm233 = vcmask 523264
        %v235 = vsel %vm233, %v208, 0
        %237 = vmatpush.bf16.msra.mxu0 0
        %238 = vmatpush.bf16.msra.mxu0 0
        %239 = vmatpush.bf16.msra.mxu0 0
        %240 = vmatpush.bf16.msra.mxu0 0
        %241 = vmatpush.bf16.msra.mxu0 %v228
        %242 = vmatpush.bf16.msra.mxu0 %v227
        %243 = vmatpush.bf16.msra.mxu0 %v226
        %244 = vmatpush.bf16.msra.mxu0 %v225
        %245 = vmatmul.bf16.gmra.mxu0 %v235
        %v246 = vpop.f32.mrf.mxu0
        %v247 = vadd.f32 0.0, %v246
        %v248 = vpop.f32.mrf.mxu0
        %249 = vdwg.mxu0
        %v258 = vunpack.c.l.b16 %v182
        %v259 = vunpack.c.l.b16 %v183
        %v260 = vunpack.c.l.b16 %v184
        %v261 = vunpack.c.l.b16 %v185
        %v262 = vunpack.c.l.b16 %v186
        %v263 = vunpack.c.l.b16 %v187
        %v264 = vunpack.c.l.b16 %v188
        %v265 = vunpack.c.l.b16 %v189
        %v266 = vpack.c.b16 %v259, %v258
        %v267 = vpack.c.b16 %v261, %v260
        %v268 = vpack.c.b16 %v263, %v262
        %v269 = vpack.c.b16 %v265, %v264
        %v275 = vsel %vm233, %v181, 0
        %277 = vmatpush.bf16.msra.mxu0 0
        %278 = vmatpush.bf16.msra.mxu0 0
        %279 = vmatpush.bf16.msra.mxu0 0
        %280 = vmatpush.bf16.msra.mxu0 0
        %281 = vmatpush.bf16.msra.mxu0 %v269
        %282 = vmatpush.bf16.msra.mxu0 %v268
        %283 = vmatpush.bf16.msra.mxu0 %v267
        %284 = vmatpush.bf16.msra.mxu0 %v266
        %285 = vmatmul.bf16.gmra.mxu0 %v275
        %v286 = vpop.f32.mrf.mxu0
        %v287 = vadd.f32 %v247, %v286
        %v288 = vpop.f32.mrf.mxu0
        %289 = vdwg.mxu0
        %s290 = scalar_lea.vmem %s1, 64
        %v291 = vld [vmem:[%s290] sm:$0xf]
        %v292 = vld [vmem:[%s290 + $0x4] sm:$0xf]
        %v293 = vld [vmem:[%s290 + $0x8] sm:$0xf]
        %v294 = vld [vmem:[%s290 + $0xc] sm:$0xf]
        %v295 = vld [vmem:[%s290 + $0x10] sm:$0xf]
        %v296 = vld [vmem:[%s290 + $0x14] sm:$0xf]
        %v297 = vld [vmem:[%s290 + $0x18] sm:$0xf]
        %v298 = vld [vmem:[%s290 + $0x1c] sm:$0xf]
        %v299 = vrot.slane %v201, 1
        %v308 = vunpack.c.l.b16 %v291
        %v309 = vunpack.c.l.b16 %v292
        %v310 = vunpack.c.l.b16 %v293
        %v311 = vunpack.c.l.b16 %v294
        %v312 = vunpack.c.l.b16 %v295
        %v313 = vunpack.c.l.b16 %v296
        %v314 = vunpack.c.l.b16 %v297
        %v315 = vunpack.c.l.b16 %v298
        %v316 = vpack.c.b16 %v309, %v308
        %v317 = vpack.c.b16 %v311, %v310
        %v318 = vpack.c.b16 %v313, %v312
        %v319 = vpack.c.b16 %v315, %v314
        %v325 = vsel %vm233, %v299, 0
        %327 = vmatpush.bf16.msra.mxu0 0
        %328 = vmatpush.bf16.msra.mxu0 0
        %329 = vmatpush.bf16.msra.mxu0 0
        %330 = vmatpush.bf16.msra.mxu0 0
        %331 = vmatpush.bf16.msra.mxu0 %v319
        %332 = vmatpush.bf16.msra.mxu0 %v318
        %333 = vmatpush.bf16.msra.mxu0 %v317
        %334 = vmatpush.bf16.msra.mxu0 %v316
        %335 = vmatmul.bf16.gmra.mxu0 %v325
        %v336 = vpop.f32.mrf.mxu0
        %v337 = vadd.f32 0.0, %v336
        %v338 = vpop.f32.mrf.mxu0
        %339 = vdwg.mxu0
        %v340 = vadd.f32 %v287, %v337
        %s341 = scalar_lea.vmem %s1, 96
        %v342 = vld [vmem:[%s341] sm:$0xf]
        %v343 = vld [vmem:[%s341 + $0x4] sm:$0xf]
        %v344 = vld [vmem:[%s341 + $0x8] sm:$0xf]
        %v345 = vld [vmem:[%s341 + $0xc] sm:$0xf]
        %v346 = vld [vmem:[%s341 + $0x10] sm:$0xf]
        %v347 = vld [vmem:[%s341 + $0x14] sm:$0xf]
        %v348 = vld [vmem:[%s341 + $0x18] sm:$0xf]
        %v349 = vld [vmem:[%s341 + $0x1c] sm:$0xf]
        %v350 = vrot.slane %v203, 1
        %v351 = vrot.slane %v205, 2
        %v352 = vor.u32 %v350, %v351
        %v361 = vunpack.c.l.b16 %v342
        %v362 = vunpack.c.l.b16 %v343
        %v363 = vunpack.c.l.b16 %v344
        %v364 = vunpack.c.l.b16 %v345
        %v365 = vunpack.c.l.b16 %v346
        %v366 = vunpack.c.l.b16 %v347
        %v367 = vunpack.c.l.b16 %v348
        %v368 = vunpack.c.l.b16 %v349
        %v369 = vpack.c.b16 %v362, %v361
        %v370 = vpack.c.b16 %v364, %v363
        %v371 = vpack.c.b16 %v366, %v365
        %v372 = vpack.c.b16 %v368, %v367
        %v378 = vsel %vm233, %v352, 0
        %380 = vmatpush.bf16.msra.mxu0 0
        %381 = vmatpush.bf16.msra.mxu0 0
        %382 = vmatpush.bf16.msra.mxu0 0
        %383 = vmatpush.bf16.msra.mxu0 0
        %384 = vmatpush.bf16.msra.mxu0 %v372
        %385 = vmatpush.bf16.msra.mxu0 %v371
        %386 = vmatpush.bf16.msra.mxu0 %v370
        %387 = vmatpush.bf16.msra.mxu0 %v369
        %388 = vmatmul.bf16.gmra.mxu0 %v378
        %v389 = vpop.f32.mrf.mxu0
        %v390 = vadd.f32 0.0, %v389
        %v391 = vpop.f32.mrf.mxu0
        %392 = vdwg.mxu0
        %v393 = vadd.f32 %v340, %v390
        %s394 = sadd.s32 %s174, 1
        %s395 = smul.addr %s394, 4
        %s396 = scalar_lea.vmem %s165, %s395
        %v397 = vld [vmem:[%s396] sm:$0x7]
        %s398 = scalar_lea.vmem %s1, 128
        %v399 = vld [vmem:[%s398] sm:$0xf]
        %v400 = vld [vmem:[%s398 + $0x4] sm:$0xf]
        %v401 = vld [vmem:[%s398 + $0x8] sm:$0xf]
        %v402 = vld [vmem:[%s398 + $0xc] sm:$0xf]
        %v403 = vld [vmem:[%s398 + $0x10] sm:$0xf]
        %v404 = vld [vmem:[%s398 + $0x14] sm:$0xf]
        %v405 = vld [vmem:[%s398 + $0x18] sm:$0xf]
        %v406 = vld [vmem:[%s398 + $0x1c] sm:$0xf]
        %v415 = vunpack.c.l.b16 %v399
        %v416 = vunpack.c.l.b16 %v400
        %v417 = vunpack.c.l.b16 %v401
        %v418 = vunpack.c.l.b16 %v402
        %v419 = vunpack.c.l.b16 %v403
        %v420 = vunpack.c.l.b16 %v404
        %v421 = vunpack.c.l.b16 %v405
        %v422 = vunpack.c.l.b16 %v406
        %v423 = vpack.c.b16 %v416, %v415
        %v424 = vpack.c.b16 %v418, %v417
        %v425 = vpack.c.b16 %v420, %v419
        %v426 = vpack.c.b16 %v422, %v421
        %v432 = vsel %vm233, %v397, 0
        %434 = vmatpush.bf16.msra.mxu0 0
        %435 = vmatpush.bf16.msra.mxu0 0
        %436 = vmatpush.bf16.msra.mxu0 0
        %437 = vmatpush.bf16.msra.mxu0 0
        %438 = vmatpush.bf16.msra.mxu0 %v426
        %439 = vmatpush.bf16.msra.mxu0 %v425
        %440 = vmatpush.bf16.msra.mxu0 %v424
        %441 = vmatpush.bf16.msra.mxu0 %v423
        %442 = vmatmul.bf16.gmra.mxu0 %v432
        %v443 = vpop.f32.mrf.mxu0
        %v444 = vadd.f32 0.0, %v443
        %v445 = vpop.f32.mrf.mxu0
        %446 = vdwg.mxu0
        %v447 = vadd.f32 %v393, %v444
        %s448 = scalar_lea.vmem %s1, 160
        %v449 = vld [vmem:[%s448] sm:$0xf]
        %v450 = vld [vmem:[%s448 + $0x4] sm:$0xf]
        %v451 = vld [vmem:[%s448 + $0x8] sm:$0xf]
        %v452 = vld [vmem:[%s448 + $0xc] sm:$0xf]
        %v453 = vld [vmem:[%s448 + $0x10] sm:$0xf]
        %v454 = vld [vmem:[%s448 + $0x14] sm:$0xf]
        %v455 = vld [vmem:[%s448 + $0x18] sm:$0xf]
        %v456 = vld [vmem:[%s448 + $0x1c] sm:$0xf]
        %v458 = vunpack.c.l.b16 %v397
        %v459 = vpack.c.b16 %v458, %v458
        %v461 = vshrl.u32 %v459, 16
        %v463 = vshll.u32 %v459, 16
        %v465 = vrot.slane %v463, 1
        %v466 = vor.u32 %v461, %v465
        %v475 = vunpack.c.l.b16 %v449
        %v476 = vunpack.c.l.b16 %v450
        %v477 = vunpack.c.l.b16 %v451
        %v478 = vunpack.c.l.b16 %v452
        %v479 = vunpack.c.l.b16 %v453
        %v480 = vunpack.c.l.b16 %v454
        %v481 = vunpack.c.l.b16 %v455
        %v482 = vunpack.c.l.b16 %v456
        %v483 = vpack.c.b16 %v476, %v475
        %v484 = vpack.c.b16 %v478, %v477
        %v485 = vpack.c.b16 %v480, %v479
        %v486 = vpack.c.b16 %v482, %v481
        %v492 = vsel %vm233, %v466, 0
        %494 = vmatpush.bf16.msra.mxu0 0
        %495 = vmatpush.bf16.msra.mxu0 0
        %496 = vmatpush.bf16.msra.mxu0 0
        %497 = vmatpush.bf16.msra.mxu0 0
        %498 = vmatpush.bf16.msra.mxu0 %v486
        %499 = vmatpush.bf16.msra.mxu0 %v485
        %500 = vmatpush.bf16.msra.mxu0 %v484
        %501 = vmatpush.bf16.msra.mxu0 %v483
        %502 = vmatmul.bf16.gmra.mxu0 %v492
        %v503 = vpop.f32.mrf.mxu0
        %v504 = vadd.f32 0.0, %v503
        %v505 = vpop.f32.mrf.mxu0
        %506 = vdwg.mxu0
        %v507 = vadd.f32 %v447, %v504
        %s508 = scalar_lea.vmem %s1, 192
        %v509 = vld [vmem:[%s508] sm:$0xf]
        %v510 = vld [vmem:[%s508 + $0x4] sm:$0xf]
        %v511 = vld [vmem:[%s508 + $0x8] sm:$0xf]
        %v512 = vld [vmem:[%s508 + $0xc] sm:$0xf]
        %v513 = vld [vmem:[%s508 + $0x10] sm:$0xf]
        %v514 = vld [vmem:[%s508 + $0x14] sm:$0xf]
        %v515 = vld [vmem:[%s508 + $0x18] sm:$0xf]
        %v516 = vld [vmem:[%s508 + $0x1c] sm:$0xf]
        %v517 = vrot.slane %v459, 1
        %v526 = vunpack.c.l.b16 %v509
        %v527 = vunpack.c.l.b16 %v510
        %v528 = vunpack.c.l.b16 %v511
        %v529 = vunpack.c.l.b16 %v512
        %v530 = vunpack.c.l.b16 %v513
        %v531 = vunpack.c.l.b16 %v514
        %v532 = vunpack.c.l.b16 %v515
        %v533 = vunpack.c.l.b16 %v516
        %v534 = vpack.c.b16 %v527, %v526
        %v535 = vpack.c.b16 %v529, %v528
        %v536 = vpack.c.b16 %v531, %v530
        %v537 = vpack.c.b16 %v533, %v532
        %v543 = vsel %vm233, %v517, 0
        %545 = vmatpush.bf16.msra.mxu0 0
        %546 = vmatpush.bf16.msra.mxu0 0
        %547 = vmatpush.bf16.msra.mxu0 0
        %548 = vmatpush.bf16.msra.mxu0 0
        %549 = vmatpush.bf16.msra.mxu0 %v537
        %550 = vmatpush.bf16.msra.mxu0 %v536
        %551 = vmatpush.bf16.msra.mxu0 %v535
        %552 = vmatpush.bf16.msra.mxu0 %v534
        %553 = vmatmul.bf16.gmra.mxu0 %v543
        %v554 = vpop.f32.mrf.mxu0
        %v555 = vadd.f32 0.0, %v554
        %v556 = vpop.f32.mrf.mxu0
        %557 = vdwg.mxu0
        %v558 = vadd.f32 %v507, %v555
        %s559 = scalar_lea.vmem %s1, 224
        %v560 = vld [vmem:[%s559] sm:$0xf]
        %v561 = vld [vmem:[%s559 + $0x4] sm:$0xf]
        %v562 = vld [vmem:[%s559 + $0x8] sm:$0xf]
        %v563 = vld [vmem:[%s559 + $0xc] sm:$0xf]
        %v564 = vld [vmem:[%s559 + $0x10] sm:$0xf]
        %v565 = vld [vmem:[%s559 + $0x14] sm:$0xf]
        %v566 = vld [vmem:[%s559 + $0x18] sm:$0xf]
        %v567 = vld [vmem:[%s559 + $0x1c] sm:$0xf]
        %v568 = vrot.slane %v461, 1
        %v569 = vrot.slane %v463, 2
        %v570 = vor.u32 %v568, %v569
        %v579 = vunpack.c.l.b16 %v560
        %v580 = vunpack.c.l.b16 %v561
        %v581 = vunpack.c.l.b16 %v562
        %v582 = vunpack.c.l.b16 %v563
        %v583 = vunpack.c.l.b16 %v564
        %v584 = vunpack.c.l.b16 %v565
        %v585 = vunpack.c.l.b16 %v566
        %v586 = vunpack.c.l.b16 %v567
        %v587 = vpack.c.b16 %v580, %v579
        %v588 = vpack.c.b16 %v582, %v581
        %v589 = vpack.c.b16 %v584, %v583
        %v590 = vpack.c.b16 %v586, %v585
        %v596 = vsel %vm233, %v570, 0
        %598 = vmatpush.bf16.msra.mxu0 0
        %599 = vmatpush.bf16.msra.mxu0 0
        %600 = vmatpush.bf16.msra.mxu0 0
        %601 = vmatpush.bf16.msra.mxu0 0
        %602 = vmatpush.bf16.msra.mxu0 %v590
        %603 = vmatpush.bf16.msra.mxu0 %v589
        %604 = vmatpush.bf16.msra.mxu0 %v588
        %605 = vmatpush.bf16.msra.mxu0 %v587
        %606 = vmatmul.bf16.gmra.mxu0 %v596
        %v607 = vpop.f32.mrf.mxu0
        %v608 = vadd.f32 0.0, %v607
        %v609 = vpop.f32.mrf.mxu0
        %610 = vdwg.mxu0
        %v611 = vadd.f32 %v558, %v608
        %s612 = sadd.s32 %s174, 2
        %s613 = smul.addr %s612, 4
        %s614 = scalar_lea.vmem %s165, %s613
        %v615 = vld [vmem:[%s614] sm:$0x7]
        %s616 = scalar_lea.vmem %s1, 256
        %v617 = vld [vmem:[%s616] sm:$0xf]
        %v618 = vld [vmem:[%s616 + $0x4] sm:$0xf]
        %v619 = vld [vmem:[%s616 + $0x8] sm:$0xf]
        %v620 = vld [vmem:[%s616 + $0xc] sm:$0xf]
        %v621 = vld [vmem:[%s616 + $0x10] sm:$0xf]
        %v622 = vld [vmem:[%s616 + $0x14] sm:$0xf]
        %v623 = vld [vmem:[%s616 + $0x18] sm:$0xf]
        %v624 = vld [vmem:[%s616 + $0x1c] sm:$0xf]
        %v633 = vunpack.c.l.b16 %v617
        %v634 = vunpack.c.l.b16 %v618
        %v635 = vunpack.c.l.b16 %v619
        %v636 = vunpack.c.l.b16 %v620
        %v637 = vunpack.c.l.b16 %v621
        %v638 = vunpack.c.l.b16 %v622
        %v639 = vunpack.c.l.b16 %v623
        %v640 = vunpack.c.l.b16 %v624
        %v641 = vpack.c.b16 %v634, %v633
        %v642 = vpack.c.b16 %v636, %v635
        %v643 = vpack.c.b16 %v638, %v637
        %v644 = vpack.c.b16 %v640, %v639
        %v650 = vsel %vm233, %v615, 0
        %652 = vmatpush.bf16.msra.mxu0 0
        %653 = vmatpush.bf16.msra.mxu0 0
        %654 = vmatpush.bf16.msra.mxu0 0
        %655 = vmatpush.bf16.msra.mxu0 0
        %656 = vmatpush.bf16.msra.mxu0 %v644
        %657 = vmatpush.bf16.msra.mxu0 %v643
        %658 = vmatpush.bf16.msra.mxu0 %v642
        %659 = vmatpush.bf16.msra.mxu0 %v641
        %660 = vmatmul.bf16.gmra.mxu0 %v650
        %v661 = vpop.f32.mrf.mxu0
        %v662 = vadd.f32 0.0, %v661
        %v663 = vpop.f32.mrf.mxu0
        %664 = vdwg.mxu0
        %v665 = vadd.f32 %v611, %v662
        %s666 = scalar_lea.vmem %s1, 288
        %v667 = vld [vmem:[%s666] sm:$0xf]
        %v668 = vld [vmem:[%s666 + $0x4] sm:$0xf]
        %v669 = vld [vmem:[%s666 + $0x8] sm:$0xf]
        %v670 = vld [vmem:[%s666 + $0xc] sm:$0xf]
        %v671 = vld [vmem:[%s666 + $0x10] sm:$0xf]
        %v672 = vld [vmem:[%s666 + $0x14] sm:$0xf]
        %v673 = vld [vmem:[%s666 + $0x18] sm:$0xf]
        %v674 = vld [vmem:[%s666 + $0x1c] sm:$0xf]
        %v676 = vunpack.c.l.b16 %v615
        %v677 = vpack.c.b16 %v676, %v676
        %v679 = vshrl.u32 %v677, 16
        %v681 = vshll.u32 %v677, 16
        %v683 = vrot.slane %v681, 1
        %v684 = vor.u32 %v679, %v683
        %v693 = vunpack.c.l.b16 %v667
        %v694 = vunpack.c.l.b16 %v668
        %v695 = vunpack.c.l.b16 %v669
        %v696 = vunpack.c.l.b16 %v670
        %v697 = vunpack.c.l.b16 %v671
        %v698 = vunpack.c.l.b16 %v672
        %v699 = vunpack.c.l.b16 %v673
        %v700 = vunpack.c.l.b16 %v674
        %v701 = vpack.c.b16 %v694, %v693
        %v702 = vpack.c.b16 %v696, %v695
        %v703 = vpack.c.b16 %v698, %v697
        %v704 = vpack.c.b16 %v700, %v699
        %v710 = vsel %vm233, %v684, 0
        %712 = vmatpush.bf16.msra.mxu0 0
        %713 = vmatpush.bf16.msra.mxu0 0
        %714 = vmatpush.bf16.msra.mxu0 0
        %715 = vmatpush.bf16.msra.mxu0 0
        %716 = vmatpush.bf16.msra.mxu0 %v704
        %717 = vmatpush.bf16.msra.mxu0 %v703
        %718 = vmatpush.bf16.msra.mxu0 %v702
        %719 = vmatpush.bf16.msra.mxu0 %v701
        %720 = vmatmul.bf16.gmra.mxu0 %v710
        %v721 = vpop.f32.mrf.mxu0
        %v722 = vadd.f32 0.0, %v721
        %v723 = vpop.f32.mrf.mxu0
        %724 = vdwg.mxu0
        %v725 = vadd.f32 %v665, %v722
        %s726 = scalar_lea.vmem %s1, 320
        %v727 = vld [vmem:[%s726] sm:$0xf]
        %v728 = vld [vmem:[%s726 + $0x4] sm:$0xf]
        %v729 = vld [vmem:[%s726 + $0x8] sm:$0xf]
        %v730 = vld [vmem:[%s726 + $0xc] sm:$0xf]
        %v731 = vld [vmem:[%s726 + $0x10] sm:$0xf]
        %v732 = vld [vmem:[%s726 + $0x14] sm:$0xf]
        %v733 = vld [vmem:[%s726 + $0x18] sm:$0xf]
        %v734 = vld [vmem:[%s726 + $0x1c] sm:$0xf]
        %v735 = vrot.slane %v677, 1
        %v744 = vunpack.c.l.b16 %v727
        %v745 = vunpack.c.l.b16 %v728
        %v746 = vunpack.c.l.b16 %v729
        %v747 = vunpack.c.l.b16 %v730
        %v748 = vunpack.c.l.b16 %v731
        %v749 = vunpack.c.l.b16 %v732
        %v750 = vunpack.c.l.b16 %v733
        %v751 = vunpack.c.l.b16 %v734
        %v752 = vpack.c.b16 %v745, %v744
        %v753 = vpack.c.b16 %v747, %v746
        %v754 = vpack.c.b16 %v749, %v748
        %v755 = vpack.c.b16 %v751, %v750
        %v761 = vsel %vm233, %v735, 0
        %763 = vmatpush.bf16.msra.mxu0 0
        %764 = vmatpush.bf16.msra.mxu0 0
        %765 = vmatpush.bf16.msra.mxu0 0
        %766 = vmatpush.bf16.msra.mxu0 0
        %767 = vmatpush.bf16.msra.mxu0 %v755
        %768 = vmatpush.bf16.msra.mxu0 %v754
        %769 = vmatpush.bf16.msra.mxu0 %v753
        %770 = vmatpush.bf16.msra.mxu0 %v752
        %771 = vmatmul.bf16.gmra.mxu0 %v761
        %v772 = vpop.f32.mrf.mxu0
        %v773 = vadd.f32 0.0, %v772
        %v774 = vpop.f32.mrf.mxu0
        %775 = vdwg.mxu0
        %v776 = vadd.f32 %v725, %v773
        %s777 = scalar_lea.vmem %s1, 352
        %v778 = vld [vmem:[%s777] sm:$0xf]
        %v779 = vld [vmem:[%s777 + $0x4] sm:$0xf]
        %v780 = vld [vmem:[%s777 + $0x8] sm:$0xf]
        %v781 = vld [vmem:[%s777 + $0xc] sm:$0xf]
        %v782 = vld [vmem:[%s777 + $0x10] sm:$0xf]
        %v783 = vld [vmem:[%s777 + $0x14] sm:$0xf]
        %v784 = vld [vmem:[%s777 + $0x18] sm:$0xf]
        %v785 = vld [vmem:[%s777 + $0x1c] sm:$0xf]
        %v786 = vrot.slane %v679, 1
        %v787 = vrot.slane %v681, 2
        %v788 = vor.u32 %v786, %v787
        %v797 = vunpack.c.l.b16 %v778
        %v798 = vunpack.c.l.b16 %v779
        %v799 = vunpack.c.l.b16 %v780
        %v800 = vunpack.c.l.b16 %v781
        %v801 = vunpack.c.l.b16 %v782
        %v802 = vunpack.c.l.b16 %v783
        %v803 = vunpack.c.l.b16 %v784
        %v804 = vunpack.c.l.b16 %v785
        %v805 = vpack.c.b16 %v798, %v797
        %v806 = vpack.c.b16 %v800, %v799
        %v807 = vpack.c.b16 %v802, %v801
        %v808 = vpack.c.b16 %v804, %v803
        %v814 = vsel %vm233, %v788, 0
        %816 = vmatpush.bf16.msra.mxu0 0
        %817 = vmatpush.bf16.msra.mxu0 0
        %818 = vmatpush.bf16.msra.mxu0 0
        %819 = vmatpush.bf16.msra.mxu0 0
        %820 = vmatpush.bf16.msra.mxu0 %v808
        %821 = vmatpush.bf16.msra.mxu0 %v807
        %822 = vmatpush.bf16.msra.mxu0 %v806
        %823 = vmatpush.bf16.msra.mxu0 %v805
        %824 = vmatmul.bf16.gmra.mxu0 %v814
        %v825 = vpop.f32.mrf.mxu0
        %v826 = vadd.f32 0.0, %v825
        %v827 = vpop.f32.mrf.mxu0
        %828 = vdwg.mxu0
        %v829 = vadd.f32 %v776, %v826
        %s830 = sadd.s32 %s174, 3
        %s831 = smul.addr %s830, 4
        %s832 = scalar_lea.vmem %s165, %s831
        %v833 = vld [vmem:[%s832] sm:$0x7]
        %s834 = scalar_lea.vmem %s1, 384
        %v835 = vld [vmem:[%s834] sm:$0xf]
        %v836 = vld [vmem:[%s834 + $0x4] sm:$0xf]
        %v837 = vld [vmem:[%s834 + $0x8] sm:$0xf]
        %v838 = vld [vmem:[%s834 + $0xc] sm:$0xf]
        %v839 = vld [vmem:[%s834 + $0x10] sm:$0xf]
        %v840 = vld [vmem:[%s834 + $0x14] sm:$0xf]
        %v841 = vld [vmem:[%s834 + $0x18] sm:$0xf]
        %v842 = vld [vmem:[%s834 + $0x1c] sm:$0xf]
        %v851 = vunpack.c.l.b16 %v835
        %v852 = vunpack.c.l.b16 %v836
        %v853 = vunpack.c.l.b16 %v837
        %v854 = vunpack.c.l.b16 %v838
        %v855 = vunpack.c.l.b16 %v839
        %v856 = vunpack.c.l.b16 %v840
        %v857 = vunpack.c.l.b16 %v841
        %v858 = vunpack.c.l.b16 %v842
        %v859 = vpack.c.b16 %v852, %v851
        %v860 = vpack.c.b16 %v854, %v853
        %v861 = vpack.c.b16 %v856, %v855
        %v862 = vpack.c.b16 %v858, %v857
        %v868 = vsel %vm233, %v833, 0
        %870 = vmatpush.bf16.msra.mxu0 0
        %871 = vmatpush.bf16.msra.mxu0 0
        %872 = vmatpush.bf16.msra.mxu0 0
        %873 = vmatpush.bf16.msra.mxu0 0
        %874 = vmatpush.bf16.msra.mxu0 %v862
        %875 = vmatpush.bf16.msra.mxu0 %v861
        %876 = vmatpush.bf16.msra.mxu0 %v860
        %877 = vmatpush.bf16.msra.mxu0 %v859
        %878 = vmatmul.bf16.gmra.mxu0 %v868
        %v879 = vpop.f32.mrf.mxu0
        %v880 = vadd.f32 0.0, %v879
        %v881 = vpop.f32.mrf.mxu0
        %882 = vdwg.mxu0
        %v883 = vadd.f32 %v829, %v880
        %s884 = scalar_lea.vmem %s1, 416
        %v885 = vld [vmem:[%s884] sm:$0xf]
        %v886 = vld [vmem:[%s884 + $0x4] sm:$0xf]
        %v887 = vld [vmem:[%s884 + $0x8] sm:$0xf]
        %v888 = vld [vmem:[%s884 + $0xc] sm:$0xf]
        %v889 = vld [vmem:[%s884 + $0x10] sm:$0xf]
        %v890 = vld [vmem:[%s884 + $0x14] sm:$0xf]
        %v891 = vld [vmem:[%s884 + $0x18] sm:$0xf]
        %v892 = vld [vmem:[%s884 + $0x1c] sm:$0xf]
        %v894 = vunpack.c.l.b16 %v833
        %v895 = vpack.c.b16 %v894, %v894
        %v897 = vshrl.u32 %v895, 16
        %v899 = vshll.u32 %v895, 16
        %v901 = vrot.slane %v899, 1
        %v902 = vor.u32 %v897, %v901
        %v911 = vunpack.c.l.b16 %v885
        %v912 = vunpack.c.l.b16 %v886
        %v913 = vunpack.c.l.b16 %v887
        %v914 = vunpack.c.l.b16 %v888
        %v915 = vunpack.c.l.b16 %v889
        %v916 = vunpack.c.l.b16 %v890
        %v917 = vunpack.c.l.b16 %v891
        %v918 = vunpack.c.l.b16 %v892
        %v919 = vpack.c.b16 %v912, %v911
        %v920 = vpack.c.b16 %v914, %v913
        %v921 = vpack.c.b16 %v916, %v915
        %v922 = vpack.c.b16 %v918, %v917
        %v928 = vsel %vm233, %v902, 0
        %930 = vmatpush.bf16.msra.mxu0 0
        %931 = vmatpush.bf16.msra.mxu0 0
        %932 = vmatpush.bf16.msra.mxu0 0
        %933 = vmatpush.bf16.msra.mxu0 0
        %934 = vmatpush.bf16.msra.mxu0 %v922
        %935 = vmatpush.bf16.msra.mxu0 %v921
        %936 = vmatpush.bf16.msra.mxu0 %v920
        %937 = vmatpush.bf16.msra.mxu0 %v919
        %938 = vmatmul.bf16.gmra.mxu0 %v928
        %v939 = vpop.f32.mrf.mxu0
        %v940 = vadd.f32 0.0, %v939
        %v941 = vpop.f32.mrf.mxu0
        %942 = vdwg.mxu0
        %v943 = vadd.f32 %v883, %v940
        %s944 = scalar_lea.vmem %s1, 448
        %v945 = vld [vmem:[%s944] sm:$0xf]
        %v946 = vld [vmem:[%s944 + $0x4] sm:$0xf]
        %v947 = vld [vmem:[%s944 + $0x8] sm:$0xf]
        %v948 = vld [vmem:[%s944 + $0xc] sm:$0xf]
        %v949 = vld [vmem:[%s944 + $0x10] sm:$0xf]
        %v950 = vld [vmem:[%s944 + $0x14] sm:$0xf]
        %v951 = vld [vmem:[%s944 + $0x18] sm:$0xf]
        %v952 = vld [vmem:[%s944 + $0x1c] sm:$0xf]
        %v953 = vrot.slane %v895, 1
        %v962 = vunpack.c.l.b16 %v945
        %v963 = vunpack.c.l.b16 %v946
        %v964 = vunpack.c.l.b16 %v947
        %v965 = vunpack.c.l.b16 %v948
        %v966 = vunpack.c.l.b16 %v949
        %v967 = vunpack.c.l.b16 %v950
        %v968 = vunpack.c.l.b16 %v951
        %v969 = vunpack.c.l.b16 %v952
        %v970 = vpack.c.b16 %v963, %v962
        %v971 = vpack.c.b16 %v965, %v964
        %v972 = vpack.c.b16 %v967, %v966
        %v973 = vpack.c.b16 %v969, %v968
        %v979 = vsel %vm233, %v953, 0
        %981 = vmatpush.bf16.msra.mxu0 0
        %982 = vmatpush.bf16.msra.mxu0 0
        %983 = vmatpush.bf16.msra.mxu0 0
        %984 = vmatpush.bf16.msra.mxu0 0
        %985 = vmatpush.bf16.msra.mxu0 %v973
        %986 = vmatpush.bf16.msra.mxu0 %v972
        %987 = vmatpush.bf16.msra.mxu0 %v971
        %988 = vmatpush.bf16.msra.mxu0 %v970
        %989 = vmatmul.bf16.gmra.mxu0 %v979
        %v990 = vpop.f32.mrf.mxu0
        %v991 = vadd.f32 0.0, %v990
        %v992 = vpop.f32.mrf.mxu0
        %993 = vdwg.mxu0
        %v994 = vadd.f32 %v943, %v991
        %s995 = scalar_lea.vmem %s1, 480
        %v996 = vld [vmem:[%s995] sm:$0xf]
        %v997 = vld [vmem:[%s995 + $0x4] sm:$0xf]
        %v998 = vld [vmem:[%s995 + $0x8] sm:$0xf]
        %v999 = vld [vmem:[%s995 + $0xc] sm:$0xf]
        %v1000 = vld [vmem:[%s995 + $0x10] sm:$0xf]
        %v1001 = vld [vmem:[%s995 + $0x14] sm:$0xf]
        %v1002 = vld [vmem:[%s995 + $0x18] sm:$0xf]
        %v1003 = vld [vmem:[%s995 + $0x1c] sm:$0xf]
        %v1004 = vrot.slane %v897, 1
        %v1005 = vrot.slane %v899, 2
        %v1006 = vor.u32 %v1004, %v1005
        %v1015 = vunpack.c.l.b16 %v996
        %v1016 = vunpack.c.l.b16 %v997
        %v1017 = vunpack.c.l.b16 %v998
        %v1018 = vunpack.c.l.b16 %v999
        %v1019 = vunpack.c.l.b16 %v1000
        %v1020 = vunpack.c.l.b16 %v1001
        %v1021 = vunpack.c.l.b16 %v1002
        %v1022 = vunpack.c.l.b16 %v1003
        %v1023 = vpack.c.b16 %v1016, %v1015
        %v1024 = vpack.c.b16 %v1018, %v1017
        %v1025 = vpack.c.b16 %v1020, %v1019
        %v1026 = vpack.c.b16 %v1022, %v1021
        %v1032 = vsel %vm233, %v1006, 0
        %1034 = vmatpush.bf16.msra.mxu0 0
        %1035 = vmatpush.bf16.msra.mxu0 0
        %1036 = vmatpush.bf16.msra.mxu0 0
        %1037 = vmatpush.bf16.msra.mxu0 0
        %1038 = vmatpush.bf16.msra.mxu0 %v1026
        %1039 = vmatpush.bf16.msra.mxu0 %v1025
        %1040 = vmatpush.bf16.msra.mxu0 %v1024
        %1041 = vmatpush.bf16.msra.mxu0 %v1023
        %1042 = vmatmul.bf16.gmra.mxu0 %v1032
        %v1043 = vpop.f32.mrf.mxu0
        %v1044 = vadd.f32 0.0, %v1043
        %v1045 = vpop.f32.mrf.mxu0
        %1046 = vdwg.mxu0
        %v1047 = vadd.f32 %v994, %v1044
        %v1049 = vperm.slane %v172, 0
        %v1051 = vadd.f32 %v1047, %v1049
        %v1052 = vsub.f32 0.0, %v1051
        %v1053 = vmul.f32 %v1052, 1.442695
        %v1054 = vpow.pop %v1053
        %v1055 = vadd.f32 %v1054, 1.0
        %v1056 = vrcp.pop %v1055
        %v1057 = vmul.f32 %v1055, %v1056
        %v1058 = vsub.f32 1.0, %v1057
        %v1059 = vmul.f32 %v1056, %v1058
        %v1060 = vadd.f32 %v1056, %v1059
        %vm1061 = vweird.f32 %v1055
        %vm1062 = vweird.f32 %v1056
        %vm1063 = vmor %vm1061, %vm1062
        %v1064 = vsel %vm1063, %v1056, %v1060
        %v1065 = vand.u32 2147483647, %v1055
        %vm1066 = vcmp.eq.f32.partialorder %v1065, 8.507059e+37
        %v1067 = vand.u32 %v1055, 2147483648
        %v1068 = vor.u32 1.1754944e-38, %v1067
        %v1069 = vsel %vm1066, %v1068, %v1064
        %v1070 = vmul.f32 1.0, %v1069
        %s1071 = smul.u32 %s174, 2
        %s1072 = scalar_lea.vmem %s170, %s1071
        %1073 = vst [vmem:[%s1072] sm:$0x3] %v1070
      $region37: #{patchgan_forward.9} parent=31 // loop_footer
        %s178 = sadd.s32 1, %s174
      $region38: #{patchgan_forward.9} parent=31 // loop_footer_branch
        %173 = sbr.rel target = $region34
      $region39: #{patchgan_forward.9} parent=31 // loop_exit
        _
      %p1074 = scmp.lt.s32.totalorder %s14, 1
      %s1075 = scalar_select %p1074, %s14, 1
      %s1076 = smul.addr %s1075, 2
      %s1077 = smul.addr %s1076, 2
      %s1078 = scalar_lea.vmem %s3, %s1077
      // Predicated region
      $region40: #{patchgan_forward.9} parent=31 // pred_check
        %p1079 = pneg %p100
      $region41: #{patchgan_forward.9} parent=31 // pred_check_branch
        %1081 = sbr.rel (%p1079) target = $region43
      $region42: #{patchgan_forward.9} parent=31 // pred_region
        _
      $region43: #{patchgan_forward.9} parent=31 // pred_fallthru
        _
    $region32: #{patchgan_forward.9} parent=5 // pred_fallthru
      _
    %p1082 = scmp.le.s32.totalorder 2, %s9
    // Predicated region
    $region44: #{patchgan_forward.9} parent=5 // pred_check
      %p1083 = pneg %p1082
    $region45: #{patchgan_forward.9} parent=5 // pred_check_branch
      %1085 = sbr.rel (%p1083) target = $region47
    $region46: #{patchgan_forward.9} parent=5 // pred_region
      %s1086 = ssub.s32 %s9, 2
      // Predicated region
      $region48: #{patchgan_forward.9} parent=46 // pred_check
        %p1087 = pneg %p106
      $region49: #{patchgan_forward.9} parent=46 // pred_check_branch
        %1089 = sbr.rel (%p1087) target = $region51
      $region50: #{patchgan_forward.9} parent=46 // pred_region
        %p1090 = scmp.lt.s32.totalorder %s15, 1
        %s1091 = scalar_select %p1090, %s15, 1
        %s1092 = smul.addr %s1091, 2
        %s1093 = smul.addr %s1092, 2
        %s1094 = scalar_lea.vmem %s3, %s1093
      $region51: #{patchgan_forward.9} parent=46 // pred_fallthru
        _
    $region47: #{patchgan_forward.9} parent=5 // pred_fallthru
      _
  $region6: #{patchgan_forward.9} parent=0 // loop_footer
    %s13 = sadd.s32 1, %s9
  $region7: #{patchgan_forward.9} parent=0 // loop_footer_branch
    %8 = sbr.rel target = $region3
  $region8: #{patchgan_forward.9} parent=0 // loop_exit
    _

</llo_original>
